<compile_context>
chip_gen: v7x
topology: tpu7x:2x2x1
jax: 0.10.0
libtpu: 0.0.40
codegen_flags: <defaults>
</compile_context>

<pallas_src>
import math

import jax
import jax.numpy as jnp
from jax.experimental import pallas as pl
from jax.experimental.pallas import tpu as pltpu

# ----------------------------- config (small) --------------------------------
N_EMBED = 32          # cfg.NETWORK.SAMPLER.N_EMBED
N_HEAD = 4            # cfg.NETWORK.SAMPLER.N_HEAD
N_LAYERS = 2          # cfg.NETWORK.SAMPLER.N_LAYERS
BLOCK_SIZE = 16       # cfg.NETWORK.SAMPLER.BLOCK_SIZE
VOCAB = 16            # cfg.NETWORK.VQGAN.N_EMBED  (mask token id == VOCAB)
TOTAL_STEPS = 10      # cfg.NETWORK.SAMPLER.TOTAL_STEPS
# cfg.NETWORK.SAMPLER.DROPOUT == 0.0  -> dropout layers are identity.

HEAD_DIM = N_EMBED // N_HEAD
LN_EPS = 1e-5                 # torch.nn.LayerNorm default eps
EMB_ROWS = 32                 # VOCAB+1 (=17) padded up so the one-hot matmul is aligned
WDTYPE = jnp.bfloat16         # linear weights feed the MXU in bf16, f32 accumulation


# ------------------------------ kernel helpers --------------------------------
def _layernorm(x, gamma, beta):
    mean = jnp.mean(x, axis=-1, keepdims=True)
    var = jnp.mean(jnp.square(x - mean), axis=-1, keepdims=True)
    return (x - mean) * jax.lax.rsqrt(var + LN_EPS) * gamma + beta


def _erf(z):
    # Abramowitz & Stegun 7.1.26, |err| < 1.5e-7 (exact-GELU without lax.erf).
    a1, a2, a3, a4, a5 = 0.254829592, -0.284496736, 1.421413741, -1.453152027, 1.061405429
    p = 0.3275911
    za = jnp.abs(z)
    t = 1.0 / (1.0 + p * za)
    poly = ((((a5 * t + a4) * t + a3) * t + a2) * t + a1) * t
    e = 1.0 - poly * jnp.exp(-za * za)
    return jnp.where(z >= 0.0, e, -e)


def _gelu_exact(x):
    # torch.nn.GELU default (erf form).
    return 0.5 * x * (1.0 + _erf(x * (1.0 / math.sqrt(2.0))))


def _softmax_rows(s):
    s = s - jnp.max(s, axis=-1, keepdims=True)
    p = jnp.exp(s)
    return p * pl.reciprocal(jnp.sum(p, axis=-1, keepdims=True), approx=True)


# ------------------------ fused whole-network kernel ---------------------------
def fused_transformer_kernel(idx_ref, tok_ref, pos_ref,
                             ln1_g, ln1_b, wqkv, bqkv, wp, bp,
                             ln2_g, ln2_b, w1, b1, w2, b2,
                             lnf_g, lnf_b, whT,
                             out_ref):
    M = idx_ref.shape[0]            # B*T flattened rows
    T, C = pos_ref.shape
    B = M // T
    L = wqkv.shape[0]
    D = C // N_HEAD
    scale = 1.0 / math.sqrt(D)

    # --- token embedding as an exact one-hot matmul (gather-free) + pos add ---
    onehot = (idx_ref[...] ==
              jax.lax.broadcasted_iota(jnp.int32, (M, EMB_ROWS), 1)).astype(jnp.float32)
    x = jnp.dot(onehot, tok_ref[...], preferred_element_type=jnp.float32)   # (M, C)
    pos = pos_ref[...]                                                       # (T, C)
    x = x + jnp.concatenate([pos] * B, axis=0)
    # dropout p=0.0 -> identity

    for l in range(L):              # static layer loop, weights stay in VMEM
        # ---- attention branch ----
        h = _layernorm(x, ln1_g[l], ln1_b[l])
        qkv = jnp.dot(h.astype(WDTYPE), wqkv[l],
                      preferred_element_type=jnp.float32) + bqkv[l]          # (M, 3C)
        q = qkv[:, 0 * C:1 * C]
        k = qkv[:, 1 * C:2 * C]
        v = qkv[:, 2 * C:3 * C]
        y_rows = []
        for b in range(B):                          # static per-batch loop
            r0 = b * T
            heads = []
            for hh in range(N_HEAD):                # static per-head loop
                lo = hh * D
                qh = q[r0:r0 + T, lo:lo + D]
                kh = k[r0:r0 + T, lo:lo + D]
                vh = v[r0:r0 + T, lo:lo + D]
                att = jax.lax.dot_general(
                    qh, kh, (((1,), (1,)), ((), ())),
                    preferred_element_type=jnp.float32) * scale              # (T, T)
                att = _softmax_rows(att)            # no causal mask (matches reference)
                heads.append(jnp.dot(att, vh, preferred_element_type=jnp.float32))
            y_rows.append(jnp.concatenate(heads, axis=-1))                   # (T, C)
        y = jnp.concatenate(y_rows, axis=0)                                  # (M, C)
        y = jnp.dot(y.astype(WDTYPE), wp[l], preferred_element_type=jnp.float32) + bp[l]
        x = x + y                                                            # residual 1

        # ---- MLP branch ----
        h2 = _layernorm(x, ln2_g[l], ln2_b[l])
        m = jnp.dot(h2.astype(WDTYPE), w1[l], preferred_element_type=jnp.float32) + b1[l]
        m = _gelu_exact(m)
        m = jnp.dot(m.astype(WDTYPE), w2[l], preferred_element_type=jnp.float32) + b2[l]
        x = x + m                                                            # residual 2

    # ---- final LN + vocab head, pre-transposed to (V, T) per batch ----
    hf = _layernorm(x, lnf_g[...], lnf_b[...])
    for b in range(B):
        hb = hf[b * T:(b + 1) * T, :].astype(WDTYPE)                         # (T, C)
        out_ref[b] = jax.lax.dot_general(
            whT[...], hb, (((1,), (1,)), ((), ())),
            preferred_element_type=jnp.float32)                              # (V, T)


# ------------------------------- pallas wrapper --------------------------------
def transformer_forward(idx, params):
    """denoise_fn: returns logits already permuted to (B, VOCAB, T)."""
    B, T = idx.shape
    assert T <= BLOCK_SIZE, "Cannot forward, model block size is exhausted."
    M = B * T
    idx_col = idx.reshape(M, 1).astype(jnp.int32)
    args = (idx_col, params['tok_emb'], params['pos_emb'][:T],
            params['ln1_g'], params['ln1_b'],
            params['wqkv'], params['bqkv'], params['wp'], params['bp'],
            params['ln2_g'], params['ln2_b'],
            params['w1'], params['b1'], params['w2'], params['b2'],
            params['lnf_g'], params['lnf_b'], params['whT'])
    return pl.pallas_call(
        fused_transformer_kernel,
        out_shape=jax.ShapeDtypeStruct((B, VOCAB, T), jnp.float32),
        grid=(1,),                                   # single grid point: no per-step overhead,
        in_specs=[pl.BlockSpec(a.shape, (lambda i, nd=a.ndim: (0,) * nd)) for a in args],
        out_specs=pl.BlockSpec((B, VOCAB, T), lambda i: (0, 0, 0)),
        compiler_params=pltpu.CompilerParams(
            dimension_semantics=("arbitrary",)),     # don't split µs-scale work across TCs
    )(*args)


# ------------------------------- model (glue) ---------------------------------
def absorbing_diffusion_forward(x_0, params, key):
    """AbsorbingDiffusionSampler.forward(x_0) -> (t, pt, x_0_hat_logits, x_0_ignore)."""
    bs, _ = x_0.shape
    k_t, k_mask = jax.random.split(key)
    # _sample_time
    t = jax.random.randint(k_t, (bs,), 1, TOTAL_STEPS + 1).astype(jnp.int32)
    pt = jnp.ones((bs,), jnp.float32) / TOTAL_STEPS
    # _q_sample
    u = jax.random.uniform(k_mask, x_0.shape, dtype=jnp.float32)
    mask = u < (t.astype(jnp.float32)[:, None] / TOTAL_STEPS)
    x_t = jnp.where(mask, jnp.int32(VOCAB), x_0)             # absorb into mask token
    x_0_ignore = jnp.where(mask, x_0, jnp.int32(-1))
    # denoise; permute(0, 2, 1) is fused into the kernel's head matmul
    x_0_hat_logits = transformer_forward(x_t, params)        # (B, VOCAB, T)
    return t, pt, x_0_hat_logits, x_0_ignore


# ------------------------------- parameters ------------------------------------
def init_params(key):
    C, L = N_EMBED, N_LAYERS
    ks = jax.random.split(key, 6)

    def nrm(k, shape):
        return (0.02 * jax.random.normal(k, shape)).astype(jnp.float32)

    tok = nrm(ks[0], (VOCAB + 1, C))                          # Embedding(V+1, C)
    tok_pad = jnp.zeros((EMB_ROWS, C), jnp.float32).at[:VOCAB + 1].set(tok)
    return {
        'tok_emb': tok_pad,                                   # padded rows never selected
        'pos_emb': jnp.zeros((BLOCK_SIZE, C), jnp.float32),   # zeros, as in torch init
        'ln1_g': jnp.ones((L, 1, C), jnp.float32),
        'ln1_b': jnp.zeros((L, 1, C), jnp.float32),
        'wqkv': nrm(ks[1], (L, C, 3 * C)).astype(WDTYPE),     # fused Q/K/V projection
        'bqkv': jnp.zeros((L, 1, 3 * C), jnp.float32),
        'wp': nrm(ks[2], (L, C, C)).astype(WDTYPE),
        'bp': jnp.zeros((L, 1, C), jnp.float32),
        'ln2_g': jnp.ones((L, 1, C), jnp.float32),
        'ln2_b': jnp.zeros((L, 1, C), jnp.float32),
        'w1': nrm(ks[3], (L, C, 4 * C)).astype(WDTYPE),
        'b1': jnp.zeros((L, 1, 4 * C), jnp.float32),
        'w2': nrm(ks[4], (L, 4 * C, C)).astype(WDTYPE),
        'b2': jnp.zeros((L, 1, C), jnp.float32),
        'lnf_g': jnp.ones((1, C), jnp.float32),
        'lnf_b': jnp.zeros((1, C), jnp.float32),
        'whT': nrm(ks[5], (VOCAB, C)).astype(WDTYPE),         # head weight stored (V, C), no bias
    }


# ----------------------------------- main --------------------------------------
if __name__ == "__main__":
    root = jax.random.PRNGKey(0)
    pkey, dkey, fkey = jax.random.split(root, 3)

    params = init_params(pkey)

    B, T = 2, BLOCK_SIZE
    x_0 = jax.random.randint(dkey, (B, T), 0, VOCAB).astype(jnp.int32)

    fwd = jax.jit(absorbing_diffusion_forward)
    t, pt, x_0_hat_logits, x_0_ignore = fwd(x_0, params, fkey)
    jax.block_until_ready((t, pt, x_0_hat_logits, x_0_ignore))

    assert t.shape == (B,)
    assert pt.shape == (B,)
    assert x_0_hat_logits.shape == (B, VOCAB, T)
    assert x_0_ignore.shape == (B, T)
    assert bool(jnp.all(jnp.isfinite(x_0_hat_logits)))

    print("KERNEL_OK")
</pallas_src>

<mosaic_0001>
module attributes {stable_mosaic.version = 11 : i64} {
  func.func @fused_transformer_kernel(%arg0: i32, %arg1: memref<32x1xi32, #tpu.memory_space<vmem>>, %arg2: memref<32x32xf32, #tpu.memory_space<vmem>>, %arg3: memref<16x32xf32, #tpu.memory_space<vmem>>, %arg4: memref<2x1x32xf32, #tpu.memory_space<vmem>>, %arg5: memref<2x1x32xf32, #tpu.memory_space<vmem>>, %arg6: memref<2x32x96xbf16, #tpu.memory_space<vmem>>, %arg7: memref<2x1x96xf32, #tpu.memory_space<vmem>>, %arg8: memref<2x32x32xbf16, #tpu.memory_space<vmem>>, %arg9: memref<2x1x32xf32, #tpu.memory_space<vmem>>, %arg10: memref<2x1x32xf32, #tpu.memory_space<vmem>>, %arg11: memref<2x1x32xf32, #tpu.memory_space<vmem>>, %arg12: memref<2x32x128xbf16, #tpu.memory_space<vmem>>, %arg13: memref<2x1x128xf32, #tpu.memory_space<vmem>>, %arg14: memref<2x128x32xbf16, #tpu.memory_space<vmem>>, %arg15: memref<2x1x32xf32, #tpu.memory_space<vmem>>, %arg16: memref<1x32xf32, #tpu.memory_space<vmem>>, %arg17: memref<1x32xf32, #tpu.memory_space<vmem>>, %arg18: memref<16x32xbf16, #tpu.memory_space<vmem>>, %arg19: memref<2x16x16xf32, #tpu.memory_space<vmem>>) attributes {dimension_semantics = [#tpu.dimension_semantics<arbitrary>], iteration_bounds = array<i64: 1>, scalar_prefetch = 0 : i64, scratch_operands = 0 : i64, tpu.core_type = #tpu.core_type<tc>, window_params = [{pipeline_mode = #tpu.pipeline_mode<synchronous>, transform_indices = @transform_0, window_bounds = array<i64: 32, 1>}, {pipeline_mode = #tpu.pipeline_mode<synchronous>, transform_indices = @transform_1, window_bounds = array<i64: 32, 32>}, {pipeline_mode = #tpu.pipeline_mode<synchronous>, transform_indices = @transform_2, window_bounds = array<i64: 16, 32>}, {pipeline_mode = #tpu.pipeline_mode<synchronous>, transform_indices = @transform_3, window_bounds = array<i64: 2, 1, 32>}, {pipeline_mode = #tpu.pipeline_mode<synchronous>, transform_indices = @transform_4, window_bounds = array<i64: 2, 1, 32>}, {pipeline_mode = #tpu.pipeline_mode<synchronous>, transform_indices = @transform_5, window_bounds = array<i64: 2, 32, 96>}, {pipeline_mode = #tpu.pipeline_mode<synchronous>, transform_indices = @transform_6, window_bounds = array<i64: 2, 1, 96>}, {pipeline_mode = #tpu.pipeline_mode<synchronous>, transform_indices = @transform_7, window_bounds = array<i64: 2, 32, 32>}, {pipeline_mode = #tpu.pipeline_mode<synchronous>, transform_indices = @transform_8, window_bounds = array<i64: 2, 1, 32>}, {pipeline_mode = #tpu.pipeline_mode<synchronous>, transform_indices = @transform_9, window_bounds = array<i64: 2, 1, 32>}, {pipeline_mode = #tpu.pipeline_mode<synchronous>, transform_indices = @transform_10, window_bounds = array<i64: 2, 1, 32>}, {pipeline_mode = #tpu.pipeline_mode<synchronous>, transform_indices = @transform_11, window_bounds = array<i64: 2, 32, 128>}, {pipeline_mode = #tpu.pipeline_mode<synchronous>, transform_indices = @transform_12, window_bounds = array<i64: 2, 1, 128>}, {pipeline_mode = #tpu.pipeline_mode<synchronous>, transform_indices = @transform_13, window_bounds = array<i64: 2, 128, 32>}, {pipeline_mode = #tpu.pipeline_mode<synchronous>, transform_indices = @transform_14, window_bounds = array<i64: 2, 1, 32>}, {pipeline_mode = #tpu.pipeline_mode<synchronous>, transform_indices = @transform_15, window_bounds = array<i64: 1, 32>}, {pipeline_mode = #tpu.pipeline_mode<synchronous>, transform_indices = @transform_16, window_bounds = array<i64: 1, 32>}, {pipeline_mode = #tpu.pipeline_mode<synchronous>, transform_indices = @transform_17, window_bounds = array<i64: 16, 32>}, {pipeline_mode = #tpu.pipeline_mode<synchronous>, transform_indices = @transform_18, window_bounds = array<i64: 2, 16, 16>}]} {
    %c0 = arith.constant 0 : index
    %c0_0 = arith.constant 0 : index
    %0 = vector.load %arg1[%c0, %c0_0] : memref<32x1xi32, #tpu.memory_space<vmem>>, vector<32x1xi32>
    %1 = tpu.iota {dimensions = array<i32: 1>} : vector<32x32xi32>
    %2 = vector.broadcast %0 : vector<32x1xi32> to vector<32x32xi32>
    %3 = arith.cmpi eq, %2, %1 : vector<32x32xi32>
    %4 = arith.extui %3 : vector<32x32xi1> to vector<32x32xi32>
    %5 = arith.sitofp %4 : vector<32x32xi32> to vector<32x32xf32>
    %c0_1 = arith.constant 0 : index
    %c0_2 = arith.constant 0 : index
    %6 = vector.load %arg2[%c0_1, %c0_2] : memref<32x32xf32, #tpu.memory_space<vmem>>, vector<32x32xf32>
    %cst = arith.constant dense<0.000000e+00> : vector<32x32xf32>
    %7 = tpu.matmul %5, %6, %cst {dimension_numbers = #tpu.dot_dimension_numbers<[1], [0], [0], [1], [0, 0, 1, 1], [], []>} : vector<32x32xf32>, vector<32x32xf32>, vector<32x32xf32> -> vector<32x32xf32>
    %c0_3 = arith.constant 0 : index
    %c0_4 = arith.constant 0 : index
    %8 = vector.load %arg3[%c0_3, %c0_4] : memref<16x32xf32, #tpu.memory_space<vmem>>, vector<16x32xf32>
    %9 = tpu.concatenate %8, %8 in 0 : vector<16x32xf32>, vector<16x32xf32> -> vector<32x32xf32>
    %10 = arith.addf %7, %9 : vector<32x32xf32>
    %c0_5 = arith.constant 0 : index
    %c0_6 = arith.constant 0 : index
    %c0_7 = arith.constant 0 : index
    %11 = vector.load %arg4[%c0_5, %c0_6, %c0_7] : memref<2x1x32xf32, #tpu.memory_space<vmem>>, vector<1x1x32xf32>
    %12 = vector.shape_cast %11 : vector<1x1x32xf32> to vector<1x32xf32>
    %c0_8 = arith.constant 0 : index
    %c0_9 = arith.constant 0 : index
    %c0_10 = arith.constant 0 : index
    %13 = vector.load %arg5[%c0_8, %c0_9, %c0_10] : memref<2x1x32xf32, #tpu.memory_space<vmem>>, vector<1x1x32xf32>
    %14 = vector.shape_cast %13 : vector<1x1x32xf32> to vector<1x32xf32>
    %cst_11 = arith.constant dense<0.000000e+00> : vector<32xf32>
    %15 = vector.multi_reduction <add>, %10, %cst_11 [1] : vector<32x32xf32> to vector<32xf32>
    %16 = vector.shape_cast %15 : vector<32xf32> to vector<32x1xf32>
    %cst_12 = arith.constant 3.200000e+01 : f32
    %17 = vector.broadcast %cst_12 : f32 to vector<32x1xf32>
    %18 = arith.divf %16, %17 : vector<32x1xf32>
    %19 = vector.broadcast %18 : vector<32x1xf32> to vector<32x32xf32>
    %20 = arith.subf %10, %19 : vector<32x32xf32>
    %21 = arith.mulf %20, %20 : vector<32x32xf32>
    %cst_13 = arith.constant dense<0.000000e+00> : vector<32xf32>
    %22 = vector.multi_reduction <add>, %21, %cst_13 [1] : vector<32x32xf32> to vector<32xf32>
    %23 = vector.shape_cast %22 : vector<32xf32> to vector<32x1xf32>
    %cst_14 = arith.constant 3.200000e+01 : f32
    %24 = vector.broadcast %cst_14 : f32 to vector<32x1xf32>
    %25 = arith.divf %23, %24 : vector<32x1xf32>
    %26 = vector.broadcast %18 : vector<32x1xf32> to vector<32x32xf32>
    %27 = arith.subf %10, %26 : vector<32x32xf32>
    %cst_15 = arith.constant 9.99999974E-6 : f32
    %28 = vector.broadcast %cst_15 : f32 to vector<32x1xf32>
    %29 = arith.addf %25, %28 : vector<32x1xf32>
    %30 = math.rsqrt %29 : vector<32x1xf32>
    %31 = vector.broadcast %30 : vector<32x1xf32> to vector<32x32xf32>
    %32 = arith.mulf %27, %31 : vector<32x32xf32>
    %33 = vector.broadcast %12 : vector<1x32xf32> to vector<32x32xf32>
    %34 = arith.mulf %32, %33 : vector<32x32xf32>
    %35 = vector.broadcast %14 : vector<1x32xf32> to vector<32x32xf32>
    %36 = arith.addf %34, %35 : vector<32x32xf32>
    %37 = arith.truncf %36 : vector<32x32xf32> to vector<32x32xbf16>
    %c0_16 = arith.constant 0 : index
    %c0_17 = arith.constant 0 : index
    %c0_18 = arith.constant 0 : index
    %38 = vector.load %arg6[%c0_16, %c0_17, %c0_18] : memref<2x32x96xbf16, #tpu.memory_space<vmem>>, vector<1x32x96xbf16>
    %39 = vector.shape_cast %38 : vector<1x32x96xbf16> to vector<32x96xbf16>
    %cst_19 = arith.constant dense<0.000000e+00> : vector<32x96xf32>
    %40 = tpu.matmul %37, %39, %cst_19 {dimension_numbers = #tpu.dot_dimension_numbers<[1], [0], [0], [1], [0, 0, 1, 1], [], []>} : vector<32x32xbf16>, vector<32x96xbf16>, vector<32x96xf32> -> vector<32x96xf32>
    %c0_20 = arith.constant 0 : index
    %c0_21 = arith.constant 0 : index
    %c0_22 = arith.constant 0 : index
    %41 = vector.load %arg7[%c0_20, %c0_21, %c0_22] : memref<2x1x96xf32, #tpu.memory_space<vmem>>, vector<1x1x96xf32>
    %42 = vector.shape_cast %41 : vector<1x1x96xf32> to vector<1x96xf32>
    %43 = vector.broadcast %42 : vector<1x96xf32> to vector<32x96xf32>
    %44 = arith.addf %40, %43 : vector<32x96xf32>
    %45 = vector.extract_strided_slice %44 {offsets = [0, 0], sizes = [32, 32], strides = [1, 1]} : vector<32x96xf32> to vector<32x32xf32>
    %46 = vector.extract_strided_slice %44 {offsets = [0, 32], sizes = [32, 32], strides = [1, 1]} : vector<32x96xf32> to vector<32x32xf32>
    %47 = vector.extract_strided_slice %44 {offsets = [0, 64], sizes = [32, 32], strides = [1, 1]} : vector<32x96xf32> to vector<32x32xf32>
    %48 = vector.extract_strided_slice %45 {offsets = [0, 0], sizes = [16, 8], strides = [1, 1]} : vector<32x32xf32> to vector<16x8xf32>
    %49 = vector.extract_strided_slice %46 {offsets = [0, 0], sizes = [16, 8], strides = [1, 1]} : vector<32x32xf32> to vector<16x8xf32>
    %50 = vector.extract_strided_slice %47 {offsets = [0, 0], sizes = [16, 8], strides = [1, 1]} : vector<32x32xf32> to vector<16x8xf32>
    %cst_23 = arith.constant dense<0.000000e+00> : vector<16x16xf32>
    %51 = tpu.matmul %48, %49, %cst_23 {dimension_numbers = #tpu.dot_dimension_numbers<[1], [1], [0], [0], [0, 0, 1, 0], [], []>} : vector<16x8xf32>, vector<16x8xf32>, vector<16x16xf32> -> vector<16x16xf32>
    %cst_24 = arith.constant 0.353553385 : f32
    %52 = vector.broadcast %cst_24 : f32 to vector<16x16xf32>
    %53 = arith.mulf %51, %52 : vector<16x16xf32>
    %cst_25 = arith.constant dense<0xFF800000> : vector<16xf32>
    %54 = vector.multi_reduction <maximumf>, %53, %cst_25 [1] : vector<16x16xf32> to vector<16xf32>
    %55 = vector.shape_cast %54 : vector<16xf32> to vector<16x1xf32>
    %56 = vector.broadcast %55 : vector<16x1xf32> to vector<16x16xf32>
    %57 = arith.subf %53, %56 : vector<16x16xf32>
    %58 = math.exp %57 : vector<16x16xf32>
    %cst_26 = arith.constant dense<0.000000e+00> : vector<16xf32>
    %59 = vector.multi_reduction <add>, %58, %cst_26 [1] : vector<16x16xf32> to vector<16xf32>
    %60 = vector.shape_cast %59 : vector<16xf32> to vector<16x1xf32>
    %61 = tpu.reciprocal %60 {approx = true} : vector<16x1xf32> -> vector<16x1xf32>
    %62 = vector.broadcast %61 : vector<16x1xf32> to vector<16x16xf32>
    %63 = arith.mulf %58, %62 : vector<16x16xf32>
    %cst_27 = arith.constant dense<0.000000e+00> : vector<16x8xf32>
    %64 = tpu.matmul %63, %50, %cst_27 {dimension_numbers = #tpu.dot_dimension_numbers<[1], [0], [0], [1], [0, 0, 1, 1], [], []>} : vector<16x16xf32>, vector<16x8xf32>, vector<16x8xf32> -> vector<16x8xf32>
    %65 = vector.extract_strided_slice %45 {offsets = [0, 8], sizes = [16, 8], strides = [1, 1]} : vector<32x32xf32> to vector<16x8xf32>
    %66 = vector.extract_strided_slice %46 {offsets = [0, 8], sizes = [16, 8], strides = [1, 1]} : vector<32x32xf32> to vector<16x8xf32>
    %67 = vector.extract_strided_slice %47 {offsets = [0, 8], sizes = [16, 8], strides = [1, 1]} : vector<32x32xf32> to vector<16x8xf32>
    %cst_28 = arith.constant dense<0.000000e+00> : vector<16x16xf32>
    %68 = tpu.matmul %65, %66, %cst_28 {dimension_numbers = #tpu.dot_dimension_numbers<[1], [1], [0], [0], [0, 0, 1, 0], [], []>} : vector<16x8xf32>, vector<16x8xf32>, vector<16x16xf32> -> vector<16x16xf32>
    %cst_29 = arith.constant 0.353553385 : f32
    %69 = vector.broadcast %cst_29 : f32 to vector<16x16xf32>
    %70 = arith.mulf %68, %69 : vector<16x16xf32>
    %cst_30 = arith.constant dense<0xFF800000> : vector<16xf32>
    %71 = vector.multi_reduction <maximumf>, %70, %cst_30 [1] : vector<16x16xf32> to vector<16xf32>
    %72 = vector.shape_cast %71 : vector<16xf32> to vector<16x1xf32>
    %73 = vector.broadcast %72 : vector<16x1xf32> to vector<16x16xf32>
    %74 = arith.subf %70, %73 : vector<16x16xf32>
    %75 = math.exp %74 : vector<16x16xf32>
    %cst_31 = arith.constant dense<0.000000e+00> : vector<16xf32>
    %76 = vector.multi_reduction <add>, %75, %cst_31 [1] : vector<16x16xf32> to vector<16xf32>
    %77 = vector.shape_cast %76 : vector<16xf32> to vector<16x1xf32>
    %78 = tpu.reciprocal %77 {approx = true} : vector<16x1xf32> -> vector<16x1xf32>
    %79 = vector.broadcast %78 : vector<16x1xf32> to vector<16x16xf32>
    %80 = arith.mulf %75, %79 : vector<16x16xf32>
    %cst_32 = arith.constant dense<0.000000e+00> : vector<16x8xf32>
    %81 = tpu.matmul %80, %67, %cst_32 {dimension_numbers = #tpu.dot_dimension_numbers<[1], [0], [0], [1], [0, 0, 1, 1], [], []>} : vector<16x16xf32>, vector<16x8xf32>, vector<16x8xf32> -> vector<16x8xf32>
    %82 = vector.extract_strided_slice %45 {offsets = [0, 16], sizes = [16, 8], strides = [1, 1]} : vector<32x32xf32> to vector<16x8xf32>
    %83 = vector.extract_strided_slice %46 {offsets = [0, 16], sizes = [16, 8], strides = [1, 1]} : vector<32x32xf32> to vector<16x8xf32>
    %84 = vector.extract_strided_slice %47 {offsets = [0, 16], sizes = [16, 8], strides = [1, 1]} : vector<32x32xf32> to vector<16x8xf32>
    %cst_33 = arith.constant dense<0.000000e+00> : vector<16x16xf32>
    %85 = tpu.matmul %82, %83, %cst_33 {dimension_numbers = #tpu.dot_dimension_numbers<[1], [1], [0], [0], [0, 0, 1, 0], [], []>} : vector<16x8xf32>, vector<16x8xf32>, vector<16x16xf32> -> vector<16x16xf32>
    %cst_34 = arith.constant 0.353553385 : f32
    %86 = vector.broadcast %cst_34 : f32 to vector<16x16xf32>
    %87 = arith.mulf %85, %86 : vector<16x16xf32>
    %cst_35 = arith.constant dense<0xFF800000> : vector<16xf32>
    %88 = vector.multi_reduction <maximumf>, %87, %cst_35 [1] : vector<16x16xf32> to vector<16xf32>
    %89 = vector.shape_cast %88 : vector<16xf32> to vector<16x1xf32>
    %90 = vector.broadcast %89 : vector<16x1xf32> to vector<16x16xf32>
    %91 = arith.subf %87, %90 : vector<16x16xf32>
    %92 = math.exp %91 : vector<16x16xf32>
    %cst_36 = arith.constant dense<0.000000e+00> : vector<16xf32>
    %93 = vector.multi_reduction <add>, %92, %cst_36 [1] : vector<16x16xf32> to vector<16xf32>
    %94 = vector.shape_cast %93 : vector<16xf32> to vector<16x1xf32>
    %95 = tpu.reciprocal %94 {approx = true} : vector<16x1xf32> -> vector<16x1xf32>
    %96 = vector.broadcast %95 : vector<16x1xf32> to vector<16x16xf32>
    %97 = arith.mulf %92, %96 : vector<16x16xf32>
    %cst_37 = arith.constant dense<0.000000e+00> : vector<16x8xf32>
    %98 = tpu.matmul %97, %84, %cst_37 {dimension_numbers = #tpu.dot_dimension_numbers<[1], [0], [0], [1], [0, 0, 1, 1], [], []>} : vector<16x16xf32>, vector<16x8xf32>, vector<16x8xf32> -> vector<16x8xf32>
    %99 = vector.extract_strided_slice %45 {offsets = [0, 24], sizes = [16, 8], strides = [1, 1]} : vector<32x32xf32> to vector<16x8xf32>
    %100 = vector.extract_strided_slice %46 {offsets = [0, 24], sizes = [16, 8], strides = [1, 1]} : vector<32x32xf32> to vector<16x8xf32>
    %101 = vector.extract_strided_slice %47 {offsets = [0, 24], sizes = [16, 8], strides = [1, 1]} : vector<32x32xf32> to vector<16x8xf32>
    %cst_38 = arith.constant dense<0.000000e+00> : vector<16x16xf32>
    %102 = tpu.matmul %99, %100, %cst_38 {dimension_numbers = #tpu.dot_dimension_numbers<[1], [1], [0], [0], [0, 0, 1, 0], [], []>} : vector<16x8xf32>, vector<16x8xf32>, vector<16x16xf32> -> vector<16x16xf32>
    %cst_39 = arith.constant 0.353553385 : f32
    %103 = vector.broadcast %cst_39 : f32 to vector<16x16xf32>
    %104 = arith.mulf %102, %103 : vector<16x16xf32>
    %cst_40 = arith.constant dense<0xFF800000> : vector<16xf32>
    %105 = vector.multi_reduction <maximumf>, %104, %cst_40 [1] : vector<16x16xf32> to vector<16xf32>
    %106 = vector.shape_cast %105 : vector<16xf32> to vector<16x1xf32>
    %107 = vector.broadcast %106 : vector<16x1xf32> to vector<16x16xf32>
    %108 = arith.subf %104, %107 : vector<16x16xf32>
    %109 = math.exp %108 : vector<16x16xf32>
    %cst_41 = arith.constant dense<0.000000e+00> : vector<16xf32>
    %110 = vector.multi_reduction <add>, %109, %cst_41 [1] : vector<16x16xf32> to vector<16xf32>
    %111 = vector.shape_cast %110 : vector<16xf32> to vector<16x1xf32>
    %112 = tpu.reciprocal %111 {approx = true} : vector<16x1xf32> -> vector<16x1xf32>
    %113 = vector.broadcast %112 : vector<16x1xf32> to vector<16x16xf32>
    %114 = arith.mulf %109, %113 : vector<16x16xf32>
    %cst_42 = arith.constant dense<0.000000e+00> : vector<16x8xf32>
    %115 = tpu.matmul %114, %101, %cst_42 {dimension_numbers = #tpu.dot_dimension_numbers<[1], [0], [0], [1], [0, 0, 1, 1], [], []>} : vector<16x16xf32>, vector<16x8xf32>, vector<16x8xf32> -> vector<16x8xf32>
    %116 = tpu.concatenate %64, %81, %98, %115 in 1 : vector<16x8xf32>, vector<16x8xf32>, vector<16x8xf32>, vector<16x8xf32> -> vector<16x32xf32>
    %117 = vector.extract_strided_slice %45 {offsets = [16, 0], sizes = [16, 8], strides = [1, 1]} : vector<32x32xf32> to vector<16x8xf32>
    %118 = vector.extract_strided_slice %46 {offsets = [16, 0], sizes = [16, 8], strides = [1, 1]} : vector<32x32xf32> to vector<16x8xf32>
    %119 = vector.extract_strided_slice %47 {offsets = [16, 0], sizes = [16, 8], strides = [1, 1]} : vector<32x32xf32> to vector<16x8xf32>
    %cst_43 = arith.constant dense<0.000000e+00> : vector<16x16xf32>
    %120 = tpu.matmul %117, %118, %cst_43 {dimension_numbers = #tpu.dot_dimension_numbers<[1], [1], [0], [0], [0, 0, 1, 0], [], []>} : vector<16x8xf32>, vector<16x8xf32>, vector<16x16xf32> -> vector<16x16xf32>
    %cst_44 = arith.constant 0.353553385 : f32
    %121 = vector.broadcast %cst_44 : f32 to vector<16x16xf32>
    %122 = arith.mulf %120, %121 : vector<16x16xf32>
    %cst_45 = arith.constant dense<0xFF800000> : vector<16xf32>
    %123 = vector.multi_reduction <maximumf>, %122, %cst_45 [1] : vector<16x16xf32> to vector<16xf32>
    %124 = vector.shape_cast %123 : vector<16xf32> to vector<16x1xf32>
    %125 = vector.broadcast %124 : vector<16x1xf32> to vector<16x16xf32>
    %126 = arith.subf %122, %125 : vector<16x16xf32>
    %127 = math.exp %126 : vector<16x16xf32>
    %cst_46 = arith.constant dense<0.000000e+00> : vector<16xf32>
    %128 = vector.multi_reduction <add>, %127, %cst_46 [1] : vector<16x16xf32> to vector<16xf32>
    %129 = vector.shape_cast %128 : vector<16xf32> to vector<16x1xf32>
    %130 = tpu.reciprocal %129 {approx = true} : vector<16x1xf32> -> vector<16x1xf32>
    %131 = vector.broadcast %130 : vector<16x1xf32> to vector<16x16xf32>
    %132 = arith.mulf %127, %131 : vector<16x16xf32>
    %cst_47 = arith.constant dense<0.000000e+00> : vector<16x8xf32>
    %133 = tpu.matmul %132, %119, %cst_47 {dimension_numbers = #tpu.dot_dimension_numbers<[1], [0], [0], [1], [0, 0, 1, 1], [], []>} : vector<16x16xf32>, vector<16x8xf32>, vector<16x8xf32> -> vector<16x8xf32>
    %134 = vector.extract_strided_slice %45 {offsets = [16, 8], sizes = [16, 8], strides = [1, 1]} : vector<32x32xf32> to vector<16x8xf32>
    %135 = vector.extract_strided_slice %46 {offsets = [16, 8], sizes = [16, 8], strides = [1, 1]} : vector<32x32xf32> to vector<16x8xf32>
    %136 = vector.extract_strided_slice %47 {offsets = [16, 8], sizes = [16, 8], strides = [1, 1]} : vector<32x32xf32> to vector<16x8xf32>
    %cst_48 = arith.constant dense<0.000000e+00> : vector<16x16xf32>
    %137 = tpu.matmul %134, %135, %cst_48 {dimension_numbers = #tpu.dot_dimension_numbers<[1], [1], [0], [0], [0, 0, 1, 0], [], []>} : vector<16x8xf32>, vector<16x8xf32>, vector<16x16xf32> -> vector<16x16xf32>
    %cst_49 = arith.constant 0.353553385 : f32
    %138 = vector.broadcast %cst_49 : f32 to vector<16x16xf32>
    %139 = arith.mulf %137, %138 : vector<16x16xf32>
    %cst_50 = arith.constant dense<0xFF800000> : vector<16xf32>
    %140 = vector.multi_reduction <maximumf>, %139, %cst_50 [1] : vector<16x16xf32> to vector<16xf32>
    %141 = vector.shape_cast %140 : vector<16xf32> to vector<16x1xf32>
    %142 = vector.broadcast %141 : vector<16x1xf32> to vector<16x16xf32>
    %143 = arith.subf %139, %142 : vector<16x16xf32>
    %144 = math.exp %143 : vector<16x16xf32>
    %cst_51 = arith.constant dense<0.000000e+00> : vector<16xf32>
    %145 = vector.multi_reduction <add>, %144, %cst_51 [1] : vector<16x16xf32> to vector<16xf32>
    %146 = vector.shape_cast %145 : vector<16xf32> to vector<16x1xf32>
    %147 = tpu.reciprocal %146 {approx = true} : vector<16x1xf32> -> vector<16x1xf32>
    %148 = vector.broadcast %147 : vector<16x1xf32> to vector<16x16xf32>
    %149 = arith.mulf %144, %148 : vector<16x16xf32>
    %cst_52 = arith.constant dense<0.000000e+00> : vector<16x8xf32>
    %150 = tpu.matmul %149, %136, %cst_52 {dimension_numbers = #tpu.dot_dimension_numbers<[1], [0], [0], [1], [0, 0, 1, 1], [], []>} : vector<16x16xf32>, vector<16x8xf32>, vector<16x8xf32> -> vector<16x8xf32>
    %151 = vector.extract_strided_slice %45 {offsets = [16, 16], sizes = [16, 8], strides = [1, 1]} : vector<32x32xf32> to vector<16x8xf32>
    %152 = vector.extract_strided_slice %46 {offsets = [16, 16], sizes = [16, 8], strides = [1, 1]} : vector<32x32xf32> to vector<16x8xf32>
    %153 = vector.extract_strided_slice %47 {offsets = [16, 16], sizes = [16, 8], strides = [1, 1]} : vector<32x32xf32> to vector<16x8xf32>
    %cst_53 = arith.constant dense<0.000000e+00> : vector<16x16xf32>
    %154 = tpu.matmul %151, %152, %cst_53 {dimension_numbers = #tpu.dot_dimension_numbers<[1], [1], [0], [0], [0, 0, 1, 0], [], []>} : vector<16x8xf32>, vector<16x8xf32>, vector<16x16xf32> -> vector<16x16xf32>
    %cst_54 = arith.constant 0.353553385 : f32
    %155 = vector.broadcast %cst_54 : f32 to vector<16x16xf32>
    %156 = arith.mulf %154, %155 : vector<16x16xf32>
    %cst_55 = arith.constant dense<0xFF800000> : vector<16xf32>
    %157 = vector.multi_reduction <maximumf>, %156, %cst_55 [1] : vector<16x16xf32> to vector<16xf32>
    %158 = vector.shape_cast %157 : vector<16xf32> to vector<16x1xf32>
    %159 = vector.broadcast %158 : vector<16x1xf32> to vector<16x16xf32>
    %160 = arith.subf %156, %159 : vector<16x16xf32>
    %161 = math.exp %160 : vector<16x16xf32>
    %cst_56 = arith.constant dense<0.000000e+00> : vector<16xf32>
    %162 = vector.multi_reduction <add>, %161, %cst_56 [1] : vector<16x16xf32> to vector<16xf32>
    %163 = vector.shape_cast %162 : vector<16xf32> to vector<16x1xf32>
    %164 = tpu.reciprocal %163 {approx = true} : vector<16x1xf32> -> vector<16x1xf32>
    %165 = vector.broadcast %164 : vector<16x1xf32> to vector<16x16xf32>
    %166 = arith.mulf %161, %165 : vector<16x16xf32>
    %cst_57 = arith.constant dense<0.000000e+00> : vector<16x8xf32>
    %167 = tpu.matmul %166, %153, %cst_57 {dimension_numbers = #tpu.dot_dimension_numbers<[1], [0], [0], [1], [0, 0, 1, 1], [], []>} : vector<16x16xf32>, vector<16x8xf32>, vector<16x8xf32> -> vector<16x8xf32>
    %168 = vector.extract_strided_slice %45 {offsets = [16, 24], sizes = [16, 8], strides = [1, 1]} : vector<32x32xf32> to vector<16x8xf32>
    %169 = vector.extract_strided_slice %46 {offsets = [16, 24], sizes = [16, 8], strides = [1, 1]} : vector<32x32xf32> to vector<16x8xf32>
    %170 = vector.extract_strided_slice %47 {offsets = [16, 24], sizes = [16, 8], strides = [1, 1]} : vector<32x32xf32> to vector<16x8xf32>
    %cst_58 = arith.constant dense<0.000000e+00> : vector<16x16xf32>
    %171 = tpu.matmul %168, %169, %cst_58 {dimension_numbers = #tpu.dot_dimension_numbers<[1], [1], [0], [0], [0, 0, 1, 0], [], []>} : vector<16x8xf32>, vector<16x8xf32>, vector<16x16xf32> -> vector<16x16xf32>
    %cst_59 = arith.constant 0.353553385 : f32
    %172 = vector.broadcast %cst_59 : f32 to vector<16x16xf32>
    %173 = arith.mulf %171, %172 : vector<16x16xf32>
    %cst_60 = arith.constant dense<0xFF800000> : vector<16xf32>
    %174 = vector.multi_reduction <maximumf>, %173, %cst_60 [1] : vector<16x16xf32> to vector<16xf32>
    %175 = vector.shape_cast %174 : vector<16xf32> to vector<16x1xf32>
    %176 = vector.broadcast %175 : vector<16x1xf32> to vector<16x16xf32>
    %177 = arith.subf %173, %176 : vector<16x16xf32>
    %178 = math.exp %177 : vector<16x16xf32>
    %cst_61 = arith.constant dense<0.000000e+00> : vector<16xf32>
    %179 = vector.multi_reduction <add>, %178, %cst_61 [1] : vector<16x16xf32> to vector<16xf32>
    %180 = vector.shape_cast %179 : vector<16xf32> to vector<16x1xf32>
    %181 = tpu.reciprocal %180 {approx = true} : vector<16x1xf32> -> vector<16x1xf32>
    %182 = vector.broadcast %181 : vector<16x1xf32> to vector<16x16xf32>
    %183 = arith.mulf %178, %182 : vector<16x16xf32>
    %cst_62 = arith.constant dense<0.000000e+00> : vector<16x8xf32>
    %184 = tpu.matmul %183, %170, %cst_62 {dimension_numbers = #tpu.dot_dimension_numbers<[1], [0], [0], [1], [0, 0, 1, 1], [], []>} : vector<16x16xf32>, vector<16x8xf32>, vector<16x8xf32> -> vector<16x8xf32>
    %185 = tpu.concatenate %133, %150, %167, %184 in 1 : vector<16x8xf32>, vector<16x8xf32>, vector<16x8xf32>, vector<16x8xf32> -> vector<16x32xf32>
    %186 = tpu.concatenate %116, %185 in 0 : vector<16x32xf32>, vector<16x32xf32> -> vector<32x32xf32>
    %187 = arith.truncf %186 : vector<32x32xf32> to vector<32x32xbf16>
    %c0_63 = arith.constant 0 : index
    %c0_64 = arith.constant 0 : index
    %c0_65 = arith.constant 0 : index
    %188 = vector.load %arg8[%c0_63, %c0_64, %c0_65] : memref<2x32x32xbf16, #tpu.memory_space<vmem>>, vector<1x32x32xbf16>
    %189 = vector.shape_cast %188 : vector<1x32x32xbf16> to vector<32x32xbf16>
    %cst_66 = arith.constant dense<0.000000e+00> : vector<32x32xf32>
    %190 = tpu.matmul %187, %189, %cst_66 {dimension_numbers = #tpu.dot_dimension_numbers<[1], [0], [0], [1], [0, 0, 1, 1], [], []>} : vector<32x32xbf16>, vector<32x32xbf16>, vector<32x32xf32> -> vector<32x32xf32>
    %c0_67 = arith.constant 0 : index
    %c0_68 = arith.constant 0 : index
    %c0_69 = arith.constant 0 : index
    %191 = vector.load %arg9[%c0_67, %c0_68, %c0_69] : memref<2x1x32xf32, #tpu.memory_space<vmem>>, vector<1x1x32xf32>
    %192 = vector.shape_cast %191 : vector<1x1x32xf32> to vector<1x32xf32>
    %193 = vector.broadcast %192 : vector<1x32xf32> to vector<32x32xf32>
    %194 = arith.addf %190, %193 : vector<32x32xf32>
    %195 = arith.addf %10, %194 : vector<32x32xf32>
    %c0_70 = arith.constant 0 : index
    %c0_71 = arith.constant 0 : index
    %c0_72 = arith.constant 0 : index
    %196 = vector.load %arg10[%c0_70, %c0_71, %c0_72] : memref<2x1x32xf32, #tpu.memory_space<vmem>>, vector<1x1x32xf32>
    %197 = vector.shape_cast %196 : vector<1x1x32xf32> to vector<1x32xf32>
    %c0_73 = arith.constant 0 : index
    %c0_74 = arith.constant 0 : index
    %c0_75 = arith.constant 0 : index
    %198 = vector.load %arg11[%c0_73, %c0_74, %c0_75] : memref<2x1x32xf32, #tpu.memory_space<vmem>>, vector<1x1x32xf32>
    %199 = vector.shape_cast %198 : vector<1x1x32xf32> to vector<1x32xf32>
    %cst_76 = arith.constant dense<0.000000e+00> : vector<32xf32>
    %200 = vector.multi_reduction <add>, %195, %cst_76 [1] : vector<32x32xf32> to vector<32xf32>
    %201 = vector.shape_cast %200 : vector<32xf32> to vector<32x1xf32>
    %cst_77 = arith.constant 3.200000e+01 : f32
    %202 = vector.broadcast %cst_77 : f32 to vector<32x1xf32>
    %203 = arith.divf %201, %202 : vector<32x1xf32>
    %204 = vector.broadcast %203 : vector<32x1xf32> to vector<32x32xf32>
    %205 = arith.subf %195, %204 : vector<32x32xf32>
    %206 = arith.mulf %205, %205 : vector<32x32xf32>
    %cst_78 = arith.constant dense<0.000000e+00> : vector<32xf32>
    %207 = vector.multi_reduction <add>, %206, %cst_78 [1] : vector<32x32xf32> to vector<32xf32>
    %208 = vector.shape_cast %207 : vector<32xf32> to vector<32x1xf32>
    %cst_79 = arith.constant 3.200000e+01 : f32
    %209 = vector.broadcast %cst_79 : f32 to vector<32x1xf32>
    %210 = arith.divf %208, %209 : vector<32x1xf32>
    %211 = vector.broadcast %203 : vector<32x1xf32> to vector<32x32xf32>
    %212 = arith.subf %195, %211 : vector<32x32xf32>
    %cst_80 = arith.constant 9.99999974E-6 : f32
    %213 = vector.broadcast %cst_80 : f32 to vector<32x1xf32>
    %214 = arith.addf %210, %213 : vector<32x1xf32>
    %215 = math.rsqrt %214 : vector<32x1xf32>
    %216 = vector.broadcast %215 : vector<32x1xf32> to vector<32x32xf32>
    %217 = arith.mulf %212, %216 : vector<32x32xf32>
    %218 = vector.broadcast %197 : vector<1x32xf32> to vector<32x32xf32>
    %219 = arith.mulf %217, %218 : vector<32x32xf32>
    %220 = vector.broadcast %199 : vector<1x32xf32> to vector<32x32xf32>
    %221 = arith.addf %219, %220 : vector<32x32xf32>
    %222 = arith.truncf %221 : vector<32x32xf32> to vector<32x32xbf16>
    %c0_81 = arith.constant 0 : index
    %c0_82 = arith.constant 0 : index
    %c0_83 = arith.constant 0 : index
    %223 = vector.load %arg12[%c0_81, %c0_82, %c0_83] : memref<2x32x128xbf16, #tpu.memory_space<vmem>>, vector<1x32x128xbf16>
    %224 = vector.shape_cast %223 : vector<1x32x128xbf16> to vector<32x128xbf16>
    %cst_84 = arith.constant dense<0.000000e+00> : vector<32x128xf32>
    %225 = tpu.matmul %222, %224, %cst_84 {dimension_numbers = #tpu.dot_dimension_numbers<[1], [0], [0], [1], [0, 0, 1, 1], [], []>} : vector<32x32xbf16>, vector<32x128xbf16>, vector<32x128xf32> -> vector<32x128xf32>
    %c0_85 = arith.constant 0 : index
    %c0_86 = arith.constant 0 : index
    %c0_87 = arith.constant 0 : index
    %226 = vector.load %arg13[%c0_85, %c0_86, %c0_87] : memref<2x1x128xf32, #tpu.memory_space<vmem>>, vector<1x1x128xf32>
    %227 = vector.shape_cast %226 : vector<1x1x128xf32> to vector<1x128xf32>
    %228 = vector.broadcast %227 : vector<1x128xf32> to vector<32x128xf32>
    %229 = arith.addf %225, %228 : vector<32x128xf32>
    %cst_88 = arith.constant 5.000000e-01 : f32
    %230 = vector.broadcast %cst_88 : f32 to vector<32x128xf32>
    %231 = arith.mulf %230, %229 : vector<32x128xf32>
    %cst_89 = arith.constant 0.707106769 : f32
    %232 = vector.broadcast %cst_89 : f32 to vector<32x128xf32>
    %233 = arith.mulf %229, %232 : vector<32x128xf32>
    %234 = math.absf %233 : vector<32x128xf32>
    %cst_90 = arith.constant 0.327591091 : f32
    %235 = vector.broadcast %cst_90 : f32 to vector<32x128xf32>
    %236 = arith.mulf %235, %234 : vector<32x128xf32>
    %cst_91 = arith.constant 1.000000e+00 : f32
    %237 = vector.broadcast %cst_91 : f32 to vector<32x128xf32>
    %238 = arith.addf %237, %236 : vector<32x128xf32>
    %cst_92 = arith.constant 1.000000e+00 : f32
    %239 = vector.broadcast %cst_92 : f32 to vector<32x128xf32>
    %240 = arith.divf %239, %238 : vector<32x128xf32>
    %cst_93 = arith.constant 1.06140542 : f32
    %241 = vector.broadcast %cst_93 : f32 to vector<32x128xf32>
    %242 = arith.mulf %241, %240 : vector<32x128xf32>
    %cst_94 = arith.constant -1.45315206 : f32
    %243 = vector.broadcast %cst_94 : f32 to vector<32x128xf32>
    %244 = arith.addf %242, %243 : vector<32x128xf32>
    %245 = arith.mulf %244, %240 : vector<32x128xf32>
    %cst_95 = arith.constant 1.42141378 : f32
    %246 = vector.broadcast %cst_95 : f32 to vector<32x128xf32>
    %247 = arith.addf %245, %246 : vector<32x128xf32>
    %248 = arith.mulf %247, %240 : vector<32x128xf32>
    %cst_96 = arith.constant -0.284496725 : f32
    %249 = vector.broadcast %cst_96 : f32 to vector<32x128xf32>
    %250 = arith.addf %248, %249 : vector<32x128xf32>
    %251 = arith.mulf %250, %240 : vector<32x128xf32>
    %cst_97 = arith.constant 0.254829586 : f32
    %252 = vector.broadcast %cst_97 : f32 to vector<32x128xf32>
    %253 = arith.addf %251, %252 : vector<32x128xf32>
    %254 = arith.mulf %253, %240 : vector<32x128xf32>
    %cst_98 = arith.constant 0.000000e+00 : f32
    %255 = vector.broadcast %cst_98 : f32 to vector<32x128xf32>
    %256 = arith.subf %255, %234 : vector<32x128xf32>
    %257 = arith.mulf %256, %234 : vector<32x128xf32>
    %258 = math.exp %257 : vector<32x128xf32>
    %259 = arith.mulf %254, %258 : vector<32x128xf32>
    %cst_99 = arith.constant 1.000000e+00 : f32
    %260 = vector.broadcast %cst_99 : f32 to vector<32x128xf32>
    %261 = arith.subf %260, %259 : vector<32x128xf32>
    %cst_100 = arith.constant 0.000000e+00 : f32
    %262 = vector.broadcast %cst_100 : f32 to vector<32x128xf32>
    %263 = arith.cmpf oge, %233, %262 : vector<32x128xf32>
    %cst_101 = arith.constant 0.000000e+00 : f32
    %264 = vector.broadcast %cst_101 : f32 to vector<32x128xf32>
    %265 = arith.subf %264, %261 : vector<32x128xf32>
    %266 = arith.select %263, %261, %265 : vector<32x128xi1>, vector<32x128xf32>
    %cst_102 = arith.constant 1.000000e+00 : f32
    %267 = vector.broadcast %cst_102 : f32 to vector<32x128xf32>
    %268 = arith.addf %267, %266 : vector<32x128xf32>
    %269 = arith.mulf %231, %268 : vector<32x128xf32>
    %270 = arith.truncf %269 : vector<32x128xf32> to vector<32x128xbf16>
    %c0_103 = arith.constant 0 : index
    %c0_104 = arith.constant 0 : index
    %c0_105 = arith.constant 0 : index
    %271 = vector.load %arg14[%c0_103, %c0_104, %c0_105] : memref<2x128x32xbf16, #tpu.memory_space<vmem>>, vector<1x128x32xbf16>
    %272 = vector.shape_cast %271 : vector<1x128x32xbf16> to vector<128x32xbf16>
    %cst_106 = arith.constant dense<0.000000e+00> : vector<32x32xf32>
    %273 = tpu.matmul %270, %272, %cst_106 {dimension_numbers = #tpu.dot_dimension_numbers<[1], [0], [0], [1], [0, 0, 1, 1], [], []>} : vector<32x128xbf16>, vector<128x32xbf16>, vector<32x32xf32> -> vector<32x32xf32>
    %c0_107 = arith.constant 0 : index
    %c0_108 = arith.constant 0 : index
    %c0_109 = arith.constant 0 : index
    %274 = vector.load %arg15[%c0_107, %c0_108, %c0_109] : memref<2x1x32xf32, #tpu.memory_space<vmem>>, vector<1x1x32xf32>
    %275 = vector.shape_cast %274 : vector<1x1x32xf32> to vector<1x32xf32>
    %276 = vector.broadcast %275 : vector<1x32xf32> to vector<32x32xf32>
    %277 = arith.addf %273, %276 : vector<32x32xf32>
    %278 = arith.addf %195, %277 : vector<32x32xf32>
    %c1 = arith.constant 1 : index
    %c0_110 = arith.constant 0 : index
    %c0_111 = arith.constant 0 : index
    %279 = vector.load %arg4[%c1, %c0_110, %c0_111] : memref<2x1x32xf32, #tpu.memory_space<vmem>>, vector<1x1x32xf32>
    %280 = vector.shape_cast %279 : vector<1x1x32xf32> to vector<1x32xf32>
    %c1_112 = arith.constant 1 : index
    %c0_113 = arith.constant 0 : index
    %c0_114 = arith.constant 0 : index
    %281 = vector.load %arg5[%c1_112, %c0_113, %c0_114] : memref<2x1x32xf32, #tpu.memory_space<vmem>>, vector<1x1x32xf32>
    %282 = vector.shape_cast %281 : vector<1x1x32xf32> to vector<1x32xf32>
    %cst_115 = arith.constant dense<0.000000e+00> : vector<32xf32>
    %283 = vector.multi_reduction <add>, %278, %cst_115 [1] : vector<32x32xf32> to vector<32xf32>
    %284 = vector.shape_cast %283 : vector<32xf32> to vector<32x1xf32>
    %cst_116 = arith.constant 3.200000e+01 : f32
    %285 = vector.broadcast %cst_116 : f32 to vector<32x1xf32>
    %286 = arith.divf %284, %285 : vector<32x1xf32>
    %287 = vector.broadcast %286 : vector<32x1xf32> to vector<32x32xf32>
    %288 = arith.subf %278, %287 : vector<32x32xf32>
    %289 = arith.mulf %288, %288 : vector<32x32xf32>
    %cst_117 = arith.constant dense<0.000000e+00> : vector<32xf32>
    %290 = vector.multi_reduction <add>, %289, %cst_117 [1] : vector<32x32xf32> to vector<32xf32>
    %291 = vector.shape_cast %290 : vector<32xf32> to vector<32x1xf32>
    %cst_118 = arith.constant 3.200000e+01 : f32
    %292 = vector.broadcast %cst_118 : f32 to vector<32x1xf32>
    %293 = arith.divf %291, %292 : vector<32x1xf32>
    %294 = vector.broadcast %286 : vector<32x1xf32> to vector<32x32xf32>
    %295 = arith.subf %278, %294 : vector<32x32xf32>
    %cst_119 = arith.constant 9.99999974E-6 : f32
    %296 = vector.broadcast %cst_119 : f32 to vector<32x1xf32>
    %297 = arith.addf %293, %296 : vector<32x1xf32>
    %298 = math.rsqrt %297 : vector<32x1xf32>
    %299 = vector.broadcast %298 : vector<32x1xf32> to vector<32x32xf32>
    %300 = arith.mulf %295, %299 : vector<32x32xf32>
    %301 = vector.broadcast %280 : vector<1x32xf32> to vector<32x32xf32>
    %302 = arith.mulf %300, %301 : vector<32x32xf32>
    %303 = vector.broadcast %282 : vector<1x32xf32> to vector<32x32xf32>
    %304 = arith.addf %302, %303 : vector<32x32xf32>
    %305 = arith.truncf %304 : vector<32x32xf32> to vector<32x32xbf16>
    %c1_120 = arith.constant 1 : index
    %c0_121 = arith.constant 0 : index
    %c0_122 = arith.constant 0 : index
    %306 = vector.load %arg6[%c1_120, %c0_121, %c0_122] : memref<2x32x96xbf16, #tpu.memory_space<vmem>>, vector<1x32x96xbf16>
    %307 = vector.shape_cast %306 : vector<1x32x96xbf16> to vector<32x96xbf16>
    %cst_123 = arith.constant dense<0.000000e+00> : vector<32x96xf32>
    %308 = tpu.matmul %305, %307, %cst_123 {dimension_numbers = #tpu.dot_dimension_numbers<[1], [0], [0], [1], [0, 0, 1, 1], [], []>} : vector<32x32xbf16>, vector<32x96xbf16>, vector<32x96xf32> -> vector<32x96xf32>
    %c1_124 = arith.constant 1 : index
    %c0_125 = arith.constant 0 : index
    %c0_126 = arith.constant 0 : index
    %309 = vector.load %arg7[%c1_124, %c0_125, %c0_126] : memref<2x1x96xf32, #tpu.memory_space<vmem>>, vector<1x1x96xf32>
    %310 = vector.shape_cast %309 : vector<1x1x96xf32> to vector<1x96xf32>
    %311 = vector.broadcast %310 : vector<1x96xf32> to vector<32x96xf32>
    %312 = arith.addf %308, %311 : vector<32x96xf32>
    %313 = vector.extract_strided_slice %312 {offsets = [0, 0], sizes = [32, 32], strides = [1, 1]} : vector<32x96xf32> to vector<32x32xf32>
    %314 = vector.extract_strided_slice %312 {offsets = [0, 32], sizes = [32, 32], strides = [1, 1]} : vector<32x96xf32> to vector<32x32xf32>
    %315 = vector.extract_strided_slice %312 {offsets = [0, 64], sizes = [32, 32], strides = [1, 1]} : vector<32x96xf32> to vector<32x32xf32>
    %316 = vector.extract_strided_slice %313 {offsets = [0, 0], sizes = [16, 8], strides = [1, 1]} : vector<32x32xf32> to vector<16x8xf32>
    %317 = vector.extract_strided_slice %314 {offsets = [0, 0], sizes = [16, 8], strides = [1, 1]} : vector<32x32xf32> to vector<16x8xf32>
    %318 = vector.extract_strided_slice %315 {offsets = [0, 0], sizes = [16, 8], strides = [1, 1]} : vector<32x32xf32> to vector<16x8xf32>
    %cst_127 = arith.constant dense<0.000000e+00> : vector<16x16xf32>
    %319 = tpu.matmul %316, %317, %cst_127 {dimension_numbers = #tpu.dot_dimension_numbers<[1], [1], [0], [0], [0, 0, 1, 0], [], []>} : vector<16x8xf32>, vector<16x8xf32>, vector<16x16xf32> -> vector<16x16xf32>
    %cst_128 = arith.constant 0.353553385 : f32
    %320 = vector.broadcast %cst_128 : f32 to vector<16x16xf32>
    %321 = arith.mulf %319, %320 : vector<16x16xf32>
    %cst_129 = arith.constant dense<0xFF800000> : vector<16xf32>
    %322 = vector.multi_reduction <maximumf>, %321, %cst_129 [1] : vector<16x16xf32> to vector<16xf32>
    %323 = vector.shape_cast %322 : vector<16xf32> to vector<16x1xf32>
    %324 = vector.broadcast %323 : vector<16x1xf32> to vector<16x16xf32>
    %325 = arith.subf %321, %324 : vector<16x16xf32>
    %326 = math.exp %325 : vector<16x16xf32>
    %cst_130 = arith.constant dense<0.000000e+00> : vector<16xf32>
    %327 = vector.multi_reduction <add>, %326, %cst_130 [1] : vector<16x16xf32> to vector<16xf32>
    %328 = vector.shape_cast %327 : vector<16xf32> to vector<16x1xf32>
    %329 = tpu.reciprocal %328 {approx = true} : vector<16x1xf32> -> vector<16x1xf32>
    %330 = vector.broadcast %329 : vector<16x1xf32> to vector<16x16xf32>
    %331 = arith.mulf %326, %330 : vector<16x16xf32>
    %cst_131 = arith.constant dense<0.000000e+00> : vector<16x8xf32>
    %332 = tpu.matmul %331, %318, %cst_131 {dimension_numbers = #tpu.dot_dimension_numbers<[1], [0], [0], [1], [0, 0, 1, 1], [], []>} : vector<16x16xf32>, vector<16x8xf32>, vector<16x8xf32> -> vector<16x8xf32>
    %333 = vector.extract_strided_slice %313 {offsets = [0, 8], sizes = [16, 8], strides = [1, 1]} : vector<32x32xf32> to vector<16x8xf32>
    %334 = vector.extract_strided_slice %314 {offsets = [0, 8], sizes = [16, 8], strides = [1, 1]} : vector<32x32xf32> to vector<16x8xf32>
    %335 = vector.extract_strided_slice %315 {offsets = [0, 8], sizes = [16, 8], strides = [1, 1]} : vector<32x32xf32> to vector<16x8xf32>
    %cst_132 = arith.constant dense<0.000000e+00> : vector<16x16xf32>
    %336 = tpu.matmul %333, %334, %cst_132 {dimension_numbers = #tpu.dot_dimension_numbers<[1], [1], [0], [0], [0, 0, 1, 0], [], []>} : vector<16x8xf32>, vector<16x8xf32>, vector<16x16xf32> -> vector<16x16xf32>
    %cst_133 = arith.constant 0.353553385 : f32
    %337 = vector.broadcast %cst_133 : f32 to vector<16x16xf32>
    %338 = arith.mulf %336, %337 : vector<16x16xf32>
    %cst_134 = arith.constant dense<0xFF800000> : vector<16xf32>
    %339 = vector.multi_reduction <maximumf>, %338, %cst_134 [1] : vector<16x16xf32> to vector<16xf32>
    %340 = vector.shape_cast %339 : vector<16xf32> to vector<16x1xf32>
    %341 = vector.broadcast %340 : vector<16x1xf32> to vector<16x16xf32>
    %342 = arith.subf %338, %341 : vector<16x16xf32>
    %343 = math.exp %342 : vector<16x16xf32>
    %cst_135 = arith.constant dense<0.000000e+00> : vector<16xf32>
    %344 = vector.multi_reduction <add>, %343, %cst_135 [1] : vector<16x16xf32> to vector<16xf32>
    %345 = vector.shape_cast %344 : vector<16xf32> to vector<16x1xf32>
    %346 = tpu.reciprocal %345 {approx = true} : vector<16x1xf32> -> vector<16x1xf32>
    %347 = vector.broadcast %346 : vector<16x1xf32> to vector<16x16xf32>
    %348 = arith.mulf %343, %347 : vector<16x16xf32>
    %cst_136 = arith.constant dense<0.000000e+00> : vector<16x8xf32>
    %349 = tpu.matmul %348, %335, %cst_136 {dimension_numbers = #tpu.dot_dimension_numbers<[1], [0], [0], [1], [0, 0, 1, 1], [], []>} : vector<16x16xf32>, vector<16x8xf32>, vector<16x8xf32> -> vector<16x8xf32>
    %350 = vector.extract_strided_slice %313 {offsets = [0, 16], sizes = [16, 8], strides = [1, 1]} : vector<32x32xf32> to vector<16x8xf32>
    %351 = vector.extract_strided_slice %314 {offsets = [0, 16], sizes = [16, 8], strides = [1, 1]} : vector<32x32xf32> to vector<16x8xf32>
    %352 = vector.extract_strided_slice %315 {offsets = [0, 16], sizes = [16, 8], strides = [1, 1]} : vector<32x32xf32> to vector<16x8xf32>
    %cst_137 = arith.constant dense<0.000000e+00> : vector<16x16xf32>
    %353 = tpu.matmul %350, %351, %cst_137 {dimension_numbers = #tpu.dot_dimension_numbers<[1], [1], [0], [0], [0, 0, 1, 0], [], []>} : vector<16x8xf32>, vector<16x8xf32>, vector<16x16xf32> -> vector<16x16xf32>
    %cst_138 = arith.constant 0.353553385 : f32
    %354 = vector.broadcast %cst_138 : f32 to vector<16x16xf32>
    %355 = arith.mulf %353, %354 : vector<16x16xf32>
    %cst_139 = arith.constant dense<0xFF800000> : vector<16xf32>
    %356 = vector.multi_reduction <maximumf>, %355, %cst_139 [1] : vector<16x16xf32> to vector<16xf32>
    %357 = vector.shape_cast %356 : vector<16xf32> to vector<16x1xf32>
    %358 = vector.broadcast %357 : vector<16x1xf32> to vector<16x16xf32>
    %359 = arith.subf %355, %358 : vector<16x16xf32>
    %360 = math.exp %359 : vector<16x16xf32>
    %cst_140 = arith.constant dense<0.000000e+00> : vector<16xf32>
    %361 = vector.multi_reduction <add>, %360, %cst_140 [1] : vector<16x16xf32> to vector<16xf32>
    %362 = vector.shape_cast %361 : vector<16xf32> to vector<16x1xf32>
    %363 = tpu.reciprocal %362 {approx = true} : vector<16x1xf32> -> vector<16x1xf32>
    %364 = vector.broadcast %363 : vector<16x1xf32> to vector<16x16xf32>
    %365 = arith.mulf %360, %364 : vector<16x16xf32>
    %cst_141 = arith.constant dense<0.000000e+00> : vector<16x8xf32>
    %366 = tpu.matmul %365, %352, %cst_141 {dimension_numbers = #tpu.dot_dimension_numbers<[1], [0], [0], [1], [0, 0, 1, 1], [], []>} : vector<16x16xf32>, vector<16x8xf32>, vector<16x8xf32> -> vector<16x8xf32>
    %367 = vector.extract_strided_slice %313 {offsets = [0, 24], sizes = [16, 8], strides = [1, 1]} : vector<32x32xf32> to vector<16x8xf32>
    %368 = vector.extract_strided_slice %314 {offsets = [0, 24], sizes = [16, 8], strides = [1, 1]} : vector<32x32xf32> to vector<16x8xf32>
    %369 = vector.extract_strided_slice %315 {offsets = [0, 24], sizes = [16, 8], strides = [1, 1]} : vector<32x32xf32> to vector<16x8xf32>
    %cst_142 = arith.constant dense<0.000000e+00> : vector<16x16xf32>
    %370 = tpu.matmul %367, %368, %cst_142 {dimension_numbers = #tpu.dot_dimension_numbers<[1], [1], [0], [0], [0, 0, 1, 0], [], []>} : vector<16x8xf32>, vector<16x8xf32>, vector<16x16xf32> -> vector<16x16xf32>
    %cst_143 = arith.constant 0.353553385 : f32
    %371 = vector.broadcast %cst_143 : f32 to vector<16x16xf32>
    %372 = arith.mulf %370, %371 : vector<16x16xf32>
    %cst_144 = arith.constant dense<0xFF800000> : vector<16xf32>
    %373 = vector.multi_reduction <maximumf>, %372, %cst_144 [1] : vector<16x16xf32> to vector<16xf32>
    %374 = vector.shape_cast %373 : vector<16xf32> to vector<16x1xf32>
    %375 = vector.broadcast %374 : vector<16x1xf32> to vector<16x16xf32>
    %376 = arith.subf %372, %375 : vector<16x16xf32>
    %377 = math.exp %376 : vector<16x16xf32>
    %cst_145 = arith.constant dense<0.000000e+00> : vector<16xf32>
    %378 = vector.multi_reduction <add>, %377, %cst_145 [1] : vector<16x16xf32> to vector<16xf32>
    %379 = vector.shape_cast %378 : vector<16xf32> to vector<16x1xf32>
    %380 = tpu.reciprocal %379 {approx = true} : vector<16x1xf32> -> vector<16x1xf32>
    %381 = vector.broadcast %380 : vector<16x1xf32> to vector<16x16xf32>
    %382 = arith.mulf %377, %381 : vector<16x16xf32>
    %cst_146 = arith.constant dense<0.000000e+00> : vector<16x8xf32>
    %383 = tpu.matmul %382, %369, %cst_146 {dimension_numbers = #tpu.dot_dimension_numbers<[1], [0], [0], [1], [0, 0, 1, 1], [], []>} : vector<16x16xf32>, vector<16x8xf32>, vector<16x8xf32> -> vector<16x8xf32>
    %384 = tpu.concatenate %332, %349, %366, %383 in 1 : vector<16x8xf32>, vector<16x8xf32>, vector<16x8xf32>, vector<16x8xf32> -> vector<16x32xf32>
    %385 = vector.extract_strided_slice %313 {offsets = [16, 0], sizes = [16, 8], strides = [1, 1]} : vector<32x32xf32> to vector<16x8xf32>
    %386 = vector.extract_strided_slice %314 {offsets = [16, 0], sizes = [16, 8], strides = [1, 1]} : vector<32x32xf32> to vector<16x8xf32>
    %387 = vector.extract_strided_slice %315 {offsets = [16, 0], sizes = [16, 8], strides = [1, 1]} : vector<32x32xf32> to vector<16x8xf32>
    %cst_147 = arith.constant dense<0.000000e+00> : vector<16x16xf32>
    %388 = tpu.matmul %385, %386, %cst_147 {dimension_numbers = #tpu.dot_dimension_numbers<[1], [1], [0], [0], [0, 0, 1, 0], [], []>} : vector<16x8xf32>, vector<16x8xf32>, vector<16x16xf32> -> vector<16x16xf32>
    %cst_148 = arith.constant 0.353553385 : f32
    %389 = vector.broadcast %cst_148 : f32 to vector<16x16xf32>
    %390 = arith.mulf %388, %389 : vector<16x16xf32>
    %cst_149 = arith.constant dense<0xFF800000> : vector<16xf32>
    %391 = vector.multi_reduction <maximumf>, %390, %cst_149 [1] : vector<16x16xf32> to vector<16xf32>
    %392 = vector.shape_cast %391 : vector<16xf32> to vector<16x1xf32>
    %393 = vector.broadcast %392 : vector<16x1xf32> to vector<16x16xf32>
    %394 = arith.subf %390, %393 : vector<16x16xf32>
    %395 = math.exp %394 : vector<16x16xf32>
    %cst_150 = arith.constant dense<0.000000e+00> : vector<16xf32>
    %396 = vector.multi_reduction <add>, %395, %cst_150 [1] : vector<16x16xf32> to vector<16xf32>
    %397 = vector.shape_cast %396 : vector<16xf32> to vector<16x1xf32>
    %398 = tpu.reciprocal %397 {approx = true} : vector<16x1xf32> -> vector<16x1xf32>
    %399 = vector.broadcast %398 : vector<16x1xf32> to vector<16x16xf32>
    %400 = arith.mulf %395, %399 : vector<16x16xf32>
    %cst_151 = arith.constant dense<0.000000e+00> : vector<16x8xf32>
    %401 = tpu.matmul %400, %387, %cst_151 {dimension_numbers = #tpu.dot_dimension_numbers<[1], [0], [0], [1], [0, 0, 1, 1], [], []>} : vector<16x16xf32>, vector<16x8xf32>, vector<16x8xf32> -> vector<16x8xf32>
    %402 = vector.extract_strided_slice %313 {offsets = [16, 8], sizes = [16, 8], strides = [1, 1]} : vector<32x32xf32> to vector<16x8xf32>
    %403 = vector.extract_strided_slice %314 {offsets = [16, 8], sizes = [16, 8], strides = [1, 1]} : vector<32x32xf32> to vector<16x8xf32>
    %404 = vector.extract_strided_slice %315 {offsets = [16, 8], sizes = [16, 8], strides = [1, 1]} : vector<32x32xf32> to vector<16x8xf32>
    %cst_152 = arith.constant dense<0.000000e+00> : vector<16x16xf32>
    %405 = tpu.matmul %402, %403, %cst_152 {dimension_numbers = #tpu.dot_dimension_numbers<[1], [1], [0], [0], [0, 0, 1, 0], [], []>} : vector<16x8xf32>, vector<16x8xf32>, vector<16x16xf32> -> vector<16x16xf32>
    %cst_153 = arith.constant 0.353553385 : f32
    %406 = vector.broadcast %cst_153 : f32 to vector<16x16xf32>
    %407 = arith.mulf %405, %406 : vector<16x16xf32>
    %cst_154 = arith.constant dense<0xFF800000> : vector<16xf32>
    %408 = vector.multi_reduction <maximumf>, %407, %cst_154 [1] : vector<16x16xf32> to vector<16xf32>
    %409 = vector.shape_cast %408 : vector<16xf32> to vector<16x1xf32>
    %410 = vector.broadcast %409 : vector<16x1xf32> to vector<16x16xf32>
    %411 = arith.subf %407, %410 : vector<16x16xf32>
    %412 = math.exp %411 : vector<16x16xf32>
    %cst_155 = arith.constant dense<0.000000e+00> : vector<16xf32>
    %413 = vector.multi_reduction <add>, %412, %cst_155 [1] : vector<16x16xf32> to vector<16xf32>
    %414 = vector.shape_cast %413 : vector<16xf32> to vector<16x1xf32>
    %415 = tpu.reciprocal %414 {approx = true} : vector<16x1xf32> -> vector<16x1xf32>
    %416 = vector.broadcast %415 : vector<16x1xf32> to vector<16x16xf32>
    %417 = arith.mulf %412, %416 : vector<16x16xf32>
    %cst_156 = arith.constant dense<0.000000e+00> : vector<16x8xf32>
    %418 = tpu.matmul %417, %404, %cst_156 {dimension_numbers = #tpu.dot_dimension_numbers<[1], [0], [0], [1], [0, 0, 1, 1], [], []>} : vector<16x16xf32>, vector<16x8xf32>, vector<16x8xf32> -> vector<16x8xf32>
    %419 = vector.extract_strided_slice %313 {offsets = [16, 16], sizes = [16, 8], strides = [1, 1]} : vector<32x32xf32> to vector<16x8xf32>
    %420 = vector.extract_strided_slice %314 {offsets = [16, 16], sizes = [16, 8], strides = [1, 1]} : vector<32x32xf32> to vector<16x8xf32>
    %421 = vector.extract_strided_slice %315 {offsets = [16, 16], sizes = [16, 8], strides = [1, 1]} : vector<32x32xf32> to vector<16x8xf32>
    %cst_157 = arith.constant dense<0.000000e+00> : vector<16x16xf32>
    %422 = tpu.matmul %419, %420, %cst_157 {dimension_numbers = #tpu.dot_dimension_numbers<[1], [1], [0], [0], [0, 0, 1, 0], [], []>} : vector<16x8xf32>, vector<16x8xf32>, vector<16x16xf32> -> vector<16x16xf32>
    %cst_158 = arith.constant 0.353553385 : f32
    %423 = vector.broadcast %cst_158 : f32 to vector<16x16xf32>
    %424 = arith.mulf %422, %423 : vector<16x16xf32>
    %cst_159 = arith.constant dense<0xFF800000> : vector<16xf32>
    %425 = vector.multi_reduction <maximumf>, %424, %cst_159 [1] : vector<16x16xf32> to vector<16xf32>
    %426 = vector.shape_cast %425 : vector<16xf32> to vector<16x1xf32>
    %427 = vector.broadcast %426 : vector<16x1xf32> to vector<16x16xf32>
    %428 = arith.subf %424, %427 : vector<16x16xf32>
    %429 = math.exp %428 : vector<16x16xf32>
    %cst_160 = arith.constant dense<0.000000e+00> : vector<16xf32>
    %430 = vector.multi_reduction <add>, %429, %cst_160 [1] : vector<16x16xf32> to vector<16xf32>
    %431 = vector.shape_cast %430 : vector<16xf32> to vector<16x1xf32>
    %432 = tpu.reciprocal %431 {approx = true} : vector<16x1xf32> -> vector<16x1xf32>
    %433 = vector.broadcast %432 : vector<16x1xf32> to vector<16x16xf32>
    %434 = arith.mulf %429, %433 : vector<16x16xf32>
    %cst_161 = arith.constant dense<0.000000e+00> : vector<16x8xf32>
    %435 = tpu.matmul %434, %421, %cst_161 {dimension_numbers = #tpu.dot_dimension_numbers<[1], [0], [0], [1], [0, 0, 1, 1], [], []>} : vector<16x16xf32>, vector<16x8xf32>, vector<16x8xf32> -> vector<16x8xf32>
    %436 = vector.extract_strided_slice %313 {offsets = [16, 24], sizes = [16, 8], strides = [1, 1]} : vector<32x32xf32> to vector<16x8xf32>
    %437 = vector.extract_strided_slice %314 {offsets = [16, 24], sizes = [16, 8], strides = [1, 1]} : vector<32x32xf32> to vector<16x8xf32>
    %438 = vector.extract_strided_slice %315 {offsets = [16, 24], sizes = [16, 8], strides = [1, 1]} : vector<32x32xf32> to vector<16x8xf32>
    %cst_162 = arith.constant dense<0.000000e+00> : vector<16x16xf32>
    %439 = tpu.matmul %436, %437, %cst_162 {dimension_numbers = #tpu.dot_dimension_numbers<[1], [1], [0], [0], [0, 0, 1, 0], [], []>} : vector<16x8xf32>, vector<16x8xf32>, vector<16x16xf32> -> vector<16x16xf32>
    %cst_163 = arith.constant 0.353553385 : f32
    %440 = vector.broadcast %cst_163 : f32 to vector<16x16xf32>
    %441 = arith.mulf %439, %440 : vector<16x16xf32>
    %cst_164 = arith.constant dense<0xFF800000> : vector<16xf32>
    %442 = vector.multi_reduction <maximumf>, %441, %cst_164 [1] : vector<16x16xf32> to vector<16xf32>
    %443 = vector.shape_cast %442 : vector<16xf32> to vector<16x1xf32>
    %444 = vector.broadcast %443 : vector<16x1xf32> to vector<16x16xf32>
    %445 = arith.subf %441, %444 : vector<16x16xf32>
    %446 = math.exp %445 : vector<16x16xf32>
    %cst_165 = arith.constant dense<0.000000e+00> : vector<16xf32>
    %447 = vector.multi_reduction <add>, %446, %cst_165 [1] : vector<16x16xf32> to vector<16xf32>
    %448 = vector.shape_cast %447 : vector<16xf32> to vector<16x1xf32>
    %449 = tpu.reciprocal %448 {approx = true} : vector<16x1xf32> -> vector<16x1xf32>
    %450 = vector.broadcast %449 : vector<16x1xf32> to vector<16x16xf32>
    %451 = arith.mulf %446, %450 : vector<16x16xf32>
    %cst_166 = arith.constant dense<0.000000e+00> : vector<16x8xf32>
    %452 = tpu.matmul %451, %438, %cst_166 {dimension_numbers = #tpu.dot_dimension_numbers<[1], [0], [0], [1], [0, 0, 1, 1], [], []>} : vector<16x16xf32>, vector<16x8xf32>, vector<16x8xf32> -> vector<16x8xf32>
    %453 = tpu.concatenate %401, %418, %435, %452 in 1 : vector<16x8xf32>, vector<16x8xf32>, vector<16x8xf32>, vector<16x8xf32> -> vector<16x32xf32>
    %454 = tpu.concatenate %384, %453 in 0 : vector<16x32xf32>, vector<16x32xf32> -> vector<32x32xf32>
    %455 = arith.truncf %454 : vector<32x32xf32> to vector<32x32xbf16>
    %c1_167 = arith.constant 1 : index
    %c0_168 = arith.constant 0 : index
    %c0_169 = arith.constant 0 : index
    %456 = vector.load %arg8[%c1_167, %c0_168, %c0_169] : memref<2x32x32xbf16, #tpu.memory_space<vmem>>, vector<1x32x32xbf16>
    %457 = vector.shape_cast %456 : vector<1x32x32xbf16> to vector<32x32xbf16>
    %cst_170 = arith.constant dense<0.000000e+00> : vector<32x32xf32>
    %458 = tpu.matmul %455, %457, %cst_170 {dimension_numbers = #tpu.dot_dimension_numbers<[1], [0], [0], [1], [0, 0, 1, 1], [], []>} : vector<32x32xbf16>, vector<32x32xbf16>, vector<32x32xf32> -> vector<32x32xf32>
    %c1_171 = arith.constant 1 : index
    %c0_172 = arith.constant 0 : index
    %c0_173 = arith.constant 0 : index
    %459 = vector.load %arg9[%c1_171, %c0_172, %c0_173] : memref<2x1x32xf32, #tpu.memory_space<vmem>>, vector<1x1x32xf32>
    %460 = vector.shape_cast %459 : vector<1x1x32xf32> to vector<1x32xf32>
    %461 = vector.broadcast %460 : vector<1x32xf32> to vector<32x32xf32>
    %462 = arith.addf %458, %461 : vector<32x32xf32>
    %463 = arith.addf %278, %462 : vector<32x32xf32>
    %c1_174 = arith.constant 1 : index
    %c0_175 = arith.constant 0 : index
    %c0_176 = arith.constant 0 : index
    %464 = vector.load %arg10[%c1_174, %c0_175, %c0_176] : memref<2x1x32xf32, #tpu.memory_space<vmem>>, vector<1x1x32xf32>
    %465 = vector.shape_cast %464 : vector<1x1x32xf32> to vector<1x32xf32>
    %c1_177 = arith.constant 1 : index
    %c0_178 = arith.constant 0 : index
    %c0_179 = arith.constant 0 : index
    %466 = vector.load %arg11[%c1_177, %c0_178, %c0_179] : memref<2x1x32xf32, #tpu.memory_space<vmem>>, vector<1x1x32xf32>
    %467 = vector.shape_cast %466 : vector<1x1x32xf32> to vector<1x32xf32>
    %cst_180 = arith.constant dense<0.000000e+00> : vector<32xf32>
    %468 = vector.multi_reduction <add>, %463, %cst_180 [1] : vector<32x32xf32> to vector<32xf32>
    %469 = vector.shape_cast %468 : vector<32xf32> to vector<32x1xf32>
    %cst_181 = arith.constant 3.200000e+01 : f32
    %470 = vector.broadcast %cst_181 : f32 to vector<32x1xf32>
    %471 = arith.divf %469, %470 : vector<32x1xf32>
    %472 = vector.broadcast %471 : vector<32x1xf32> to vector<32x32xf32>
    %473 = arith.subf %463, %472 : vector<32x32xf32>
    %474 = arith.mulf %473, %473 : vector<32x32xf32>
    %cst_182 = arith.constant dense<0.000000e+00> : vector<32xf32>
    %475 = vector.multi_reduction <add>, %474, %cst_182 [1] : vector<32x32xf32> to vector<32xf32>
    %476 = vector.shape_cast %475 : vector<32xf32> to vector<32x1xf32>
    %cst_183 = arith.constant 3.200000e+01 : f32
    %477 = vector.broadcast %cst_183 : f32 to vector<32x1xf32>
    %478 = arith.divf %476, %477 : vector<32x1xf32>
    %479 = vector.broadcast %471 : vector<32x1xf32> to vector<32x32xf32>
    %480 = arith.subf %463, %479 : vector<32x32xf32>
    %cst_184 = arith.constant 9.99999974E-6 : f32
    %481 = vector.broadcast %cst_184 : f32 to vector<32x1xf32>
    %482 = arith.addf %478, %481 : vector<32x1xf32>
    %483 = math.rsqrt %482 : vector<32x1xf32>
    %484 = vector.broadcast %483 : vector<32x1xf32> to vector<32x32xf32>
    %485 = arith.mulf %480, %484 : vector<32x32xf32>
    %486 = vector.broadcast %465 : vector<1x32xf32> to vector<32x32xf32>
    %487 = arith.mulf %485, %486 : vector<32x32xf32>
    %488 = vector.broadcast %467 : vector<1x32xf32> to vector<32x32xf32>
    %489 = arith.addf %487, %488 : vector<32x32xf32>
    %490 = arith.truncf %489 : vector<32x32xf32> to vector<32x32xbf16>
    %c1_185 = arith.constant 1 : index
    %c0_186 = arith.constant 0 : index
    %c0_187 = arith.constant 0 : index
    %491 = vector.load %arg12[%c1_185, %c0_186, %c0_187] : memref<2x32x128xbf16, #tpu.memory_space<vmem>>, vector<1x32x128xbf16>
    %492 = vector.shape_cast %491 : vector<1x32x128xbf16> to vector<32x128xbf16>
    %cst_188 = arith.constant dense<0.000000e+00> : vector<32x128xf32>
    %493 = tpu.matmul %490, %492, %cst_188 {dimension_numbers = #tpu.dot_dimension_numbers<[1], [0], [0], [1], [0, 0, 1, 1], [], []>} : vector<32x32xbf16>, vector<32x128xbf16>, vector<32x128xf32> -> vector<32x128xf32>
    %c1_189 = arith.constant 1 : index
    %c0_190 = arith.constant 0 : index
    %c0_191 = arith.constant 0 : index
    %494 = vector.load %arg13[%c1_189, %c0_190, %c0_191] : memref<2x1x128xf32, #tpu.memory_space<vmem>>, vector<1x1x128xf32>
    %495 = vector.shape_cast %494 : vector<1x1x128xf32> to vector<1x128xf32>
    %496 = vector.broadcast %495 : vector<1x128xf32> to vector<32x128xf32>
    %497 = arith.addf %493, %496 : vector<32x128xf32>
    %cst_192 = arith.constant 5.000000e-01 : f32
    %498 = vector.broadcast %cst_192 : f32 to vector<32x128xf32>
    %499 = arith.mulf %498, %497 : vector<32x128xf32>
    %cst_193 = arith.constant 0.707106769 : f32
    %500 = vector.broadcast %cst_193 : f32 to vector<32x128xf32>
    %501 = arith.mulf %497, %500 : vector<32x128xf32>
    %502 = math.absf %501 : vector<32x128xf32>
    %cst_194 = arith.constant 0.327591091 : f32
    %503 = vector.broadcast %cst_194 : f32 to vector<32x128xf32>
    %504 = arith.mulf %503, %502 : vector<32x128xf32>
    %cst_195 = arith.constant 1.000000e+00 : f32
    %505 = vector.broadcast %cst_195 : f32 to vector<32x128xf32>
    %506 = arith.addf %505, %504 : vector<32x128xf32>
    %cst_196 = arith.constant 1.000000e+00 : f32
    %507 = vector.broadcast %cst_196 : f32 to vector<32x128xf32>
    %508 = arith.divf %507, %506 : vector<32x128xf32>
    %cst_197 = arith.constant 1.06140542 : f32
    %509 = vector.broadcast %cst_197 : f32 to vector<32x128xf32>
    %510 = arith.mulf %509, %508 : vector<32x128xf32>
    %cst_198 = arith.constant -1.45315206 : f32
    %511 = vector.broadcast %cst_198 : f32 to vector<32x128xf32>
    %512 = arith.addf %510, %511 : vector<32x128xf32>
    %513 = arith.mulf %512, %508 : vector<32x128xf32>
    %cst_199 = arith.constant 1.42141378 : f32
    %514 = vector.broadcast %cst_199 : f32 to vector<32x128xf32>
    %515 = arith.addf %513, %514 : vector<32x128xf32>
    %516 = arith.mulf %515, %508 : vector<32x128xf32>
    %cst_200 = arith.constant -0.284496725 : f32
    %517 = vector.broadcast %cst_200 : f32 to vector<32x128xf32>
    %518 = arith.addf %516, %517 : vector<32x128xf32>
    %519 = arith.mulf %518, %508 : vector<32x128xf32>
    %cst_201 = arith.constant 0.254829586 : f32
    %520 = vector.broadcast %cst_201 : f32 to vector<32x128xf32>
    %521 = arith.addf %519, %520 : vector<32x128xf32>
    %522 = arith.mulf %521, %508 : vector<32x128xf32>
    %cst_202 = arith.constant 0.000000e+00 : f32
    %523 = vector.broadcast %cst_202 : f32 to vector<32x128xf32>
    %524 = arith.subf %523, %502 : vector<32x128xf32>
    %525 = arith.mulf %524, %502 : vector<32x128xf32>
    %526 = math.exp %525 : vector<32x128xf32>
    %527 = arith.mulf %522, %526 : vector<32x128xf32>
    %cst_203 = arith.constant 1.000000e+00 : f32
    %528 = vector.broadcast %cst_203 : f32 to vector<32x128xf32>
    %529 = arith.subf %528, %527 : vector<32x128xf32>
    %cst_204 = arith.constant 0.000000e+00 : f32
    %530 = vector.broadcast %cst_204 : f32 to vector<32x128xf32>
    %531 = arith.cmpf oge, %501, %530 : vector<32x128xf32>
    %cst_205 = arith.constant 0.000000e+00 : f32
    %532 = vector.broadcast %cst_205 : f32 to vector<32x128xf32>
    %533 = arith.subf %532, %529 : vector<32x128xf32>
    %534 = arith.select %531, %529, %533 : vector<32x128xi1>, vector<32x128xf32>
    %cst_206 = arith.constant 1.000000e+00 : f32
    %535 = vector.broadcast %cst_206 : f32 to vector<32x128xf32>
    %536 = arith.addf %535, %534 : vector<32x128xf32>
    %537 = arith.mulf %499, %536 : vector<32x128xf32>
    %538 = arith.truncf %537 : vector<32x128xf32> to vector<32x128xbf16>
    %c1_207 = arith.constant 1 : index
    %c0_208 = arith.constant 0 : index
    %c0_209 = arith.constant 0 : index
    %539 = vector.load %arg14[%c1_207, %c0_208, %c0_209] : memref<2x128x32xbf16, #tpu.memory_space<vmem>>, vector<1x128x32xbf16>
    %540 = vector.shape_cast %539 : vector<1x128x32xbf16> to vector<128x32xbf16>
    %cst_210 = arith.constant dense<0.000000e+00> : vector<32x32xf32>
    %541 = tpu.matmul %538, %540, %cst_210 {dimension_numbers = #tpu.dot_dimension_numbers<[1], [0], [0], [1], [0, 0, 1, 1], [], []>} : vector<32x128xbf16>, vector<128x32xbf16>, vector<32x32xf32> -> vector<32x32xf32>
    %c1_211 = arith.constant 1 : index
    %c0_212 = arith.constant 0 : index
    %c0_213 = arith.constant 0 : index
    %542 = vector.load %arg15[%c1_211, %c0_212, %c0_213] : memref<2x1x32xf32, #tpu.memory_space<vmem>>, vector<1x1x32xf32>
    %543 = vector.shape_cast %542 : vector<1x1x32xf32> to vector<1x32xf32>
    %544 = vector.broadcast %543 : vector<1x32xf32> to vector<32x32xf32>
    %545 = arith.addf %541, %544 : vector<32x32xf32>
    %546 = arith.addf %463, %545 : vector<32x32xf32>
    %c0_214 = arith.constant 0 : index
    %c0_215 = arith.constant 0 : index
    %547 = vector.load %arg16[%c0_214, %c0_215] : memref<1x32xf32, #tpu.memory_space<vmem>>, vector<1x32xf32>
    %c0_216 = arith.constant 0 : index
    %c0_217 = arith.constant 0 : index
    %548 = vector.load %arg17[%c0_216, %c0_217] : memref<1x32xf32, #tpu.memory_space<vmem>>, vector<1x32xf32>
    %cst_218 = arith.constant dense<0.000000e+00> : vector<32xf32>
    %549 = vector.multi_reduction <add>, %546, %cst_218 [1] : vector<32x32xf32> to vector<32xf32>
    %550 = vector.shape_cast %549 : vector<32xf32> to vector<32x1xf32>
    %cst_219 = arith.constant 3.200000e+01 : f32
    %551 = vector.broadcast %cst_219 : f32 to vector<32x1xf32>
    %552 = arith.divf %550, %551 : vector<32x1xf32>
    %553 = vector.broadcast %552 : vector<32x1xf32> to vector<32x32xf32>
    %554 = arith.subf %546, %553 : vector<32x32xf32>
    %555 = arith.mulf %554, %554 : vector<32x32xf32>
    %cst_220 = arith.constant dense<0.000000e+00> : vector<32xf32>
    %556 = vector.multi_reduction <add>, %555, %cst_220 [1] : vector<32x32xf32> to vector<32xf32>
    %557 = vector.shape_cast %556 : vector<32xf32> to vector<32x1xf32>
    %cst_221 = arith.constant 3.200000e+01 : f32
    %558 = vector.broadcast %cst_221 : f32 to vector<32x1xf32>
    %559 = arith.divf %557, %558 : vector<32x1xf32>
    %560 = vector.broadcast %552 : vector<32x1xf32> to vector<32x32xf32>
    %561 = arith.subf %546, %560 : vector<32x32xf32>
    %cst_222 = arith.constant 9.99999974E-6 : f32
    %562 = vector.broadcast %cst_222 : f32 to vector<32x1xf32>
    %563 = arith.addf %559, %562 : vector<32x1xf32>
    %564 = math.rsqrt %563 : vector<32x1xf32>
    %565 = vector.broadcast %564 : vector<32x1xf32> to vector<32x32xf32>
    %566 = arith.mulf %561, %565 : vector<32x32xf32>
    %567 = vector.broadcast %547 : vector<1x32xf32> to vector<32x32xf32>
    %568 = arith.mulf %566, %567 : vector<32x32xf32>
    %569 = vector.broadcast %548 : vector<1x32xf32> to vector<32x32xf32>
    %570 = arith.addf %568, %569 : vector<32x32xf32>
    %571 = vector.extract_strided_slice %570 {offsets = [0, 0], sizes = [16, 32], strides = [1, 1]} : vector<32x32xf32> to vector<16x32xf32>
    %572 = arith.truncf %571 : vector<16x32xf32> to vector<16x32xbf16>
    %c0_223 = arith.constant 0 : index
    %c0_224 = arith.constant 0 : index
    %573 = vector.load %arg18[%c0_223, %c0_224] : memref<16x32xbf16, #tpu.memory_space<vmem>>, vector<16x32xbf16>
    %cst_225 = arith.constant dense<0.000000e+00> : vector<16x16xf32>
    %574 = tpu.matmul %573, %572, %cst_225 {dimension_numbers = #tpu.dot_dimension_numbers<[1], [1], [0], [0], [0, 0, 1, 0], [], []>} : vector<16x32xbf16>, vector<16x32xbf16>, vector<16x16xf32> -> vector<16x16xf32>
    %c0_226 = arith.constant 0 : index
    %c0_227 = arith.constant 0 : index
    %c0_228 = arith.constant 0 : index
    %575 = vector.load %arg19[%c0_226, %c0_227, %c0_228] : memref<2x16x16xf32, #tpu.memory_space<vmem>>, vector<1x16x16xf32>
    %576 = vector.shape_cast %575 : vector<1x16x16xf32> to vector<16x16xf32>
    %577 = vector.shape_cast %574 : vector<16x16xf32> to vector<1x16x16xf32>
    tpu.vector_store %arg19[%c0_226, %c0_227, %c0_228], %577 {strides = array<i32>} : memref<2x16x16xf32, #tpu.memory_space<vmem>>, vector<1x16x16xf32>,
    %578 = vector.extract_strided_slice %570 {offsets = [16, 0], sizes = [16, 32], strides = [1, 1]} : vector<32x32xf32> to vector<16x32xf32>
    %579 = arith.truncf %578 : vector<16x32xf32> to vector<16x32xbf16>
    %c0_229 = arith.constant 0 : index
    %c0_230 = arith.constant 0 : index
    %580 = vector.load %arg18[%c0_229, %c0_230] : memref<16x32xbf16, #tpu.memory_space<vmem>>, vector<16x32xbf16>
    %cst_231 = arith.constant dense<0.000000e+00> : vector<16x16xf32>
    %581 = tpu.matmul %580, %579, %cst_231 {dimension_numbers = #tpu.dot_dimension_numbers<[1], [1], [0], [0], [0, 0, 1, 0], [], []>} : vector<16x32xbf16>, vector<16x32xbf16>, vector<16x16xf32> -> vector<16x16xf32>
    %c1_232 = arith.constant 1 : index
    %c0_233 = arith.constant 0 : index
    %c0_234 = arith.constant 0 : index
    %582 = vector.load %arg19[%c1_232, %c0_233, %c0_234] : memref<2x16x16xf32, #tpu.memory_space<vmem>>, vector<1x16x16xf32>
    %583 = vector.shape_cast %582 : vector<1x16x16xf32> to vector<16x16xf32>
    %584 = vector.shape_cast %581 : vector<16x16xf32> to vector<1x16x16xf32>
    tpu.vector_store %arg19[%c1_232, %c0_233, %c0_234], %584 {strides = array<i32>} : memref<2x16x16xf32, #tpu.memory_space<vmem>>, vector<1x16x16xf32>,
    return
  }
  func.func @transform_0(%arg0: i32) -> (i32, i32) {
    %c0_i32 = arith.constant 0 : i32
    %c0_i32_0 = arith.constant 0 : i32
    %c0_i32_1 = arith.constant 0 : i32
    return %c0_i32, %c0_i32_0 : i32, i32
  }
  func.func @transform_1(%arg0: i32) -> (i32, i32) {
    %c0_i32 = arith.constant 0 : i32
    %c0_i32_0 = arith.constant 0 : i32
    %c0_i32_1 = arith.constant 0 : i32
    return %c0_i32, %c0_i32_0 : i32, i32
  }
  func.func @transform_2(%arg0: i32) -> (i32, i32) {
    %c0_i32 = arith.constant 0 : i32
    %c0_i32_0 = arith.constant 0 : i32
    %c0_i32_1 = arith.constant 0 : i32
    return %c0_i32, %c0_i32_0 : i32, i32
  }
  func.func @transform_3(%arg0: i32) -> (i32, i32, i32) {
    %c0_i32 = arith.constant 0 : i32
    %c0_i32_0 = arith.constant 0 : i32
    %c0_i32_1 = arith.constant 0 : i32
    %c0_i32_2 = arith.constant 0 : i32
    return %c0_i32, %c0_i32_0, %c0_i32_1 : i32, i32, i32
  }
  func.func @transform_4(%arg0: i32) -> (i32, i32, i32) {
    %c0_i32 = arith.constant 0 : i32
    %c0_i32_0 = arith.constant 0 : i32
    %c0_i32_1 = arith.constant 0 : i32
    %c0_i32_2 = arith.constant 0 : i32
    return %c0_i32, %c0_i32_0, %c0_i32_1 : i32, i32, i32
  }
  func.func @transform_5(%arg0: i32) -> (i32, i32, i32) {
    %c0_i32 = arith.constant 0 : i32
    %c0_i32_0 = arith.constant 0 : i32
    %c0_i32_1 = arith.constant 0 : i32
    %c0_i32_2 = arith.constant 0 : i32
    return %c0_i32, %c0_i32_0, %c0_i32_1 : i32, i32, i32
  }
  func.func @transform_6(%arg0: i32) -> (i32, i32, i32) {
    %c0_i32 = arith.constant 0 : i32
    %c0_i32_0 = arith.constant 0 : i32
    %c0_i32_1 = arith.constant 0 : i32
    %c0_i32_2 = arith.constant 0 : i32
    return %c0_i32, %c0_i32_0, %c0_i32_1 : i32, i32, i32
  }
  func.func @transform_7(%arg0: i32) -> (i32, i32, i32) {
    %c0_i32 = arith.constant 0 : i32
    %c0_i32_0 = arith.constant 0 : i32
    %c0_i32_1 = arith.constant 0 : i32
    %c0_i32_2 = arith.constant 0 : i32
    return %c0_i32, %c0_i32_0, %c0_i32_1 : i32, i32, i32
  }
  func.func @transform_8(%arg0: i32) -> (i32, i32, i32) {
    %c0_i32 = arith.constant 0 : i32
    %c0_i32_0 = arith.constant 0 : i32
    %c0_i32_1 = arith.constant 0 : i32
    %c0_i32_2 = arith.constant 0 : i32
    return %c0_i32, %c0_i32_0, %c0_i32_1 : i32, i32, i32
  }
  func.func @transform_9(%arg0: i32) -> (i32, i32, i32) {
    %c0_i32 = arith.constant 0 : i32
    %c0_i32_0 = arith.constant 0 : i32
    %c0_i32_1 = arith.constant 0 : i32
    %c0_i32_2 = arith.constant 0 : i32
    return %c0_i32, %c0_i32_0, %c0_i32_1 : i32, i32, i32
  }
  func.func @transform_10(%arg0: i32) -> (i32, i32, i32) {
    %c0_i32 = arith.constant 0 : i32
    %c0_i32_0 = arith.constant 0 : i32
    %c0_i32_1 = arith.constant 0 : i32
    %c0_i32_2 = arith.constant 0 : i32
    return %c0_i32, %c0_i32_0, %c0_i32_1 : i32, i32, i32
  }
  func.func @transform_11(%arg0: i32) -> (i32, i32, i32) {
    %c0_i32 = arith.constant 0 : i32
    %c0_i32_0 = arith.constant 0 : i32
    %c0_i32_1 = arith.constant 0 : i32
    %c0_i32_2 = arith.constant 0 : i32
    return %c0_i32, %c0_i32_0, %c0_i32_1 : i32, i32, i32
  }
  func.func @transform_12(%arg0: i32) -> (i32, i32, i32) {
    %c0_i32 = arith.constant 0 : i32
    %c0_i32_0 = arith.constant 0 : i32
    %c0_i32_1 = arith.constant 0 : i32
    %c0_i32_2 = arith.constant 0 : i32
    return %c0_i32, %c0_i32_0, %c0_i32_1 : i32, i32, i32
  }
  func.func @transform_13(%arg0: i32) -> (i32, i32, i32) {
    %c0_i32 = arith.constant 0 : i32
    %c0_i32_0 = arith.constant 0 : i32
    %c0_i32_1 = arith.constant 0 : i32
    %c0_i32_2 = arith.constant 0 : i32
    return %c0_i32, %c0_i32_0, %c0_i32_1 : i32, i32, i32
  }
  func.func @transform_14(%arg0: i32) -> (i32, i32, i32) {
    %c0_i32 = arith.constant 0 : i32
    %c0_i32_0 = arith.constant 0 : i32
    %c0_i32_1 = arith.constant 0 : i32
    %c0_i32_2 = arith.constant 0 : i32
    return %c0_i32, %c0_i32_0, %c0_i32_1 : i32, i32, i32
  }
  func.func @transform_15(%arg0: i32) -> (i32, i32) {
    %c0_i32 = arith.constant 0 : i32
    %c0_i32_0 = arith.constant 0 : i32
    %c0_i32_1 = arith.constant 0 : i32
    return %c0_i32, %c0_i32_0 : i32, i32
  }
  func.func @transform_16(%arg0: i32) -> (i32, i32) {
    %c0_i32 = arith.constant 0 : i32
    %c0_i32_0 = arith.constant 0 : i32
    %c0_i32_1 = arith.constant 0 : i32
    return %c0_i32, %c0_i32_0 : i32, i32
  }
  func.func @transform_17(%arg0: i32) -> (i32, i32) {
    %c0_i32 = arith.constant 0 : i32
    %c0_i32_0 = arith.constant 0 : i32
    %c0_i32_1 = arith.constant 0 : i32
    return %c0_i32, %c0_i32_0 : i32, i32
  }
  func.func @transform_18(%arg0: i32) -> (i32, i32, i32) {
    %c0_i32 = arith.constant 0 : i32
    %c0_i32_0 = arith.constant 0 : i32
    %c0_i32_1 = arith.constant 0 : i32
    %c0_i32_2 = arith.constant 0 : i32
    return %c0_i32, %c0_i32_0, %c0_i32_1 : i32, i32, i32
  }
}

</mosaic_0001>

<llo_original>
// kernel: absorbing_diffusion_forward.1
$region0: #{absorbing_diffusion_forward.1}
  #allocation0 [shape = 'u32[]', space=smem, size = 0x4, offset = 0x4, fixed_abs, tag = 'smem constant byte address 0x4 - core index']
  #allocation1 [shape = 'u32[144,128]{1,0:T(1,128)}', space=vmem, size = 0x12000, scoped, tag = 'internal scratch']
  %s0 = inlined_call_operand.vmem [shape: s32[32,1], index: 0, kind: input, shape index: {}]
  %s1 = inlined_call_operand.vmem [shape: f32[32,32], index: 1, kind: input, shape index: {}]
  %s2 = inlined_call_operand.vmem [shape: f32[16,32], index: 2, kind: input, shape index: {}]
  %s3 = inlined_call_operand.vmem [shape: f32[2,1,32], index: 3, kind: input, shape index: {}]
  %s4 = inlined_call_operand.vmem [shape: f32[2,1,32], index: 4, kind: input, shape index: {}]
  %s5 = inlined_call_operand.vmem [shape: bf16[2,32,96], index: 5, kind: input, shape index: {}]
  %s6 = inlined_call_operand.vmem [shape: f32[2,1,96], index: 6, kind: input, shape index: {}]
  %s7 = inlined_call_operand.vmem [shape: bf16[2,32,32], index: 7, kind: input, shape index: {}]
  %s8 = inlined_call_operand.vmem [shape: f32[2,1,32], index: 8, kind: input, shape index: {}]
  %s9 = inlined_call_operand.vmem [shape: f32[2,1,32], index: 9, kind: input, shape index: {}]
  %s10 = inlined_call_operand.vmem [shape: f32[2,1,32], index: 10, kind: input, shape index: {}]
  %s11 = inlined_call_operand.vmem [shape: bf16[2,32,128], index: 11, kind: input, shape index: {}]
  %s12 = inlined_call_operand.vmem [shape: f32[2,1,128], index: 12, kind: input, shape index: {}]
  %s13 = inlined_call_operand.vmem [shape: bf16[2,128,32], index: 13, kind: input, shape index: {}]
  %s14 = inlined_call_operand.vmem [shape: f32[2,1,32], index: 14, kind: input, shape index: {}]
  %s15 = inlined_call_operand.vmem [shape: f32[1,32], index: 15, kind: input, shape index: {}]
  %s16 = inlined_call_operand.vmem [shape: f32[1,32], index: 16, kind: input, shape index: {}]
  %s17 = inlined_call_operand.vmem [shape: bf16[16,32], index: 17, kind: input, shape index: {}]
  %s18 = inlined_call_operand.hbm [shape: f32[2,16,16], index: 18, kind: output, shape index: {}]
  %s19 = sld [smem:[#allocation0]]
  $region82: #{absorbing_diffusion_forward.1} parent=0
    _
  %s21 = ssub.s32 1, %s19
  %s22 = scalar_select 0, %s21, %s19
  $region1: #{absorbing_diffusion_forward.1} parent=0
    #allocation2 [shape = 'u8[16384]{0}', space=vmem, size = 0x4000, scoped, tag = 'output window, operand 0, single buffered']
    #allocation3 [shape = 's32[1]{0}', space=sflag, size = 0x4, scoped, tag = 'scoped memory for absorbing_diffusion_forward.1']
    %23 = vsyncpa [#allocation3], 0
    // Predicated region
    $region2: #{absorbing_diffusion_forward.1} parent=1 // pred_check
      _
    $region3: #{absorbing_diffusion_forward.1} parent=1 // pred_check_branch
      %25 = sbr.rel (0) target = $region5
    $region4: #{absorbing_diffusion_forward.1} parent=1 // pred_region
      _
    $region5: #{absorbing_diffusion_forward.1} parent=1 // pred_fallthru
      _
    // Predicated region
    $region6: #{absorbing_diffusion_forward.1} parent=1 // pred_check
      _
    $region7: #{absorbing_diffusion_forward.1} parent=1 // pred_check_branch
      %27 = sbr.rel (0) target = $region9
    $region8: #{absorbing_diffusion_forward.1} parent=1 // pred_region
      _
    $region9: #{absorbing_diffusion_forward.1} parent=1 // pred_fallthru
      _
    // Predicated region
    $region10: #{absorbing_diffusion_forward.1} parent=1 // pred_check
      _
    $region11: #{absorbing_diffusion_forward.1} parent=1 // pred_check_branch
      %29 = sbr.rel (0) target = $region13
    $region12: #{absorbing_diffusion_forward.1} parent=1 // pred_region
      _
    $region13: #{absorbing_diffusion_forward.1} parent=1 // pred_fallthru
      _
    // Predicated region
    $region14: #{absorbing_diffusion_forward.1} parent=1 // pred_check
      _
    $region15: #{absorbing_diffusion_forward.1} parent=1 // pred_check_branch
      %31 = sbr.rel (0) target = $region17
    $region16: #{absorbing_diffusion_forward.1} parent=1 // pred_region
      _
    $region17: #{absorbing_diffusion_forward.1} parent=1 // pred_fallthru
      _
    // Predicated region
    $region18: #{absorbing_diffusion_forward.1} parent=1 // pred_check
      _
    $region19: #{absorbing_diffusion_forward.1} parent=1 // pred_check_branch
      %33 = sbr.rel (0) target = $region21
    $region20: #{absorbing_diffusion_forward.1} parent=1 // pred_region
      _
    $region21: #{absorbing_diffusion_forward.1} parent=1 // pred_fallthru
      _
    // Predicated region
    $region22: #{absorbing_diffusion_forward.1} parent=1 // pred_check
      _
    $region23: #{absorbing_diffusion_forward.1} parent=1 // pred_check_branch
      %35 = sbr.rel (0) target = $region25
    $region24: #{absorbing_diffusion_forward.1} parent=1 // pred_region
      _
    $region25: #{absorbing_diffusion_forward.1} parent=1 // pred_fallthru
      _
    // Predicated region
    $region26: #{absorbing_diffusion_forward.1} parent=1 // pred_check
      _
    $region27: #{absorbing_diffusion_forward.1} parent=1 // pred_check_branch
      %37 = sbr.rel (0) target = $region29
    $region28: #{absorbing_diffusion_forward.1} parent=1 // pred_region
      _
    $region29: #{absorbing_diffusion_forward.1} parent=1 // pred_fallthru
      _
    // Predicated region
    $region30: #{absorbing_diffusion_forward.1} parent=1 // pred_check
      _
    $region31: #{absorbing_diffusion_forward.1} parent=1 // pred_check_branch
      %39 = sbr.rel (0) target = $region33
    $region32: #{absorbing_diffusion_forward.1} parent=1 // pred_region
      _
    $region33: #{absorbing_diffusion_forward.1} parent=1 // pred_fallthru
      _
    // Predicated region
    $region34: #{absorbing_diffusion_forward.1} parent=1 // pred_check
      _
    $region35: #{absorbing_diffusion_forward.1} parent=1 // pred_check_branch
      %41 = sbr.rel (0) target = $region37
    $region36: #{absorbing_diffusion_forward.1} parent=1 // pred_region
      _
    $region37: #{absorbing_diffusion_forward.1} parent=1 // pred_fallthru
      _
    // Predicated region
    $region38: #{absorbing_diffusion_forward.1} parent=1 // pred_check
      _
    $region39: #{absorbing_diffusion_forward.1} parent=1 // pred_check_branch
      %43 = sbr.rel (0) target = $region41
    $region40: #{absorbing_diffusion_forward.1} parent=1 // pred_region
      _
    $region41: #{absorbing_diffusion_forward.1} parent=1 // pred_fallthru
      _
    // Predicated region
    $region42: #{absorbing_diffusion_forward.1} parent=1 // pred_check
      _
    $region43: #{absorbing_diffusion_forward.1} parent=1 // pred_check_branch
      %45 = sbr.rel (0) target = $region45
    $region44: #{absorbing_diffusion_forward.1} parent=1 // pred_region
      _
    $region45: #{absorbing_diffusion_forward.1} parent=1 // pred_fallthru
      _
    // Predicated region
    $region46: #{absorbing_diffusion_forward.1} parent=1 // pred_check
      _
    $region47: #{absorbing_diffusion_forward.1} parent=1 // pred_check_branch
      %47 = sbr.rel (0) target = $region49
    $region48: #{absorbing_diffusion_forward.1} parent=1 // pred_region
      _
    $region49: #{absorbing_diffusion_forward.1} parent=1 // pred_fallthru
      _
    // Predicated region
    $region50: #{absorbing_diffusion_forward.1} parent=1 // pred_check
      _
    $region51: #{absorbing_diffusion_forward.1} parent=1 // pred_check_branch
      %49 = sbr.rel (0) target = $region53
    $region52: #{absorbing_diffusion_forward.1} parent=1 // pred_region
      _
    $region53: #{absorbing_diffusion_forward.1} parent=1 // pred_fallthru
      _
    // Predicated region
    $region54: #{absorbing_diffusion_forward.1} parent=1 // pred_check
      _
    $region55: #{absorbing_diffusion_forward.1} parent=1 // pred_check_branch
      %51 = sbr.rel (0) target = $region57
    $region56: #{absorbing_diffusion_forward.1} parent=1 // pred_region
      _
    $region57: #{absorbing_diffusion_forward.1} parent=1 // pred_fallthru
      _
    // Predicated region
    $region58: #{absorbing_diffusion_forward.1} parent=1 // pred_check
      _
    $region59: #{absorbing_diffusion_forward.1} parent=1 // pred_check_branch
      %53 = sbr.rel (0) target = $region61
    $region60: #{absorbing_diffusion_forward.1} parent=1 // pred_region
      _
    $region61: #{absorbing_diffusion_forward.1} parent=1 // pred_fallthru
      _
    // Predicated region
    $region62: #{absorbing_diffusion_forward.1} parent=1 // pred_check
      _
    $region63: #{absorbing_diffusion_forward.1} parent=1 // pred_check_branch
      %55 = sbr.rel (0) target = $region65
    $region64: #{absorbing_diffusion_forward.1} parent=1 // pred_region
      _
    $region65: #{absorbing_diffusion_forward.1} parent=1 // pred_fallthru
      _
    // Predicated region
    $region66: #{absorbing_diffusion_forward.1} parent=1 // pred_check
      _
    $region67: #{absorbing_diffusion_forward.1} parent=1 // pred_check_branch
      %57 = sbr.rel (0) target = $region69
    $region68: #{absorbing_diffusion_forward.1} parent=1 // pred_region
      _
    $region69: #{absorbing_diffusion_forward.1} parent=1 // pred_fallthru
      _
    // Predicated region
    $region70: #{absorbing_diffusion_forward.1} parent=1 // pred_check
      _
    $region71: #{absorbing_diffusion_forward.1} parent=1 // pred_check_branch
      %59 = sbr.rel (0) target = $region73
    $region72: #{absorbing_diffusion_forward.1} parent=1 // pred_region
      _
    $region73: #{absorbing_diffusion_forward.1} parent=1 // pred_fallthru
      _
    %v61 = vld [vmem:[%s0] sm:$0xff]
    %v62 = vld [vmem:[%s0 + $0x8] sm:$0xff]
    %v63 = vld [vmem:[%s0 + $0x10] sm:$0xff]
    %v64 = vld [vmem:[%s0 + $0x18] sm:$0xff]
    %v65 = vlaneseq
    %v66 = vand.u32 %v65, 127
    %67 = vset.pattern.permute.xlu0 0
    %68 = vperm.xlu0 %67, %v61
    %v69 = vpop.permute.xlu0 %68
    %70 = vset.pattern.permute.xlu0 0
    %71 = vperm.xlu0 %70, %v62
    %v72 = vpop.permute.xlu0 %71
    %73 = vset.pattern.permute.xlu0 0
    %74 = vperm.xlu0 %73, %v63
    %v75 = vpop.permute.xlu0 %74
    %76 = vset.pattern.permute.xlu0 0
    %77 = vperm.xlu0 %76, %v64
    %v78 = vpop.permute.xlu0 %77
    %vm79 = vcmp.eq.s32.totalorder %v69, %v66
    %vm80 = vcmp.eq.s32.totalorder %v72, %v66
    %vm81 = vcmp.eq.s32.totalorder %v75, %v66
    %vm82 = vcmp.eq.s32.totalorder %v78, %v66
    %v83 = vsel %vm79, 1, 0
    %v84 = vsel %vm80, 1, 0
    %v85 = vsel %vm81, 1, 0
    %v86 = vsel %vm82, 1, 0
    %v87 = vcvt.s32.f32 %v83
    %v88 = vcvt.s32.f32 %v84
    %v89 = vcvt.s32.f32 %v85
    %v90 = vcvt.s32.f32 %v86
    %v91 = vld [vmem:[%s1] sm:$0xff]
    %v92 = vld [vmem:[%s1 + $0x8] sm:$0xff]
    %v93 = vld [vmem:[%s1 + $0x10] sm:$0xff]
    %v94 = vld [vmem:[%s1 + $0x18] sm:$0xff]
    %v95 = vld [vmem:[%s2] sm:$0xff]
    %v96 = vld [vmem:[%s2 + $0x8] sm:$0xff]
    %vm97 = vcmask 261120
    %v99 = vsel %vm97, %v87, 0
    %v102 = vsel %vm97, %v88, 0
    %v105 = vsel %vm97, %v89, 0
    %v108 = vsel %vm97, %v90, 0
    %110 = vmatprep.subr.mxu0 0.0
    %111 = vmatpush1.msra.mxu0 %v91
    %112 = vmatprep.subr.mxu0 0.0
    %113 = vmatpush1.msra.mxu0 %v92
    %114 = vmatprep.subr.mxu0 0.0
    %115 = vmatpush1.msra.mxu0 %v93
    %116 = vmatprep.subr.mxu0 0.0
    %117 = vmatpush1.msra.mxu0 %v94
    %118 = vmatprep.subr.mxu0 0.0
    %119 = vmatpush1.msra.mxu0 0.0
    %120 = vmatprep.subr.mxu0 0.0
    %121 = vmatpush1.msra.mxu0 0.0
    %122 = vmatprep.subr.mxu0 0.0
    %123 = vmatpush1.msra.mxu0 0.0
    %124 = vmatprep.subr.mxu0 0.0
    %125 = vmatpush1.msra.mxu0 0.0
    %126 = vmatprep.subr.mxu0 0.0
    %127 = vmatpush1.msra.mxu0 0.0
    %128 = vmatprep.subr.mxu0 0.0
    %129 = vmatpush1.msra.mxu0 0.0
    %130 = vmatprep.subr.mxu0 0.0
    %131 = vmatpush1.msra.mxu0 0.0
    %132 = vmatprep.subr.mxu0 0.0
    %133 = vmatpush1.msra.mxu0 0.0
    %134 = vmatprep.subr.mxu0 0.0
    %135 = vmatpush1.msra.mxu0 0.0
    %136 = vmatprep.subr.mxu0 0.0
    %137 = vmatpush1.msra.mxu0 0.0
    %138 = vmatprep.subr.mxu0 0.0
    %139 = vmatpush1.msra.mxu0 0.0
    %140 = vmatprep.subr.mxu0 0.0
    %141 = vmatpush1.msra.mxu0 0.0
    %142 = vmatprep.subr.mxu0 0.0
    %143 = vmatpush1.msra.mxu0 0.0
    %144 = vmatprep.subr.mxu0 0.0
    %145 = vmatpush1.msra.mxu0 0.0
    %146 = vmatprep.subr.mxu0 0.0
    %147 = vmatpush1.msra.mxu0 0.0
    %148 = vmatprep.subr.mxu0 0.0
    %149 = vmatpush1.msra.mxu0 0.0
    %150 = vmatprep.subr.mxu0 0.0
    %151 = vmatpush1.msra.mxu0 0.0
    %152 = vmatprep.subr.mxu0 0.0
    %153 = vmatpush1.msra.mxu0 0.0
    %154 = vmatprep.subr.mxu0 0.0
    %155 = vmatpush1.msra.mxu0 0.0
    %156 = vmatprep.subr.mxu0 0.0
    %157 = vmatpush1.msra.mxu0 0.0
    %158 = vmatprep.subr.mxu0 0.0
    %159 = vmatpush1.msra.mxu0 0.0
    %160 = vmatprep.subr.mxu0 0.0
    %161 = vmatpush1.msra.mxu0 0.0
    %162 = vmatprep.subr.mxu0 0.0
    %163 = vmatpush1.msra.mxu0 0.0
    %164 = vmatprep.subr.mxu0 0.0
    %165 = vmatpush1.msra.mxu0 0.0
    %166 = vmatprep.subr.mxu0 0.0
    %167 = vmatpush1.msra.mxu0 0.0
    %168 = vmatprep.subr.mxu0 0.0
    %169 = vmatpush1.msra.mxu0 0.0
    %170 = vmatprep.subr.mxu0 0.0
    %171 = vmatpush1.msra.mxu0 0.0
    %172 = vmatprep.subr.mxu0 0.0
    %173 = vmatpush1.msra.mxu0 0.0
    %174 = vmatprep.mubr.f32.mxu0 0.0
    %175 = vmatmul.mubr.f32.gmra.mrb[0].mxu0 %v99
    %v176 = vpop.f32.mrb[0].mxu0
    %v177 = vadd.f32 %v95, %v176
    %v178 = vpop.f32.mrb[0].mxu0
    %179 = vmatprep.mubr.f32.mxu0 0.0
    %180 = vmatmul.mubr.f32.gmra.mrb[0].mxu0 %v102
    %v181 = vpop.f32.mrb[0].mxu0
    %v182 = vadd.f32 %v96, %v181
    %v183 = vpop.f32.mrb[0].mxu0
    %184 = vmatprep.mubr.f32.mxu0 0.0
    %185 = vmatmul.mubr.f32.gmra.mrb[0].mxu0 %v105
    %v186 = vpop.f32.mrb[0].mxu0
    %v187 = vadd.f32 %v95, %v186
    %v188 = vpop.f32.mrb[0].mxu0
    %189 = vmatprep.mubr.f32.mxu0 0.0
    %190 = vmatmul.mubr.f32.gmra.mrb[0].mxu0 %v108
    %v191 = vpop.f32.mrb[0].mxu0
    %v192 = vadd.f32 %v96, %v191
    %v193 = vpop.f32.mrb[0].mxu0
    %194 = vdwg.mxu0
    %v195 = vld [vmem:[%s3] sm:$0x1]
    %v196 = vld [vmem:[%s4] sm:$0x1]
    %v197 = vsel %vm97, %v177, 0.0
    %198 = vadd.xlane.f32.xlu0 %v197
    %v199 = vpop.xlane.xlu0 %198
    %v200 = vsel %vm97, %v182, 0.0
    %201 = vadd.xlane.f32.xlu0 %v200
    %v202 = vpop.xlane.xlu0 %201
    %v203 = vsel %vm97, %v187, 0.0
    %204 = vadd.xlane.f32.xlu0 %v203
    %v205 = vpop.xlane.xlu0 %204
    %v206 = vsel %vm97, %v192, 0.0
    %207 = vadd.xlane.f32.xlu0 %v206
    %v208 = vpop.xlane.xlu0 %207
    %v209 = vrcp.pop 32.0
    %v210 = vmul.f32 %v199, %v209
    %v211 = vmul.f32 %v202, %v209
    %v212 = vmul.f32 %v205, %v209
    %v213 = vmul.f32 %v208, %v209
    %v214 = vsub.f32 %v177, %v210
    %v215 = vsub.f32 %v182, %v211
    %v216 = vsub.f32 %v187, %v212
    %v217 = vsub.f32 %v192, %v213
    %v218 = vmul.f32 %v214, %v214
    %v219 = vmul.f32 %v215, %v215
    %v220 = vmul.f32 %v216, %v216
    %v221 = vmul.f32 %v217, %v217
    %v222 = vsel %vm97, %v218, 0.0
    %223 = vadd.xlane.f32.xlu0 %v222
    %v224 = vpop.xlane.xlu0 %223
    %v225 = vsel %vm97, %v219, 0.0
    %226 = vadd.xlane.f32.xlu0 %v225
    %v227 = vpop.xlane.xlu0 %226
    %v228 = vsel %vm97, %v220, 0.0
    %229 = vadd.xlane.f32.xlu0 %v228
    %v230 = vpop.xlane.xlu0 %229
    %v231 = vsel %vm97, %v221, 0.0
    %232 = vadd.xlane.f32.xlu0 %v231
    %v233 = vpop.xlane.xlu0 %232
    %v234 = vmul.f32 %v224, %v209
    %v235 = vmul.f32 %v227, %v209
    %v236 = vmul.f32 %v230, %v209
    %v237 = vmul.f32 %v233, %v209
    %v238 = vadd.f32 %v234, 1e-05
    %v239 = vadd.f32 %v235, 1e-05
    %v240 = vadd.f32 %v236, 1e-05
    %v241 = vadd.f32 %v237, 1e-05
    %v242 = vrsqrt.pop %v238
    %v243 = vrsqrt.pop %v239
    %v244 = vrsqrt.pop %v240
    %v245 = vrsqrt.pop %v241
    %v246 = vmul.f32 %v214, %v242
    %v247 = vmul.f32 %v215, %v243
    %v248 = vmul.f32 %v216, %v244
    %v249 = vmul.f32 %v217, %v245
    %v251 = vlaneseq
    %v252 = vshrl.u32 %v251, 7
    %v253 = vsub.s32 0, %v252
    %v254 = vrot.slane %v195, %v253
    %v256 = vmul.f32 %v246, %v254
    %v257 = vmul.f32 %v247, %v254
    %v258 = vmul.f32 %v248, %v254
    %v259 = vmul.f32 %v249, %v254
    %v261 = vlaneseq
    %v262 = vshrl.u32 %v261, 7
    %v263 = vsub.s32 0, %v262
    %v264 = vrot.slane %v196, %v263
    %v266 = vadd.f32 %v256, %v264
    %v267 = vadd.f32 %v257, %v264
    %v268 = vadd.f32 %v258, %v264
    %v269 = vadd.f32 %v259, %v264
    %v270 = vpack.c.bf16 %v267, %v266
    %v271 = vpack.c.bf16 %v269, %v268
    %v272 = vld [vmem:[%s5] sm:$0xf]
    %v273 = vld [vmem:[%s5 + $0x4] sm:$0xf]
    %v274 = vld [vmem:[%s5 + $0x8] sm:$0xf]
    %v275 = vld [vmem:[%s5 + $0xc] sm:$0xf]
    %v276 = vld [vmem:[%s6] sm:$0x1]
    %v278 = vlaneseq
    %v279 = vshrl.u32 %v278, 7
    %v280 = vsub.s32 0, %v279
    %v281 = vrot.slane %v276, %v280
    %v287 = vunpack.c.l.b16 %v272
    %v288 = vunpack.c.l.b16 %v273
    %v289 = vunpack.c.l.b16 %v274
    %v290 = vunpack.c.l.b16 %v275
    %v291 = vpack.c.b16 %v288, %v287
    %v292 = vpack.c.b16 %v290, %v289
    %v296 = vsel %vm97, %v270, 0
    %v299 = vsel %vm97, %v271, 0
    %301 = vmatprep.subr.bf16.mxu0 0
    %302 = vmatpush1.bf16.msra.mxu0 %v291
    %303 = vmatprep.subr.bf16.mxu0 0
    %304 = vmatpush1.bf16.msra.mxu0 %v292
    %305 = vmatprep.subr.bf16.mxu0 0
    %306 = vmatpush1.bf16.msra.mxu0 0
    %307 = vmatprep.subr.bf16.mxu0 0
    %308 = vmatpush1.bf16.msra.mxu0 0
    %309 = vmatprep.subr.bf16.mxu0 0
    %310 = vmatpush1.bf16.msra.mxu0 0
    %311 = vmatprep.subr.bf16.mxu0 0
    %312 = vmatpush1.bf16.msra.mxu0 0
    %313 = vmatprep.subr.bf16.mxu0 0
    %314 = vmatpush1.bf16.msra.mxu0 0
    %315 = vmatprep.subr.bf16.mxu0 0
    %316 = vmatpush1.bf16.msra.mxu0 0
    %317 = vmatprep.subr.bf16.mxu0 0
    %318 = vmatpush1.bf16.msra.mxu0 0
    %319 = vmatprep.subr.bf16.mxu0 0
    %320 = vmatpush1.bf16.msra.mxu0 0
    %321 = vmatprep.subr.bf16.mxu0 0
    %322 = vmatpush1.bf16.msra.mxu0 0
    %323 = vmatprep.subr.bf16.mxu0 0
    %324 = vmatpush1.bf16.msra.mxu0 0
    %325 = vmatprep.subr.bf16.mxu0 0
    %326 = vmatpush1.bf16.msra.mxu0 0
    %327 = vmatprep.subr.bf16.mxu0 0
    %328 = vmatpush1.bf16.msra.mxu0 0
    %329 = vmatprep.subr.bf16.mxu0 0
    %330 = vmatpush1.bf16.msra.mxu0 0
    %331 = vmatprep.subr.bf16.mxu0 0
    %332 = vmatpush1.bf16.msra.mxu0 0
    %333 = vmatprep.mubr.bf16.mxu0 0
    %334 = vmatmul.mubr.bf16.gmra.mrb[0].mxu0 %v296
    %v335 = vpop.f32.mrb[0].mxu0
    %v336 = vadd.f32 %v281, %v335
    %v337 = vpop.f32.mrb[0].mxu0
    %v338 = vpop.f32.mrb[0].mxu0
    %v339 = vadd.f32 %v281, %v338
    %v340 = vpop.f32.mrb[0].mxu0
    %341 = vmatprep.mubr.bf16.mxu0 0
    %342 = vmatmul.mubr.bf16.gmra.mrb[0].mxu0 %v299
    %v343 = vpop.f32.mrb[0].mxu0
    %v344 = vadd.f32 %v281, %v343
    %v345 = vpop.f32.mrb[0].mxu0
    %v346 = vpop.f32.mrb[0].mxu0
    %v347 = vadd.f32 %v281, %v346
    %v348 = vpop.f32.mrb[0].mxu0
    %349 = vdwg.mxu0
    %352 = vrot.lane.b32.xlu0 %v336, 96
    %v353 = vpop.permute.xlu0 %352
    %354 = vrot.lane.b32.xlu0 %v339, 96
    %v355 = vpop.permute.xlu0 %354
    %vm356 = vcmask 64512
    %v357 = vsel %vm356, %v336, 0
    %v359 = vsel %vm356, %v339, 0
    %v361 = vsel %vm356, %v353, 0
    %v363 = vsel %vm356, %v355, 0
    %365 = vmatprep.subr.mxu0 0.0
    %366 = vmatpush1.xpose.msra.mxu0 %v361
    %367 = vmatprep.subr.mxu0 0.0
    %368 = vmatpush1.xpose.msra.mxu0 %v363
    %369 = vmatprep.subr.mxu0 0.0
    %370 = vmatpush1.xpose.msra.mxu0 0.0
    %371 = vmatprep.subr.mxu0 0.0
    %372 = vmatpush1.xpose.msra.mxu0 0.0
    %373 = vmatprep.subr.mxu0 0.0
    %374 = vmatpush1.xpose.msra.mxu0 0.0
    %375 = vmatprep.subr.mxu0 0.0
    %376 = vmatpush1.xpose.msra.mxu0 0.0
    %377 = vmatprep.subr.mxu0 0.0
    %378 = vmatpush1.xpose.msra.mxu0 0.0
    %379 = vmatprep.subr.mxu0 0.0
    %380 = vmatpush1.xpose.msra.mxu0 0.0
    %381 = vmatprep.subr.mxu0 0.0
    %382 = vmatpush1.xpose.msra.mxu0 0.0
    %383 = vmatprep.subr.mxu0 0.0
    %384 = vmatpush1.xpose.msra.mxu0 0.0
    %385 = vmatprep.subr.mxu0 0.0
    %386 = vmatpush1.xpose.msra.mxu0 0.0
    %387 = vmatprep.subr.mxu0 0.0
    %388 = vmatpush1.xpose.msra.mxu0 0.0
    %389 = vmatprep.subr.mxu0 0.0
    %390 = vmatpush1.xpose.msra.mxu0 0.0
    %391 = vmatprep.subr.mxu0 0.0
    %392 = vmatpush1.xpose.msra.mxu0 0.0
    %393 = vmatprep.subr.mxu0 0.0
    %394 = vmatpush1.xpose.msra.mxu0 0.0
    %395 = vmatprep.subr.mxu0 0.0
    %396 = vmatpush1.xpose.msra.mxu0 0.0
    %397 = vmatprep.subr.mxu0 0.0
    %398 = vmatpush1.xpose.msra.mxu0 0.0
    %399 = vmatprep.subr.mxu0 0.0
    %400 = vmatpush1.xpose.msra.mxu0 0.0
    %401 = vmatprep.subr.mxu0 0.0
    %402 = vmatpush1.xpose.msra.mxu0 0.0
    %403 = vmatprep.subr.mxu0 0.0
    %404 = vmatpush1.xpose.msra.mxu0 0.0
    %405 = vmatprep.subr.mxu0 0.0
    %406 = vmatpush1.xpose.msra.mxu0 0.0
    %407 = vmatprep.subr.mxu0 0.0
    %408 = vmatpush1.xpose.msra.mxu0 0.0
    %409 = vmatprep.subr.mxu0 0.0
    %410 = vmatpush1.xpose.msra.mxu0 0.0
    %411 = vmatprep.subr.mxu0 0.0
    %412 = vmatpush1.xpose.msra.mxu0 0.0
    %413 = vmatprep.subr.mxu0 0.0
    %414 = vmatpush1.xpose.msra.mxu0 0.0
    %415 = vmatprep.subr.mxu0 0.0
    %416 = vmatpush1.xpose.msra.mxu0 0.0
    %417 = vmatprep.subr.mxu0 0.0
    %418 = vmatpush1.xpose.msra.mxu0 0.0
    %419 = vmatprep.subr.mxu0 0.0
    %420 = vmatpush1.xpose.msra.mxu0 0.0
    %421 = vmatprep.subr.mxu0 0.0
    %422 = vmatpush1.xpose.msra.mxu0 0.0
    %423 = vmatprep.subr.mxu0 0.0
    %424 = vmatpush1.xpose.msra.mxu0 0.0
    %425 = vmatprep.subr.mxu0 0.0
    %426 = vmatpush1.xpose.msra.mxu0 0.0
    %427 = vmatprep.subr.mxu0 0.0
    %428 = vmatpush1.xpose.msra.mxu0 0.0
    %429 = vmatprep.mubr.f32.mxu0 0.0
    %430 = vmatmul.mubr.f32.gmra.mrb[0].mxu0 %v357
    %v431 = vpop.f32.mrb[0].mxu0
    %v432 = vadd.f32 0.0, %v431
    %v433 = vpop.f32.mrb[0].mxu0
    %434 = vmatprep.mubr.f32.mxu0 0.0
    %435 = vmatmul.mubr.f32.gmra.mrb[0].mxu0 %v359
    %v436 = vpop.f32.mrb[0].mxu0
    %v437 = vadd.f32 0.0, %v436
    %v438 = vpop.f32.mrb[0].mxu0
    %439 = vdwg.mxu0
    %v440 = vmul.f32 %v432, 0.35355338
    %v441 = vmul.f32 %v437, 0.35355338
    %vm442 = vcmask 130048
    %v443 = vsel %vm442, %v440, -inf
    %444 = vmax.xlane.f32.xlu0 %v443
    %v445 = vpop.xlane.xlu0 %444
    %v446 = vsel %vm442, %v441, -inf
    %447 = vmax.xlane.f32.xlu0 %v446
    %v448 = vpop.xlane.xlu0 %447
    %v449 = vsub.f32 %v440, %v445
    %v450 = vsub.f32 %v441, %v448
    %v451 = vmul.f32 %v449, 1.442695
    %v452 = vpow.pop %v451
    %v453 = vmul.f32 %v450, 1.442695
    %v454 = vpow.pop %v453
    %v455 = vsel %vm442, %v452, 0.0
    %456 = vadd.xlane.f32.xlu0 %v455
    %v457 = vpop.xlane.xlu0 %456
    %v458 = vsel %vm442, %v454, 0.0
    %459 = vadd.xlane.f32.xlu0 %v458
    %v460 = vpop.xlane.xlu0 %459
    %v461 = vrcp.pop %v457
    %v462 = vrcp.pop %v460
    %v463 = vmul.f32 %v452, %v461
    %v464 = vmul.f32 %v454, %v462
    %465 = vrot.lane.b32.xlu0 %v336, 64
    %v466 = vpop.permute.xlu0 %465
    %467 = vrot.lane.b32.xlu0 %v339, 64
    %v468 = vpop.permute.xlu0 %467
    %v472 = vsel %vm442, %v463, 0
    %v475 = vsel %vm442, %v464, 0
    %477 = vmatprep.subr.mxu0 0.0
    %478 = vmatpush1.msra.mxu0 %v466
    %479 = vmatprep.subr.mxu0 0.0
    %480 = vmatpush1.msra.mxu0 %v468
    %481 = vmatprep.subr.mxu0 0.0
    %482 = vmatpush1.msra.mxu0 0.0
    %483 = vmatprep.subr.mxu0 0.0
    %484 = vmatpush1.msra.mxu0 0.0
    %485 = vmatprep.subr.mxu0 0.0
    %486 = vmatpush1.msra.mxu0 0.0
    %487 = vmatprep.subr.mxu0 0.0
    %488 = vmatpush1.msra.mxu0 0.0
    %489 = vmatprep.subr.mxu0 0.0
    %490 = vmatpush1.msra.mxu0 0.0
    %491 = vmatprep.subr.mxu0 0.0
    %492 = vmatpush1.msra.mxu0 0.0
    %493 = vmatprep.subr.mxu0 0.0
    %494 = vmatpush1.msra.mxu0 0.0
    %495 = vmatprep.subr.mxu0 0.0
    %496 = vmatpush1.msra.mxu0 0.0
    %497 = vmatprep.subr.mxu0 0.0
    %498 = vmatpush1.msra.mxu0 0.0
    %499 = vmatprep.subr.mxu0 0.0
    %500 = vmatpush1.msra.mxu0 0.0
    %501 = vmatprep.subr.mxu0 0.0
    %502 = vmatpush1.msra.mxu0 0.0
    %503 = vmatprep.subr.mxu0 0.0
    %504 = vmatpush1.msra.mxu0 0.0
    %505 = vmatprep.subr.mxu0 0.0
    %506 = vmatpush1.msra.mxu0 0.0
    %507 = vmatprep.subr.mxu0 0.0
    %508 = vmatpush1.msra.mxu0 0.0
    %509 = vmatprep.subr.mxu0 0.0
    %510 = vmatpush1.msra.mxu0 0.0
    %511 = vmatprep.subr.mxu0 0.0
    %512 = vmatpush1.msra.mxu0 0.0
    %513 = vmatprep.subr.mxu0 0.0
    %514 = vmatpush1.msra.mxu0 0.0
    %515 = vmatprep.subr.mxu0 0.0
    %516 = vmatpush1.msra.mxu0 0.0
    %517 = vmatprep.subr.mxu0 0.0
    %518 = vmatpush1.msra.mxu0 0.0
    %519 = vmatprep.subr.mxu0 0.0
    %520 = vmatpush1.msra.mxu0 0.0
    %521 = vmatprep.subr.mxu0 0.0
    %522 = vmatpush1.msra.mxu0 0.0
    %523 = vmatprep.subr.mxu0 0.0
    %524 = vmatpush1.msra.mxu0 0.0
    %525 = vmatprep.subr.mxu0 0.0
    %526 = vmatpush1.msra.mxu0 0.0
    %527 = vmatprep.subr.mxu0 0.0
    %528 = vmatpush1.msra.mxu0 0.0
    %529 = vmatprep.subr.mxu0 0.0
    %530 = vmatpush1.msra.mxu0 0.0
    %531 = vmatprep.subr.mxu0 0.0
    %532 = vmatpush1.msra.mxu0 0.0
    %533 = vmatprep.subr.mxu0 0.0
    %534 = vmatpush1.msra.mxu0 0.0
    %535 = vmatprep.subr.mxu0 0.0
    %536 = vmatpush1.msra.mxu0 0.0
    %537 = vmatprep.subr.mxu0 0.0
    %538 = vmatpush1.msra.mxu0 0.0
    %539 = vmatprep.subr.mxu0 0.0
    %540 = vmatpush1.msra.mxu0 0.0
    %541 = vmatprep.mubr.f32.mxu0 0.0
    %542 = vmatmul.mubr.f32.gmra.mrb[0].mxu0 %v472
    %v543 = vpop.f32.mrb[0].mxu0
    %v544 = vadd.f32 0.0, %v543
    %v545 = vpop.f32.mrb[0].mxu0
    %546 = vmatprep.mubr.f32.mxu0 0.0
    %547 = vmatmul.mubr.f32.gmra.mrb[0].mxu0 %v475
    %v548 = vpop.f32.mrb[0].mxu0
    %v549 = vadd.f32 0.0, %v548
    %v550 = vpop.f32.mrb[0].mxu0
    %551 = vdwg.mxu0
    %552 = vrot.lane.b32.xlu0 %v336, 120
    %v553 = vpop.permute.xlu0 %552
    %554 = vrot.lane.b32.xlu0 %v339, 120
    %v555 = vpop.permute.xlu0 %554
    %556 = vrot.lane.b32.xlu0 %v336, 88
    %v557 = vpop.permute.xlu0 %556
    %558 = vrot.lane.b32.xlu0 %v339, 88
    %v559 = vpop.permute.xlu0 %558
    %v560 = vsel %vm356, %v553, 0
    %v562 = vsel %vm356, %v555, 0
    %v564 = vsel %vm356, %v557, 0
    %v566 = vsel %vm356, %v559, 0
    %568 = vmatprep.subr.mxu0 0.0
    %569 = vmatpush1.xpose.msra.mxu0 %v564
    %570 = vmatprep.subr.mxu0 0.0
    %571 = vmatpush1.xpose.msra.mxu0 %v566
    %572 = vmatprep.subr.mxu0 0.0
    %573 = vmatpush1.xpose.msra.mxu0 0.0
    %574 = vmatprep.subr.mxu0 0.0
    %575 = vmatpush1.xpose.msra.mxu0 0.0
    %576 = vmatprep.subr.mxu0 0.0
    %577 = vmatpush1.xpose.msra.mxu0 0.0
    %578 = vmatprep.subr.mxu0 0.0
    %579 = vmatpush1.xpose.msra.mxu0 0.0
    %580 = vmatprep.subr.mxu0 0.0
    %581 = vmatpush1.xpose.msra.mxu0 0.0
    %582 = vmatprep.subr.mxu0 0.0
    %583 = vmatpush1.xpose.msra.mxu0 0.0
    %584 = vmatprep.subr.mxu0 0.0
    %585 = vmatpush1.xpose.msra.mxu0 0.0
    %586 = vmatprep.subr.mxu0 0.0
    %587 = vmatpush1.xpose.msra.mxu0 0.0
    %588 = vmatprep.subr.mxu0 0.0
    %589 = vmatpush1.xpose.msra.mxu0 0.0
    %590 = vmatprep.subr.mxu0 0.0
    %591 = vmatpush1.xpose.msra.mxu0 0.0
    %592 = vmatprep.subr.mxu0 0.0
    %593 = vmatpush1.xpose.msra.mxu0 0.0
    %594 = vmatprep.subr.mxu0 0.0
    %595 = vmatpush1.xpose.msra.mxu0 0.0
    %596 = vmatprep.subr.mxu0 0.0
    %597 = vmatpush1.xpose.msra.mxu0 0.0
    %598 = vmatprep.subr.mxu0 0.0
    %599 = vmatpush1.xpose.msra.mxu0 0.0
    %600 = vmatprep.subr.mxu0 0.0
    %601 = vmatpush1.xpose.msra.mxu0 0.0
    %602 = vmatprep.subr.mxu0 0.0
    %603 = vmatpush1.xpose.msra.mxu0 0.0
    %604 = vmatprep.subr.mxu0 0.0
    %605 = vmatpush1.xpose.msra.mxu0 0.0
    %606 = vmatprep.subr.mxu0 0.0
    %607 = vmatpush1.xpose.msra.mxu0 0.0
    %608 = vmatprep.subr.mxu0 0.0
    %609 = vmatpush1.xpose.msra.mxu0 0.0
    %610 = vmatprep.subr.mxu0 0.0
    %611 = vmatpush1.xpose.msra.mxu0 0.0
    %612 = vmatprep.subr.mxu0 0.0
    %613 = vmatpush1.xpose.msra.mxu0 0.0
    %614 = vmatprep.subr.mxu0 0.0
    %615 = vmatpush1.xpose.msra.mxu0 0.0
    %616 = vmatprep.subr.mxu0 0.0
    %617 = vmatpush1.xpose.msra.mxu0 0.0
    %618 = vmatprep.subr.mxu0 0.0
    %619 = vmatpush1.xpose.msra.mxu0 0.0
    %620 = vmatprep.subr.mxu0 0.0
    %621 = vmatpush1.xpose.msra.mxu0 0.0
    %622 = vmatprep.subr.mxu0 0.0
    %623 = vmatpush1.xpose.msra.mxu0 0.0
    %624 = vmatprep.subr.mxu0 0.0
    %625 = vmatpush1.xpose.msra.mxu0 0.0
    %626 = vmatprep.subr.mxu0 0.0
    %627 = vmatpush1.xpose.msra.mxu0 0.0
    %628 = vmatprep.subr.mxu0 0.0
    %629 = vmatpush1.xpose.msra.mxu0 0.0
    %630 = vmatprep.subr.mxu0 0.0
    %631 = vmatpush1.xpose.msra.mxu0 0.0
    %632 = vmatprep.mubr.f32.mxu0 0.0
    %633 = vmatmul.mubr.f32.gmra.mrb[0].mxu0 %v560
    %v634 = vpop.f32.mrb[0].mxu0
    %v635 = vadd.f32 0.0, %v634
    %v636 = vpop.f32.mrb[0].mxu0
    %637 = vmatprep.mubr.f32.mxu0 0.0
    %638 = vmatmul.mubr.f32.gmra.mrb[0].mxu0 %v562
    %v639 = vpop.f32.mrb[0].mxu0
    %v640 = vadd.f32 0.0, %v639
    %v641 = vpop.f32.mrb[0].mxu0
    %642 = vdwg.mxu0
    %v643 = vmul.f32 %v635, 0.35355338
    %v644 = vmul.f32 %v640, 0.35355338
    %v645 = vsel %vm442, %v643, -inf
    %646 = vmax.xlane.f32.xlu0 %v645
    %v647 = vpop.xlane.xlu0 %646
    %v648 = vsel %vm442, %v644, -inf
    %649 = vmax.xlane.f32.xlu0 %v648
    %v650 = vpop.xlane.xlu0 %649
    %v651 = vsub.f32 %v643, %v647
    %v652 = vsub.f32 %v644, %v650
    %v653 = vmul.f32 %v651, 1.442695
    %v654 = vpow.pop %v653
    %v655 = vmul.f32 %v652, 1.442695
    %v656 = vpow.pop %v655
    %v657 = vsel %vm442, %v654, 0.0
    %658 = vadd.xlane.f32.xlu0 %v657
    %v659 = vpop.xlane.xlu0 %658
    %v660 = vsel %vm442, %v656, 0.0
    %661 = vadd.xlane.f32.xlu0 %v660
    %v662 = vpop.xlane.xlu0 %661
    %v663 = vrcp.pop %v659
    %v664 = vrcp.pop %v662
    %v665 = vmul.f32 %v654, %v663
    %v666 = vmul.f32 %v656, %v664
    %667 = vrot.lane.b32.xlu0 %v336, 56
    %v668 = vpop.permute.xlu0 %667
    %669 = vrot.lane.b32.xlu0 %v339, 56
    %v670 = vpop.permute.xlu0 %669
    %v674 = vsel %vm442, %v665, 0
    %v677 = vsel %vm442, %v666, 0
    %679 = vmatprep.subr.mxu0 0.0
    %680 = vmatpush1.msra.mxu0 %v668
    %681 = vmatprep.subr.mxu0 0.0
    %682 = vmatpush1.msra.mxu0 %v670
    %683 = vmatprep.subr.mxu0 0.0
    %684 = vmatpush1.msra.mxu0 0.0
    %685 = vmatprep.subr.mxu0 0.0
    %686 = vmatpush1.msra.mxu0 0.0
    %687 = vmatprep.subr.mxu0 0.0
    %688 = vmatpush1.msra.mxu0 0.0
    %689 = vmatprep.subr.mxu0 0.0
    %690 = vmatpush1.msra.mxu0 0.0
    %691 = vmatprep.subr.mxu0 0.0
    %692 = vmatpush1.msra.mxu0 0.0
    %693 = vmatprep.subr.mxu0 0.0
    %694 = vmatpush1.msra.mxu0 0.0
    %695 = vmatprep.subr.mxu0 0.0
    %696 = vmatpush1.msra.mxu0 0.0
    %697 = vmatprep.subr.mxu0 0.0
    %698 = vmatpush1.msra.mxu0 0.0
    %699 = vmatprep.subr.mxu0 0.0
    %700 = vmatpush1.msra.mxu0 0.0
    %701 = vmatprep.subr.mxu0 0.0
    %702 = vmatpush1.msra.mxu0 0.0
    %703 = vmatprep.subr.mxu0 0.0
    %704 = vmatpush1.msra.mxu0 0.0
    %705 = vmatprep.subr.mxu0 0.0
    %706 = vmatpush1.msra.mxu0 0.0
    %707 = vmatprep.subr.mxu0 0.0
    %708 = vmatpush1.msra.mxu0 0.0
    %709 = vmatprep.subr.mxu0 0.0
    %710 = vmatpush1.msra.mxu0 0.0
    %711 = vmatprep.subr.mxu0 0.0
    %712 = vmatpush1.msra.mxu0 0.0
    %713 = vmatprep.subr.mxu0 0.0
    %714 = vmatpush1.msra.mxu0 0.0
    %715 = vmatprep.subr.mxu0 0.0
    %716 = vmatpush1.msra.mxu0 0.0
    %717 = vmatprep.subr.mxu0 0.0
    %718 = vmatpush1.msra.mxu0 0.0
    %719 = vmatprep.subr.mxu0 0.0
    %720 = vmatpush1.msra.mxu0 0.0
    %721 = vmatprep.subr.mxu0 0.0
    %722 = vmatpush1.msra.mxu0 0.0
    %723 = vmatprep.subr.mxu0 0.0
    %724 = vmatpush1.msra.mxu0 0.0
    %725 = vmatprep.subr.mxu0 0.0
    %726 = vmatpush1.msra.mxu0 0.0
    %727 = vmatprep.subr.mxu0 0.0
    %728 = vmatpush1.msra.mxu0 0.0
    %729 = vmatprep.subr.mxu0 0.0
    %730 = vmatpush1.msra.mxu0 0.0
    %731 = vmatprep.subr.mxu0 0.0
    %732 = vmatpush1.msra.mxu0 0.0
    %733 = vmatprep.subr.mxu0 0.0
    %734 = vmatpush1.msra.mxu0 0.0
    %735 = vmatprep.subr.mxu0 0.0
    %736 = vmatpush1.msra.mxu0 0.0
    %737 = vmatprep.subr.mxu0 0.0
    %738 = vmatpush1.msra.mxu0 0.0
    %739 = vmatprep.subr.mxu0 0.0
    %740 = vmatpush1.msra.mxu0 0.0
    %741 = vmatprep.subr.mxu0 0.0
    %742 = vmatpush1.msra.mxu0 0.0
    %743 = vmatprep.mubr.f32.mxu0 0.0
    %744 = vmatmul.mubr.f32.gmra.mrb[0].mxu0 %v674
    %v745 = vpop.f32.mrb[0].mxu0
    %v746 = vadd.f32 0.0, %v745
    %v747 = vpop.f32.mrb[0].mxu0
    %748 = vmatprep.mubr.f32.mxu0 0.0
    %749 = vmatmul.mubr.f32.gmra.mrb[0].mxu0 %v677
    %v750 = vpop.f32.mrb[0].mxu0
    %v751 = vadd.f32 0.0, %v750
    %v752 = vpop.f32.mrb[0].mxu0
    %753 = vdwg.mxu0
    %754 = vrot.lane.b32.xlu0 %v336, 112
    %v755 = vpop.permute.xlu0 %754
    %756 = vrot.lane.b32.xlu0 %v339, 112
    %v757 = vpop.permute.xlu0 %756
    %758 = vrot.lane.b32.xlu0 %v336, 80
    %v759 = vpop.permute.xlu0 %758
    %760 = vrot.lane.b32.xlu0 %v339, 80
    %v761 = vpop.permute.xlu0 %760
    %v762 = vsel %vm356, %v755, 0
    %v764 = vsel %vm356, %v757, 0
    %v766 = vsel %vm356, %v759, 0
    %v768 = vsel %vm356, %v761, 0
    %770 = vmatprep.subr.mxu0 0.0
    %771 = vmatpush1.xpose.msra.mxu0 %v766
    %772 = vmatprep.subr.mxu0 0.0
    %773 = vmatpush1.xpose.msra.mxu0 %v768
    %774 = vmatprep.subr.mxu0 0.0
    %775 = vmatpush1.xpose.msra.mxu0 0.0
    %776 = vmatprep.subr.mxu0 0.0
    %777 = vmatpush1.xpose.msra.mxu0 0.0
    %778 = vmatprep.subr.mxu0 0.0
    %779 = vmatpush1.xpose.msra.mxu0 0.0
    %780 = vmatprep.subr.mxu0 0.0
    %781 = vmatpush1.xpose.msra.mxu0 0.0
    %782 = vmatprep.subr.mxu0 0.0
    %783 = vmatpush1.xpose.msra.mxu0 0.0
    %784 = vmatprep.subr.mxu0 0.0
    %785 = vmatpush1.xpose.msra.mxu0 0.0
    %786 = vmatprep.subr.mxu0 0.0
    %787 = vmatpush1.xpose.msra.mxu0 0.0
    %788 = vmatprep.subr.mxu0 0.0
    %789 = vmatpush1.xpose.msra.mxu0 0.0
    %790 = vmatprep.subr.mxu0 0.0
    %791 = vmatpush1.xpose.msra.mxu0 0.0
    %792 = vmatprep.subr.mxu0 0.0
    %793 = vmatpush1.xpose.msra.mxu0 0.0
    %794 = vmatprep.subr.mxu0 0.0
    %795 = vmatpush1.xpose.msra.mxu0 0.0
    %796 = vmatprep.subr.mxu0 0.0
    %797 = vmatpush1.xpose.msra.mxu0 0.0
    %798 = vmatprep.subr.mxu0 0.0
    %799 = vmatpush1.xpose.msra.mxu0 0.0
    %800 = vmatprep.subr.mxu0 0.0
    %801 = vmatpush1.xpose.msra.mxu0 0.0
    %802 = vmatprep.subr.mxu0 0.0
    %803 = vmatpush1.xpose.msra.mxu0 0.0
    %804 = vmatprep.subr.mxu0 0.0
    %805 = vmatpush1.xpose.msra.mxu0 0.0
    %806 = vmatprep.subr.mxu0 0.0
    %807 = vmatpush1.xpose.msra.mxu0 0.0
    %808 = vmatprep.subr.mxu0 0.0
    %809 = vmatpush1.xpose.msra.mxu0 0.0
    %810 = vmatprep.subr.mxu0 0.0
    %811 = vmatpush1.xpose.msra.mxu0 0.0
    %812 = vmatprep.subr.mxu0 0.0
    %813 = vmatpush1.xpose.msra.mxu0 0.0
    %814 = vmatprep.subr.mxu0 0.0
    %815 = vmatpush1.xpose.msra.mxu0 0.0
    %816 = vmatprep.subr.mxu0 0.0
    %817 = vmatpush1.xpose.msra.mxu0 0.0
    %818 = vmatprep.subr.mxu0 0.0
    %819 = vmatpush1.xpose.msra.mxu0 0.0
    %820 = vmatprep.subr.mxu0 0.0
    %821 = vmatpush1.xpose.msra.mxu0 0.0
    %822 = vmatprep.subr.mxu0 0.0
    %823 = vmatpush1.xpose.msra.mxu0 0.0
    %824 = vmatprep.subr.mxu0 0.0
    %825 = vmatpush1.xpose.msra.mxu0 0.0
    %826 = vmatprep.subr.mxu0 0.0
    %827 = vmatpush1.xpose.msra.mxu0 0.0
    %828 = vmatprep.subr.mxu0 0.0
    %829 = vmatpush1.xpose.msra.mxu0 0.0
    %830 = vmatprep.subr.mxu0 0.0
    %831 = vmatpush1.xpose.msra.mxu0 0.0
    %832 = vmatprep.subr.mxu0 0.0
    %833 = vmatpush1.xpose.msra.mxu0 0.0
    %834 = vmatprep.mubr.f32.mxu0 0.0
    %835 = vmatmul.mubr.f32.gmra.mrb[0].mxu0 %v762
    %v836 = vpop.f32.mrb[0].mxu0
    %v837 = vadd.f32 0.0, %v836
    %v838 = vpop.f32.mrb[0].mxu0
    %839 = vmatprep.mubr.f32.mxu0 0.0
    %840 = vmatmul.mubr.f32.gmra.mrb[0].mxu0 %v764
    %v841 = vpop.f32.mrb[0].mxu0
    %v842 = vadd.f32 0.0, %v841
    %v843 = vpop.f32.mrb[0].mxu0
    %844 = vdwg.mxu0
    %v845 = vmul.f32 %v837, 0.35355338
    %v846 = vmul.f32 %v842, 0.35355338
    %v847 = vsel %vm442, %v845, -inf
    %848 = vmax.xlane.f32.xlu0 %v847
    %v849 = vpop.xlane.xlu0 %848
    %v850 = vsel %vm442, %v846, -inf
    %851 = vmax.xlane.f32.xlu0 %v850
    %v852 = vpop.xlane.xlu0 %851
    %v853 = vsub.f32 %v845, %v849
    %v854 = vsub.f32 %v846, %v852
    %v855 = vmul.f32 %v853, 1.442695
    %v856 = vpow.pop %v855
    %v857 = vmul.f32 %v854, 1.442695
    %v858 = vpow.pop %v857
    %v859 = vsel %vm442, %v856, 0.0
    %860 = vadd.xlane.f32.xlu0 %v859
    %v861 = vpop.xlane.xlu0 %860
    %v862 = vsel %vm442, %v858, 0.0
    %863 = vadd.xlane.f32.xlu0 %v862
    %v864 = vpop.xlane.xlu0 %863
    %v865 = vrcp.pop %v861
    %v866 = vrcp.pop %v864
    %v867 = vmul.f32 %v856, %v865
    %v868 = vmul.f32 %v858, %v866
    %869 = vrot.lane.b32.xlu0 %v336, 48
    %v870 = vpop.permute.xlu0 %869
    %871 = vrot.lane.b32.xlu0 %v339, 48
    %v872 = vpop.permute.xlu0 %871
    %v876 = vsel %vm442, %v867, 0
    %v879 = vsel %vm442, %v868, 0
    %881 = vmatprep.subr.mxu0 0.0
    %882 = vmatpush1.msra.mxu0 %v870
    %883 = vmatprep.subr.mxu0 0.0
    %884 = vmatpush1.msra.mxu0 %v872
    %885 = vmatprep.subr.mxu0 0.0
    %886 = vmatpush1.msra.mxu0 0.0
    %887 = vmatprep.subr.mxu0 0.0
    %888 = vmatpush1.msra.mxu0 0.0
    %889 = vmatprep.subr.mxu0 0.0
    %890 = vmatpush1.msra.mxu0 0.0
    %891 = vmatprep.subr.mxu0 0.0
    %892 = vmatpush1.msra.mxu0 0.0
    %893 = vmatprep.subr.mxu0 0.0
    %894 = vmatpush1.msra.mxu0 0.0
    %895 = vmatprep.subr.mxu0 0.0
    %896 = vmatpush1.msra.mxu0 0.0
    %897 = vmatprep.subr.mxu0 0.0
    %898 = vmatpush1.msra.mxu0 0.0
    %899 = vmatprep.subr.mxu0 0.0
    %900 = vmatpush1.msra.mxu0 0.0
    %901 = vmatprep.subr.mxu0 0.0
    %902 = vmatpush1.msra.mxu0 0.0
    %903 = vmatprep.subr.mxu0 0.0
    %904 = vmatpush1.msra.mxu0 0.0
    %905 = vmatprep.subr.mxu0 0.0
    %906 = vmatpush1.msra.mxu0 0.0
    %907 = vmatprep.subr.mxu0 0.0
    %908 = vmatpush1.msra.mxu0 0.0
    %909 = vmatprep.subr.mxu0 0.0
    %910 = vmatpush1.msra.mxu0 0.0
    %911 = vmatprep.subr.mxu0 0.0
    %912 = vmatpush1.msra.mxu0 0.0
    %913 = vmatprep.subr.mxu0 0.0
    %914 = vmatpush1.msra.mxu0 0.0
    %915 = vmatprep.subr.mxu0 0.0
    %916 = vmatpush1.msra.mxu0 0.0
    %917 = vmatprep.subr.mxu0 0.0
    %918 = vmatpush1.msra.mxu0 0.0
    %919 = vmatprep.subr.mxu0 0.0
    %920 = vmatpush1.msra.mxu0 0.0
    %921 = vmatprep.subr.mxu0 0.0
    %922 = vmatpush1.msra.mxu0 0.0
    %923 = vmatprep.subr.mxu0 0.0
    %924 = vmatpush1.msra.mxu0 0.0
    %925 = vmatprep.subr.mxu0 0.0
    %926 = vmatpush1.msra.mxu0 0.0
    %927 = vmatprep.subr.mxu0 0.0
    %928 = vmatpush1.msra.mxu0 0.0
    %929 = vmatprep.subr.mxu0 0.0
    %930 = vmatpush1.msra.mxu0 0.0
    %931 = vmatprep.subr.mxu0 0.0
    %932 = vmatpush1.msra.mxu0 0.0
    %933 = vmatprep.subr.mxu0 0.0
    %934 = vmatpush1.msra.mxu0 0.0
    %935 = vmatprep.subr.mxu0 0.0
    %936 = vmatpush1.msra.mxu0 0.0
    %937 = vmatprep.subr.mxu0 0.0
    %938 = vmatpush1.msra.mxu0 0.0
    %939 = vmatprep.subr.mxu0 0.0
    %940 = vmatpush1.msra.mxu0 0.0
    %941 = vmatprep.subr.mxu0 0.0
    %942 = vmatpush1.msra.mxu0 0.0
    %943 = vmatprep.subr.mxu0 0.0
    %944 = vmatpush1.msra.mxu0 0.0
    %945 = vmatprep.mubr.f32.mxu0 0.0
    %946 = vmatmul.mubr.f32.gmra.mrb[0].mxu0 %v876
    %v947 = vpop.f32.mrb[0].mxu0
    %v948 = vadd.f32 0.0, %v947
    %v949 = vpop.f32.mrb[0].mxu0
    %950 = vmatprep.mubr.f32.mxu0 0.0
    %951 = vmatmul.mubr.f32.gmra.mrb[0].mxu0 %v879
    %v952 = vpop.f32.mrb[0].mxu0
    %v953 = vadd.f32 0.0, %v952
    %v954 = vpop.f32.mrb[0].mxu0
    %955 = vdwg.mxu0
    %956 = vrot.lane.b32.xlu0 %v336, 104
    %v957 = vpop.permute.xlu0 %956
    %958 = vrot.lane.b32.xlu0 %v339, 104
    %v959 = vpop.permute.xlu0 %958
    %960 = vrot.lane.b32.xlu0 %v336, 72
    %v961 = vpop.permute.xlu0 %960
    %962 = vrot.lane.b32.xlu0 %v339, 72
    %v963 = vpop.permute.xlu0 %962
    %v964 = vsel %vm356, %v957, 0
    %v966 = vsel %vm356, %v959, 0
    %v968 = vsel %vm356, %v961, 0
    %v970 = vsel %vm356, %v963, 0
    %972 = vmatprep.subr.mxu0 0.0
    %973 = vmatpush1.xpose.msra.mxu0 %v968
    %974 = vmatprep.subr.mxu0 0.0
    %975 = vmatpush1.xpose.msra.mxu0 %v970
    %976 = vmatprep.subr.mxu0 0.0
    %977 = vmatpush1.xpose.msra.mxu0 0.0
    %978 = vmatprep.subr.mxu0 0.0
    %979 = vmatpush1.xpose.msra.mxu0 0.0
    %980 = vmatprep.subr.mxu0 0.0
    %981 = vmatpush1.xpose.msra.mxu0 0.0
    %982 = vmatprep.subr.mxu0 0.0
    %983 = vmatpush1.xpose.msra.mxu0 0.0
    %984 = vmatprep.subr.mxu0 0.0
    %985 = vmatpush1.xpose.msra.mxu0 0.0
    %986 = vmatprep.subr.mxu0 0.0
    %987 = vmatpush1.xpose.msra.mxu0 0.0
    %988 = vmatprep.subr.mxu0 0.0
    %989 = vmatpush1.xpose.msra.mxu0 0.0
    %990 = vmatprep.subr.mxu0 0.0
    %991 = vmatpush1.xpose.msra.mxu0 0.0
    %992 = vmatprep.subr.mxu0 0.0
    %993 = vmatpush1.xpose.msra.mxu0 0.0
    %994 = vmatprep.subr.mxu0 0.0
    %995 = vmatpush1.xpose.msra.mxu0 0.0
    %996 = vmatprep.subr.mxu0 0.0
    %997 = vmatpush1.xpose.msra.mxu0 0.0
    %998 = vmatprep.subr.mxu0 0.0
    %999 = vmatpush1.xpose.msra.mxu0 0.0
    %1000 = vmatprep.subr.mxu0 0.0
    %1001 = vmatpush1.xpose.msra.mxu0 0.0
    %1002 = vmatprep.subr.mxu0 0.0
    %1003 = vmatpush1.xpose.msra.mxu0 0.0
    %1004 = vmatprep.subr.mxu0 0.0
    %1005 = vmatpush1.xpose.msra.mxu0 0.0
    %1006 = vmatprep.subr.mxu0 0.0
    %1007 = vmatpush1.xpose.msra.mxu0 0.0
    %1008 = vmatprep.subr.mxu0 0.0
    %1009 = vmatpush1.xpose.msra.mxu0 0.0
    %1010 = vmatprep.subr.mxu0 0.0
    %1011 = vmatpush1.xpose.msra.mxu0 0.0
    %1012 = vmatprep.subr.mxu0 0.0
    %1013 = vmatpush1.xpose.msra.mxu0 0.0
    %1014 = vmatprep.subr.mxu0 0.0
    %1015 = vmatpush1.xpose.msra.mxu0 0.0
    %1016 = vmatprep.subr.mxu0 0.0
    %1017 = vmatpush1.xpose.msra.mxu0 0.0
    %1018 = vmatprep.subr.mxu0 0.0
    %1019 = vmatpush1.xpose.msra.mxu0 0.0
    %1020 = vmatprep.subr.mxu0 0.0
    %1021 = vmatpush1.xpose.msra.mxu0 0.0
    %1022 = vmatprep.subr.mxu0 0.0
    %1023 = vmatpush1.xpose.msra.mxu0 0.0
    %1024 = vmatprep.subr.mxu0 0.0
    %1025 = vmatpush1.xpose.msra.mxu0 0.0
    %1026 = vmatprep.subr.mxu0 0.0
    %1027 = vmatpush1.xpose.msra.mxu0 0.0
    %1028 = vmatprep.subr.mxu0 0.0
    %1029 = vmatpush1.xpose.msra.mxu0 0.0
    %1030 = vmatprep.subr.mxu0 0.0
    %1031 = vmatpush1.xpose.msra.mxu0 0.0
    %1032 = vmatprep.subr.mxu0 0.0
    %1033 = vmatpush1.xpose.msra.mxu0 0.0
    %1034 = vmatprep.subr.mxu0 0.0
    %1035 = vmatpush1.xpose.msra.mxu0 0.0
    %1036 = vmatprep.mubr.f32.mxu0 0.0
    %1037 = vmatmul.mubr.f32.gmra.mrb[0].mxu0 %v964
    %v1038 = vpop.f32.mrb[0].mxu0
    %v1039 = vadd.f32 0.0, %v1038
    %v1040 = vpop.f32.mrb[0].mxu0
    %1041 = vmatprep.mubr.f32.mxu0 0.0
    %1042 = vmatmul.mubr.f32.gmra.mrb[0].mxu0 %v966
    %v1043 = vpop.f32.mrb[0].mxu0
    %v1044 = vadd.f32 0.0, %v1043
    %v1045 = vpop.f32.mrb[0].mxu0
    %1046 = vdwg.mxu0
    %v1047 = vmul.f32 %v1039, 0.35355338
    %v1048 = vmul.f32 %v1044, 0.35355338
    %v1049 = vsel %vm442, %v1047, -inf
    %1050 = vmax.xlane.f32.xlu0 %v1049
    %v1051 = vpop.xlane.xlu0 %1050
    %v1052 = vsel %vm442, %v1048, -inf
    %1053 = vmax.xlane.f32.xlu0 %v1052
    %v1054 = vpop.xlane.xlu0 %1053
    %v1055 = vsub.f32 %v1047, %v1051
    %v1056 = vsub.f32 %v1048, %v1054
    %v1057 = vmul.f32 %v1055, 1.442695
    %v1058 = vpow.pop %v1057
    %v1059 = vmul.f32 %v1056, 1.442695
    %v1060 = vpow.pop %v1059
    %v1061 = vsel %vm442, %v1058, 0.0
    %1062 = vadd.xlane.f32.xlu0 %v1061
    %v1063 = vpop.xlane.xlu0 %1062
    %v1064 = vsel %vm442, %v1060, 0.0
    %1065 = vadd.xlane.f32.xlu0 %v1064
    %v1066 = vpop.xlane.xlu0 %1065
    %v1067 = vrcp.pop %v1063
    %v1068 = vrcp.pop %v1066
    %v1069 = vmul.f32 %v1058, %v1067
    %v1070 = vmul.f32 %v1060, %v1068
    %1071 = vrot.lane.b32.xlu0 %v336, 40
    %v1072 = vpop.permute.xlu0 %1071
    %1073 = vrot.lane.b32.xlu0 %v339, 40
    %v1074 = vpop.permute.xlu0 %1073
    %v1078 = vsel %vm442, %v1069, 0
    %v1081 = vsel %vm442, %v1070, 0
    %1083 = vmatprep.subr.mxu0 0.0
    %1084 = vmatpush1.msra.mxu0 %v1072
    %1085 = vmatprep.subr.mxu0 0.0
    %1086 = vmatpush1.msra.mxu0 %v1074
    %1087 = vmatprep.subr.mxu0 0.0
    %1088 = vmatpush1.msra.mxu0 0.0
    %1089 = vmatprep.subr.mxu0 0.0
    %1090 = vmatpush1.msra.mxu0 0.0
    %1091 = vmatprep.subr.mxu0 0.0
    %1092 = vmatpush1.msra.mxu0 0.0
    %1093 = vmatprep.subr.mxu0 0.0
    %1094 = vmatpush1.msra.mxu0 0.0
    %1095 = vmatprep.subr.mxu0 0.0
    %1096 = vmatpush1.msra.mxu0 0.0
    %1097 = vmatprep.subr.mxu0 0.0
    %1098 = vmatpush1.msra.mxu0 0.0
    %1099 = vmatprep.subr.mxu0 0.0
    %1100 = vmatpush1.msra.mxu0 0.0
    %1101 = vmatprep.subr.mxu0 0.0
    %1102 = vmatpush1.msra.mxu0 0.0
    %1103 = vmatprep.subr.mxu0 0.0
    %1104 = vmatpush1.msra.mxu0 0.0
    %1105 = vmatprep.subr.mxu0 0.0
    %1106 = vmatpush1.msra.mxu0 0.0
    %1107 = vmatprep.subr.mxu0 0.0
    %1108 = vmatpush1.msra.mxu0 0.0
    %1109 = vmatprep.subr.mxu0 0.0
    %1110 = vmatpush1.msra.mxu0 0.0
    %1111 = vmatprep.subr.mxu0 0.0
    %1112 = vmatpush1.msra.mxu0 0.0
    %1113 = vmatprep.subr.mxu0 0.0
    %1114 = vmatpush1.msra.mxu0 0.0
    %1115 = vmatprep.subr.mxu0 0.0
    %1116 = vmatpush1.msra.mxu0 0.0
    %1117 = vmatprep.subr.mxu0 0.0
    %1118 = vmatpush1.msra.mxu0 0.0
    %1119 = vmatprep.subr.mxu0 0.0
    %1120 = vmatpush1.msra.mxu0 0.0
    %1121 = vmatprep.subr.mxu0 0.0
    %1122 = vmatpush1.msra.mxu0 0.0
    %1123 = vmatprep.subr.mxu0 0.0
    %1124 = vmatpush1.msra.mxu0 0.0
    %1125 = vmatprep.subr.mxu0 0.0
    %1126 = vmatpush1.msra.mxu0 0.0
    %1127 = vmatprep.subr.mxu0 0.0
    %1128 = vmatpush1.msra.mxu0 0.0
    %1129 = vmatprep.subr.mxu0 0.0
    %1130 = vmatpush1.msra.mxu0 0.0
    %1131 = vmatprep.subr.mxu0 0.0
    %1132 = vmatpush1.msra.mxu0 0.0
    %1133 = vmatprep.subr.mxu0 0.0
    %1134 = vmatpush1.msra.mxu0 0.0
    %1135 = vmatprep.subr.mxu0 0.0
    %1136 = vmatpush1.msra.mxu0 0.0
    %1137 = vmatprep.subr.mxu0 0.0
    %1138 = vmatpush1.msra.mxu0 0.0
    %1139 = vmatprep.subr.mxu0 0.0
    %1140 = vmatpush1.msra.mxu0 0.0
    %1141 = vmatprep.subr.mxu0 0.0
    %1142 = vmatpush1.msra.mxu0 0.0
    %1143 = vmatprep.subr.mxu0 0.0
    %1144 = vmatpush1.msra.mxu0 0.0
    %1145 = vmatprep.subr.mxu0 0.0
    %1146 = vmatpush1.msra.mxu0 0.0
    %1147 = vmatprep.mubr.f32.mxu0 0.0
    %1148 = vmatmul.mubr.f32.gmra.mrb[0].mxu0 %v1078
    %v1149 = vpop.f32.mrb[0].mxu0
    %v1150 = vadd.f32 0.0, %v1149
    %v1151 = vpop.f32.mrb[0].mxu0
    %1152 = vmatprep.mubr.f32.mxu0 0.0
    %1153 = vmatmul.mubr.f32.gmra.mrb[0].mxu0 %v1081
    %v1154 = vpop.f32.mrb[0].mxu0
    %v1155 = vadd.f32 0.0, %v1154
    %v1156 = vpop.f32.mrb[0].mxu0
    %1157 = vdwg.mxu0
    %1160 = vrot.lane.b32.xlu0 %v746, 8
    %v1161 = vpop.permute.xlu0 %1160
    %1162 = vrot.lane.b32.xlu0 %v751, 8
    %v1163 = vpop.permute.xlu0 %1162
    %1168 = vrot.lane.b32.xlu0 %v948, 16
    %v1169 = vpop.permute.xlu0 %1168
    %1170 = vrot.lane.b32.xlu0 %v953, 16
    %v1171 = vpop.permute.xlu0 %1170
    %1176 = vrot.lane.b32.xlu0 %v1150, 24
    %v1177 = vpop.permute.xlu0 %1176
    %1178 = vrot.lane.b32.xlu0 %v1155, 24
    %v1179 = vpop.permute.xlu0 %1178
    %v1182 = vsel %vm356, %v544, %v1161
    %v1183 = vsel %vm356, %v549, %v1163
    %v1184 = vsel %vm442, %v1182, %v1169
    %v1185 = vsel %vm442, %v1183, %v1171
    %vm1186 = vcmask 195584
    %v1187 = vsel %vm1186, %v1184, %v1177
    %v1188 = vsel %vm1186, %v1185, %v1179
    %1191 = vrot.lane.b32.xlu0 %v344, 96
    %v1192 = vpop.permute.xlu0 %1191
    %1193 = vrot.lane.b32.xlu0 %v347, 96
    %v1194 = vpop.permute.xlu0 %1193
    %v1195 = vsel %vm356, %v344, 0
    %v1197 = vsel %vm356, %v347, 0
    %v1199 = vsel %vm356, %v1192, 0
    %v1201 = vsel %vm356, %v1194, 0
    %1203 = vmatprep.subr.mxu0 0.0
    %1204 = vmatpush1.xpose.msra.mxu0 %v1199
    %1205 = vmatprep.subr.mxu0 0.0
    %1206 = vmatpush1.xpose.msra.mxu0 %v1201
    %1207 = vmatprep.subr.mxu0 0.0
    %1208 = vmatpush1.xpose.msra.mxu0 0.0
    %1209 = vmatprep.subr.mxu0 0.0
    %1210 = vmatpush1.xpose.msra.mxu0 0.0
    %1211 = vmatprep.subr.mxu0 0.0
    %1212 = vmatpush1.xpose.msra.mxu0 0.0
    %1213 = vmatprep.subr.mxu0 0.0
    %1214 = vmatpush1.xpose.msra.mxu0 0.0
    %1215 = vmatprep.subr.mxu0 0.0
    %1216 = vmatpush1.xpose.msra.mxu0 0.0
    %1217 = vmatprep.subr.mxu0 0.0
    %1218 = vmatpush1.xpose.msra.mxu0 0.0
    %1219 = vmatprep.subr.mxu0 0.0
    %1220 = vmatpush1.xpose.msra.mxu0 0.0
    %1221 = vmatprep.subr.mxu0 0.0
    %1222 = vmatpush1.xpose.msra.mxu0 0.0
    %1223 = vmatprep.subr.mxu0 0.0
    %1224 = vmatpush1.xpose.msra.mxu0 0.0
    %1225 = vmatprep.subr.mxu0 0.0
    %1226 = vmatpush1.xpose.msra.mxu0 0.0
    %1227 = vmatprep.subr.mxu0 0.0
    %1228 = vmatpush1.xpose.msra.mxu0 0.0
    %1229 = vmatprep.subr.mxu0 0.0
    %1230 = vmatpush1.xpose.msra.mxu0 0.0
    %1231 = vmatprep.subr.mxu0 0.0
    %1232 = vmatpush1.xpose.msra.mxu0 0.0
    %1233 = vmatprep.subr.mxu0 0.0
    %1234 = vmatpush1.xpose.msra.mxu0 0.0
    %1235 = vmatprep.subr.mxu0 0.0
    %1236 = vmatpush1.xpose.msra.mxu0 0.0
    %1237 = vmatprep.subr.mxu0 0.0
    %1238 = vmatpush1.xpose.msra.mxu0 0.0
    %1239 = vmatprep.subr.mxu0 0.0
    %1240 = vmatpush1.xpose.msra.mxu0 0.0
    %1241 = vmatprep.subr.mxu0 0.0
    %1242 = vmatpush1.xpose.msra.mxu0 0.0
    %1243 = vmatprep.subr.mxu0 0.0
    %1244 = vmatpush1.xpose.msra.mxu0 0.0
    %1245 = vmatprep.subr.mxu0 0.0
    %1246 = vmatpush1.xpose.msra.mxu0 0.0
    %1247 = vmatprep.subr.mxu0 0.0
    %1248 = vmatpush1.xpose.msra.mxu0 0.0
    %1249 = vmatprep.subr.mxu0 0.0
    %1250 = vmatpush1.xpose.msra.mxu0 0.0
    %1251 = vmatprep.subr.mxu0 0.0
    %1252 = vmatpush1.xpose.msra.mxu0 0.0
    %1253 = vmatprep.subr.mxu0 0.0
    %1254 = vmatpush1.xpose.msra.mxu0 0.0
    %1255 = vmatprep.subr.mxu0 0.0
    %1256 = vmatpush1.xpose.msra.mxu0 0.0
    %1257 = vmatprep.subr.mxu0 0.0
    %1258 = vmatpush1.xpose.msra.mxu0 0.0
    %1259 = vmatprep.subr.mxu0 0.0
    %1260 = vmatpush1.xpose.msra.mxu0 0.0
    %1261 = vmatprep.subr.mxu0 0.0
    %1262 = vmatpush1.xpose.msra.mxu0 0.0
    %1263 = vmatprep.subr.mxu0 0.0
    %1264 = vmatpush1.xpose.msra.mxu0 0.0
    %1265 = vmatprep.subr.mxu0 0.0
    %1266 = vmatpush1.xpose.msra.mxu0 0.0
    %1267 = vmatprep.mubr.f32.mxu0 0.0
    %1268 = vmatmul.mubr.f32.gmra.mrb[0].mxu0 %v1195
    %v1269 = vpop.f32.mrb[0].mxu0
    %v1270 = vadd.f32 0.0, %v1269
    %v1271 = vpop.f32.mrb[0].mxu0
    %1272 = vmatprep.mubr.f32.mxu0 0.0
    %1273 = vmatmul.mubr.f32.gmra.mrb[0].mxu0 %v1197
    %v1274 = vpop.f32.mrb[0].mxu0
    %v1275 = vadd.f32 0.0, %v1274
    %v1276 = vpop.f32.mrb[0].mxu0
    %1277 = vdwg.mxu0
    %v1278 = vmul.f32 %v1270, 0.35355338
    %v1279 = vmul.f32 %v1275, 0.35355338
    %v1280 = vsel %vm442, %v1278, -inf
    %1281 = vmax.xlane.f32.xlu0 %v1280
    %v1282 = vpop.xlane.xlu0 %1281
    %v1283 = vsel %vm442, %v1279, -inf
    %1284 = vmax.xlane.f32.xlu0 %v1283
    %v1285 = vpop.xlane.xlu0 %1284
    %v1286 = vsub.f32 %v1278, %v1282
    %v1287 = vsub.f32 %v1279, %v1285
    %v1288 = vmul.f32 %v1286, 1.442695
    %v1289 = vpow.pop %v1288
    %v1290 = vmul.f32 %v1287, 1.442695
    %v1291 = vpow.pop %v1290
    %v1292 = vsel %vm442, %v1289, 0.0
    %1293 = vadd.xlane.f32.xlu0 %v1292
    %v1294 = vpop.xlane.xlu0 %1293
    %v1295 = vsel %vm442, %v1291, 0.0
    %1296 = vadd.xlane.f32.xlu0 %v1295
    %v1297 = vpop.xlane.xlu0 %1296
    %v1298 = vrcp.pop %v1294
    %v1299 = vrcp.pop %v1297
    %v1300 = vmul.f32 %v1289, %v1298
    %v1301 = vmul.f32 %v1291, %v1299
    %1302 = vrot.lane.b32.xlu0 %v344, 64
    %v1303 = vpop.permute.xlu0 %1302
    %1304 = vrot.lane.b32.xlu0 %v347, 64
    %v1305 = vpop.permute.xlu0 %1304
    %v1309 = vsel %vm442, %v1300, 0
    %v1312 = vsel %vm442, %v1301, 0
    %1314 = vmatprep.subr.mxu0 0.0
    %1315 = vmatpush1.msra.mxu0 %v1303
    %1316 = vmatprep.subr.mxu0 0.0
    %1317 = vmatpush1.msra.mxu0 %v1305
    %1318 = vmatprep.subr.mxu0 0.0
    %1319 = vmatpush1.msra.mxu0 0.0
    %1320 = vmatprep.subr.mxu0 0.0
    %1321 = vmatpush1.msra.mxu0 0.0
    %1322 = vmatprep.subr.mxu0 0.0
    %1323 = vmatpush1.msra.mxu0 0.0
    %1324 = vmatprep.subr.mxu0 0.0
    %1325 = vmatpush1.msra.mxu0 0.0
    %1326 = vmatprep.subr.mxu0 0.0
    %1327 = vmatpush1.msra.mxu0 0.0
    %1328 = vmatprep.subr.mxu0 0.0
    %1329 = vmatpush1.msra.mxu0 0.0
    %1330 = vmatprep.subr.mxu0 0.0
    %1331 = vmatpush1.msra.mxu0 0.0
    %1332 = vmatprep.subr.mxu0 0.0
    %1333 = vmatpush1.msra.mxu0 0.0
    %1334 = vmatprep.subr.mxu0 0.0
    %1335 = vmatpush1.msra.mxu0 0.0
    %1336 = vmatprep.subr.mxu0 0.0
    %1337 = vmatpush1.msra.mxu0 0.0
    %1338 = vmatprep.subr.mxu0 0.0
    %1339 = vmatpush1.msra.mxu0 0.0
    %1340 = vmatprep.subr.mxu0 0.0
    %1341 = vmatpush1.msra.mxu0 0.0
    %1342 = vmatprep.subr.mxu0 0.0
    %1343 = vmatpush1.msra.mxu0 0.0
    %1344 = vmatprep.subr.mxu0 0.0
    %1345 = vmatpush1.msra.mxu0 0.0
    %1346 = vmatprep.subr.mxu0 0.0
    %1347 = vmatpush1.msra.mxu0 0.0
    %1348 = vmatprep.subr.mxu0 0.0
    %1349 = vmatpush1.msra.mxu0 0.0
    %1350 = vmatprep.subr.mxu0 0.0
    %1351 = vmatpush1.msra.mxu0 0.0
    %1352 = vmatprep.subr.mxu0 0.0
    %1353 = vmatpush1.msra.mxu0 0.0
    %1354 = vmatprep.subr.mxu0 0.0
    %1355 = vmatpush1.msra.mxu0 0.0
    %1356 = vmatprep.subr.mxu0 0.0
    %1357 = vmatpush1.msra.mxu0 0.0
    %1358 = vmatprep.subr.mxu0 0.0
    %1359 = vmatpush1.msra.mxu0 0.0
    %1360 = vmatprep.subr.mxu0 0.0
    %1361 = vmatpush1.msra.mxu0 0.0
    %1362 = vmatprep.subr.mxu0 0.0
    %1363 = vmatpush1.msra.mxu0 0.0
    %1364 = vmatprep.subr.mxu0 0.0
    %1365 = vmatpush1.msra.mxu0 0.0
    %1366 = vmatprep.subr.mxu0 0.0
    %1367 = vmatpush1.msra.mxu0 0.0
    %1368 = vmatprep.subr.mxu0 0.0
    %1369 = vmatpush1.msra.mxu0 0.0
    %1370 = vmatprep.subr.mxu0 0.0
    %1371 = vmatpush1.msra.mxu0 0.0
    %1372 = vmatprep.subr.mxu0 0.0
    %1373 = vmatpush1.msra.mxu0 0.0
    %1374 = vmatprep.subr.mxu0 0.0
    %1375 = vmatpush1.msra.mxu0 0.0
    %1376 = vmatprep.subr.mxu0 0.0
    %1377 = vmatpush1.msra.mxu0 0.0
    %1378 = vmatprep.mubr.f32.mxu0 0.0
    %1379 = vmatmul.mubr.f32.gmra.mrb[0].mxu0 %v1309
    %v1380 = vpop.f32.mrb[0].mxu0
    %v1381 = vadd.f32 0.0, %v1380
    %v1382 = vpop.f32.mrb[0].mxu0
    %1383 = vmatprep.mubr.f32.mxu0 0.0
    %1384 = vmatmul.mubr.f32.gmra.mrb[0].mxu0 %v1312
    %v1385 = vpop.f32.mrb[0].mxu0
    %v1386 = vadd.f32 0.0, %v1385
    %v1387 = vpop.f32.mrb[0].mxu0
    %1388 = vdwg.mxu0
    %1389 = vrot.lane.b32.xlu0 %v344, 120
    %v1390 = vpop.permute.xlu0 %1389
    %1391 = vrot.lane.b32.xlu0 %v347, 120
    %v1392 = vpop.permute.xlu0 %1391
    %1393 = vrot.lane.b32.xlu0 %v344, 88
    %v1394 = vpop.permute.xlu0 %1393
    %1395 = vrot.lane.b32.xlu0 %v347, 88
    %v1396 = vpop.permute.xlu0 %1395
    %v1397 = vsel %vm356, %v1390, 0
    %v1399 = vsel %vm356, %v1392, 0
    %v1401 = vsel %vm356, %v1394, 0
    %v1403 = vsel %vm356, %v1396, 0
    %1405 = vmatprep.subr.mxu0 0.0
    %1406 = vmatpush1.xpose.msra.mxu0 %v1401
    %1407 = vmatprep.subr.mxu0 0.0
    %1408 = vmatpush1.xpose.msra.mxu0 %v1403
    %1409 = vmatprep.subr.mxu0 0.0
    %1410 = vmatpush1.xpose.msra.mxu0 0.0
    %1411 = vmatprep.subr.mxu0 0.0
    %1412 = vmatpush1.xpose.msra.mxu0 0.0
    %1413 = vmatprep.subr.mxu0 0.0
    %1414 = vmatpush1.xpose.msra.mxu0 0.0
    %1415 = vmatprep.subr.mxu0 0.0
    %1416 = vmatpush1.xpose.msra.mxu0 0.0
    %1417 = vmatprep.subr.mxu0 0.0
    %1418 = vmatpush1.xpose.msra.mxu0 0.0
    %1419 = vmatprep.subr.mxu0 0.0
    %1420 = vmatpush1.xpose.msra.mxu0 0.0
    %1421 = vmatprep.subr.mxu0 0.0
    %1422 = vmatpush1.xpose.msra.mxu0 0.0
    %1423 = vmatprep.subr.mxu0 0.0
    %1424 = vmatpush1.xpose.msra.mxu0 0.0
    %1425 = vmatprep.subr.mxu0 0.0
    %1426 = vmatpush1.xpose.msra.mxu0 0.0
    %1427 = vmatprep.subr.mxu0 0.0
    %1428 = vmatpush1.xpose.msra.mxu0 0.0
    %1429 = vmatprep.subr.mxu0 0.0
    %1430 = vmatpush1.xpose.msra.mxu0 0.0
    %1431 = vmatprep.subr.mxu0 0.0
    %1432 = vmatpush1.xpose.msra.mxu0 0.0
    %1433 = vmatprep.subr.mxu0 0.0
    %1434 = vmatpush1.xpose.msra.mxu0 0.0
    %1435 = vmatprep.subr.mxu0 0.0
    %1436 = vmatpush1.xpose.msra.mxu0 0.0
    %1437 = vmatprep.subr.mxu0 0.0
    %1438 = vmatpush1.xpose.msra.mxu0 0.0
    %1439 = vmatprep.subr.mxu0 0.0
    %1440 = vmatpush1.xpose.msra.mxu0 0.0
    %1441 = vmatprep.subr.mxu0 0.0
    %1442 = vmatpush1.xpose.msra.mxu0 0.0
    %1443 = vmatprep.subr.mxu0 0.0
    %1444 = vmatpush1.xpose.msra.mxu0 0.0
    %1445 = vmatprep.subr.mxu0 0.0
    %1446 = vmatpush1.xpose.msra.mxu0 0.0
    %1447 = vmatprep.subr.mxu0 0.0
    %1448 = vmatpush1.xpose.msra.mxu0 0.0
    %1449 = vmatprep.subr.mxu0 0.0
    %1450 = vmatpush1.xpose.msra.mxu0 0.0
    %1451 = vmatprep.subr.mxu0 0.0
    %1452 = vmatpush1.xpose.msra.mxu0 0.0
    %1453 = vmatprep.subr.mxu0 0.0
    %1454 = vmatpush1.xpose.msra.mxu0 0.0
    %1455 = vmatprep.subr.mxu0 0.0
    %1456 = vmatpush1.xpose.msra.mxu0 0.0
    %1457 = vmatprep.subr.mxu0 0.0
    %1458 = vmatpush1.xpose.msra.mxu0 0.0
    %1459 = vmatprep.subr.mxu0 0.0
    %1460 = vmatpush1.xpose.msra.mxu0 0.0
    %1461 = vmatprep.subr.mxu0 0.0
    %1462 = vmatpush1.xpose.msra.mxu0 0.0
    %1463 = vmatprep.subr.mxu0 0.0
    %1464 = vmatpush1.xpose.msra.mxu0 0.0
    %1465 = vmatprep.subr.mxu0 0.0
    %1466 = vmatpush1.xpose.msra.mxu0 0.0
    %1467 = vmatprep.subr.mxu0 0.0
    %1468 = vmatpush1.xpose.msra.mxu0 0.0
    %1469 = vmatprep.mubr.f32.mxu0 0.0
    %1470 = vmatmul.mubr.f32.gmra.mrb[0].mxu0 %v1397
    %v1471 = vpop.f32.mrb[0].mxu0
    %v1472 = vadd.f32 0.0, %v1471
    %v1473 = vpop.f32.mrb[0].mxu0
    %1474 = vmatprep.mubr.f32.mxu0 0.0
    %1475 = vmatmul.mubr.f32.gmra.mrb[0].mxu0 %v1399
    %v1476 = vpop.f32.mrb[0].mxu0
    %v1477 = vadd.f32 0.0, %v1476
    %v1478 = vpop.f32.mrb[0].mxu0
    %1479 = vdwg.mxu0
    %v1480 = vmul.f32 %v1472, 0.35355338
    %v1481 = vmul.f32 %v1477, 0.35355338
    %v1482 = vsel %vm442, %v1480, -inf
    %1483 = vmax.xlane.f32.xlu0 %v1482
    %v1484 = vpop.xlane.xlu0 %1483
    %v1485 = vsel %vm442, %v1481, -inf
    %1486 = vmax.xlane.f32.xlu0 %v1485
    %v1487 = vpop.xlane.xlu0 %1486
    %v1488 = vsub.f32 %v1480, %v1484
    %v1489 = vsub.f32 %v1481, %v1487
    %v1490 = vmul.f32 %v1488, 1.442695
    %v1491 = vpow.pop %v1490
    %v1492 = vmul.f32 %v1489, 1.442695
    %v1493 = vpow.pop %v1492
    %v1494 = vsel %vm442, %v1491, 0.0
    %1495 = vadd.xlane.f32.xlu0 %v1494
    %v1496 = vpop.xlane.xlu0 %1495
    %v1497 = vsel %vm442, %v1493, 0.0
    %1498 = vadd.xlane.f32.xlu0 %v1497
    %v1499 = vpop.xlane.xlu0 %1498
    %v1500 = vrcp.pop %v1496
    %v1501 = vrcp.pop %v1499
    %v1502 = vmul.f32 %v1491, %v1500
    %v1503 = vmul.f32 %v1493, %v1501
    %1504 = vrot.lane.b32.xlu0 %v344, 56
    %v1505 = vpop.permute.xlu0 %1504
    %1506 = vrot.lane.b32.xlu0 %v347, 56
    %v1507 = vpop.permute.xlu0 %1506
    %v1511 = vsel %vm442, %v1502, 0
    %v1514 = vsel %vm442, %v1503, 0
    %1516 = vmatprep.subr.mxu0 0.0
    %1517 = vmatpush1.msra.mxu0 %v1505
    %1518 = vmatprep.subr.mxu0 0.0
    %1519 = vmatpush1.msra.mxu0 %v1507
    %1520 = vmatprep.subr.mxu0 0.0
    %1521 = vmatpush1.msra.mxu0 0.0
    %1522 = vmatprep.subr.mxu0 0.0
    %1523 = vmatpush1.msra.mxu0 0.0
    %1524 = vmatprep.subr.mxu0 0.0
    %1525 = vmatpush1.msra.mxu0 0.0
    %1526 = vmatprep.subr.mxu0 0.0
    %1527 = vmatpush1.msra.mxu0 0.0
    %1528 = vmatprep.subr.mxu0 0.0
    %1529 = vmatpush1.msra.mxu0 0.0
    %1530 = vmatprep.subr.mxu0 0.0
    %1531 = vmatpush1.msra.mxu0 0.0
    %1532 = vmatprep.subr.mxu0 0.0
    %1533 = vmatpush1.msra.mxu0 0.0
    %1534 = vmatprep.subr.mxu0 0.0
    %1535 = vmatpush1.msra.mxu0 0.0
    %1536 = vmatprep.subr.mxu0 0.0
    %1537 = vmatpush1.msra.mxu0 0.0
    %1538 = vmatprep.subr.mxu0 0.0
    %1539 = vmatpush1.msra.mxu0 0.0
    %1540 = vmatprep.subr.mxu0 0.0
    %1541 = vmatpush1.msra.mxu0 0.0
    %1542 = vmatprep.subr.mxu0 0.0
    %1543 = vmatpush1.msra.mxu0 0.0
    %1544 = vmatprep.subr.mxu0 0.0
    %1545 = vmatpush1.msra.mxu0 0.0
    %1546 = vmatprep.subr.mxu0 0.0
    %1547 = vmatpush1.msra.mxu0 0.0
    %1548 = vmatprep.subr.mxu0 0.0
    %1549 = vmatpush1.msra.mxu0 0.0
    %1550 = vmatprep.subr.mxu0 0.0
    %1551 = vmatpush1.msra.mxu0 0.0
    %1552 = vmatprep.subr.mxu0 0.0
    %1553 = vmatpush1.msra.mxu0 0.0
    %1554 = vmatprep.subr.mxu0 0.0
    %1555 = vmatpush1.msra.mxu0 0.0
    %1556 = vmatprep.subr.mxu0 0.0
    %1557 = vmatpush1.msra.mxu0 0.0
    %1558 = vmatprep.subr.mxu0 0.0
    %1559 = vmatpush1.msra.mxu0 0.0
    %1560 = vmatprep.subr.mxu0 0.0
    %1561 = vmatpush1.msra.mxu0 0.0
    %1562 = vmatprep.subr.mxu0 0.0
    %1563 = vmatpush1.msra.mxu0 0.0
    %1564 = vmatprep.subr.mxu0 0.0
    %1565 = vmatpush1.msra.mxu0 0.0
    %1566 = vmatprep.subr.mxu0 0.0
    %1567 = vmatpush1.msra.mxu0 0.0
    %1568 = vmatprep.subr.mxu0 0.0
    %1569 = vmatpush1.msra.mxu0 0.0
    %1570 = vmatprep.subr.mxu0 0.0
    %1571 = vmatpush1.msra.mxu0 0.0
    %1572 = vmatprep.subr.mxu0 0.0
    %1573 = vmatpush1.msra.mxu0 0.0
    %1574 = vmatprep.subr.mxu0 0.0
    %1575 = vmatpush1.msra.mxu0 0.0
    %1576 = vmatprep.subr.mxu0 0.0
    %1577 = vmatpush1.msra.mxu0 0.0
    %1578 = vmatprep.subr.mxu0 0.0
    %1579 = vmatpush1.msra.mxu0 0.0
    %1580 = vmatprep.mubr.f32.mxu0 0.0
    %1581 = vmatmul.mubr.f32.gmra.mrb[0].mxu0 %v1511
    %v1582 = vpop.f32.mrb[0].mxu0
    %v1583 = vadd.f32 0.0, %v1582
    %v1584 = vpop.f32.mrb[0].mxu0
    %1585 = vmatprep.mubr.f32.mxu0 0.0
    %1586 = vmatmul.mubr.f32.gmra.mrb[0].mxu0 %v1514
    %v1587 = vpop.f32.mrb[0].mxu0
    %v1588 = vadd.f32 0.0, %v1587
    %v1589 = vpop.f32.mrb[0].mxu0
    %1590 = vdwg.mxu0
    %1591 = vrot.lane.b32.xlu0 %v344, 112
    %v1592 = vpop.permute.xlu0 %1591
    %1593 = vrot.lane.b32.xlu0 %v347, 112
    %v1594 = vpop.permute.xlu0 %1593
    %1595 = vrot.lane.b32.xlu0 %v344, 80
    %v1596 = vpop.permute.xlu0 %1595
    %1597 = vrot.lane.b32.xlu0 %v347, 80
    %v1598 = vpop.permute.xlu0 %1597
    %v1599 = vsel %vm356, %v1592, 0
    %v1601 = vsel %vm356, %v1594, 0
    %v1603 = vsel %vm356, %v1596, 0
    %v1605 = vsel %vm356, %v1598, 0
    %1607 = vmatprep.subr.mxu0 0.0
    %1608 = vmatpush1.xpose.msra.mxu0 %v1603
    %1609 = vmatprep.subr.mxu0 0.0
    %1610 = vmatpush1.xpose.msra.mxu0 %v1605
    %1611 = vmatprep.subr.mxu0 0.0
    %1612 = vmatpush1.xpose.msra.mxu0 0.0
    %1613 = vmatprep.subr.mxu0 0.0
    %1614 = vmatpush1.xpose.msra.mxu0 0.0
    %1615 = vmatprep.subr.mxu0 0.0
    %1616 = vmatpush1.xpose.msra.mxu0 0.0
    %1617 = vmatprep.subr.mxu0 0.0
    %1618 = vmatpush1.xpose.msra.mxu0 0.0
    %1619 = vmatprep.subr.mxu0 0.0
    %1620 = vmatpush1.xpose.msra.mxu0 0.0
    %1621 = vmatprep.subr.mxu0 0.0
    %1622 = vmatpush1.xpose.msra.mxu0 0.0
    %1623 = vmatprep.subr.mxu0 0.0
    %1624 = vmatpush1.xpose.msra.mxu0 0.0
    %1625 = vmatprep.subr.mxu0 0.0
    %1626 = vmatpush1.xpose.msra.mxu0 0.0
    %1627 = vmatprep.subr.mxu0 0.0
    %1628 = vmatpush1.xpose.msra.mxu0 0.0
    %1629 = vmatprep.subr.mxu0 0.0
    %1630 = vmatpush1.xpose.msra.mxu0 0.0
    %1631 = vmatprep.subr.mxu0 0.0
    %1632 = vmatpush1.xpose.msra.mxu0 0.0
    %1633 = vmatprep.subr.mxu0 0.0
    %1634 = vmatpush1.xpose.msra.mxu0 0.0
    %1635 = vmatprep.subr.mxu0 0.0
    %1636 = vmatpush1.xpose.msra.mxu0 0.0
    %1637 = vmatprep.subr.mxu0 0.0
    %1638 = vmatpush1.xpose.msra.mxu0 0.0
    %1639 = vmatprep.subr.mxu0 0.0
    %1640 = vmatpush1.xpose.msra.mxu0 0.0
    %1641 = vmatprep.subr.mxu0 0.0
    %1642 = vmatpush1.xpose.msra.mxu0 0.0
    %1643 = vmatprep.subr.mxu0 0.0
    %1644 = vmatpush1.xpose.msra.mxu0 0.0
    %1645 = vmatprep.subr.mxu0 0.0
    %1646 = vmatpush1.xpose.msra.mxu0 0.0
    %1647 = vmatprep.subr.mxu0 0.0
    %1648 = vmatpush1.xpose.msra.mxu0 0.0
    %1649 = vmatprep.subr.mxu0 0.0
    %1650 = vmatpush1.xpose.msra.mxu0 0.0
    %1651 = vmatprep.subr.mxu0 0.0
    %1652 = vmatpush1.xpose.msra.mxu0 0.0
    %1653 = vmatprep.subr.mxu0 0.0
    %1654 = vmatpush1.xpose.msra.mxu0 0.0
    %1655 = vmatprep.subr.mxu0 0.0
    %1656 = vmatpush1.xpose.msra.mxu0 0.0
    %1657 = vmatprep.subr.mxu0 0.0
    %1658 = vmatpush1.xpose.msra.mxu0 0.0
    %1659 = vmatprep.subr.mxu0 0.0
    %1660 = vmatpush1.xpose.msra.mxu0 0.0
    %1661 = vmatprep.subr.mxu0 0.0
    %1662 = vmatpush1.xpose.msra.mxu0 0.0
    %1663 = vmatprep.subr.mxu0 0.0
    %1664 = vmatpush1.xpose.msra.mxu0 0.0
    %1665 = vmatprep.subr.mxu0 0.0
    %1666 = vmatpush1.xpose.msra.mxu0 0.0
    %1667 = vmatprep.subr.mxu0 0.0
    %1668 = vmatpush1.xpose.msra.mxu0 0.0
    %1669 = vmatprep.subr.mxu0 0.0
    %1670 = vmatpush1.xpose.msra.mxu0 0.0
    %1671 = vmatprep.mubr.f32.mxu0 0.0
    %1672 = vmatmul.mubr.f32.gmra.mrb[0].mxu0 %v1599
    %v1673 = vpop.f32.mrb[0].mxu0
    %v1674 = vadd.f32 0.0, %v1673
    %v1675 = vpop.f32.mrb[0].mxu0
    %1676 = vmatprep.mubr.f32.mxu0 0.0
    %1677 = vmatmul.mubr.f32.gmra.mrb[0].mxu0 %v1601
    %v1678 = vpop.f32.mrb[0].mxu0
    %v1679 = vadd.f32 0.0, %v1678
    %v1680 = vpop.f32.mrb[0].mxu0
    %1681 = vdwg.mxu0
    %v1682 = vmul.f32 %v1674, 0.35355338
    %v1683 = vmul.f32 %v1679, 0.35355338
    %v1684 = vsel %vm442, %v1682, -inf
    %1685 = vmax.xlane.f32.xlu0 %v1684
    %v1686 = vpop.xlane.xlu0 %1685
    %v1687 = vsel %vm442, %v1683, -inf
    %1688 = vmax.xlane.f32.xlu0 %v1687
    %v1689 = vpop.xlane.xlu0 %1688
    %v1690 = vsub.f32 %v1682, %v1686
    %v1691 = vsub.f32 %v1683, %v1689
    %v1692 = vmul.f32 %v1690, 1.442695
    %v1693 = vpow.pop %v1692
    %v1694 = vmul.f32 %v1691, 1.442695
    %v1695 = vpow.pop %v1694
    %v1696 = vsel %vm442, %v1693, 0.0
    %1697 = vadd.xlane.f32.xlu0 %v1696
    %v1698 = vpop.xlane.xlu0 %1697
    %v1699 = vsel %vm442, %v1695, 0.0
    %1700 = vadd.xlane.f32.xlu0 %v1699
    %v1701 = vpop.xlane.xlu0 %1700
    %v1702 = vrcp.pop %v1698
    %v1703 = vrcp.pop %v1701
    %v1704 = vmul.f32 %v1693, %v1702
    %v1705 = vmul.f32 %v1695, %v1703
    %1706 = vrot.lane.b32.xlu0 %v344, 48
    %v1707 = vpop.permute.xlu0 %1706
    %1708 = vrot.lane.b32.xlu0 %v347, 48
    %v1709 = vpop.permute.xlu0 %1708
    %v1713 = vsel %vm442, %v1704, 0
    %v1716 = vsel %vm442, %v1705, 0
    %1718 = vmatprep.subr.mxu0 0.0
    %1719 = vmatpush1.msra.mxu0 %v1707
    %1720 = vmatprep.subr.mxu0 0.0
    %1721 = vmatpush1.msra.mxu0 %v1709
    %1722 = vmatprep.subr.mxu0 0.0
    %1723 = vmatpush1.msra.mxu0 0.0
    %1724 = vmatprep.subr.mxu0 0.0
    %1725 = vmatpush1.msra.mxu0 0.0
    %1726 = vmatprep.subr.mxu0 0.0
    %1727 = vmatpush1.msra.mxu0 0.0
    %1728 = vmatprep.subr.mxu0 0.0
    %1729 = vmatpush1.msra.mxu0 0.0
    %1730 = vmatprep.subr.mxu0 0.0
    %1731 = vmatpush1.msra.mxu0 0.0
    %1732 = vmatprep.subr.mxu0 0.0
    %1733 = vmatpush1.msra.mxu0 0.0
    %1734 = vmatprep.subr.mxu0 0.0
    %1735 = vmatpush1.msra.mxu0 0.0
    %1736 = vmatprep.subr.mxu0 0.0
    %1737 = vmatpush1.msra.mxu0 0.0
    %1738 = vmatprep.subr.mxu0 0.0
    %1739 = vmatpush1.msra.mxu0 0.0
    %1740 = vmatprep.subr.mxu0 0.0
    %1741 = vmatpush1.msra.mxu0 0.0
    %1742 = vmatprep.subr.mxu0 0.0
    %1743 = vmatpush1.msra.mxu0 0.0
    %1744 = vmatprep.subr.mxu0 0.0
    %1745 = vmatpush1.msra.mxu0 0.0
    %1746 = vmatprep.subr.mxu0 0.0
    %1747 = vmatpush1.msra.mxu0 0.0
    %1748 = vmatprep.subr.mxu0 0.0
    %1749 = vmatpush1.msra.mxu0 0.0
    %1750 = vmatprep.subr.mxu0 0.0
    %1751 = vmatpush1.msra.mxu0 0.0
    %1752 = vmatprep.subr.mxu0 0.0
    %1753 = vmatpush1.msra.mxu0 0.0
    %1754 = vmatprep.subr.mxu0 0.0
    %1755 = vmatpush1.msra.mxu0 0.0
    %1756 = vmatprep.subr.mxu0 0.0
    %1757 = vmatpush1.msra.mxu0 0.0
    %1758 = vmatprep.subr.mxu0 0.0
    %1759 = vmatpush1.msra.mxu0 0.0
    %1760 = vmatprep.subr.mxu0 0.0
    %1761 = vmatpush1.msra.mxu0 0.0
    %1762 = vmatprep.subr.mxu0 0.0
    %1763 = vmatpush1.msra.mxu0 0.0
    %1764 = vmatprep.subr.mxu0 0.0
    %1765 = vmatpush1.msra.mxu0 0.0
    %1766 = vmatprep.subr.mxu0 0.0
    %1767 = vmatpush1.msra.mxu0 0.0
    %1768 = vmatprep.subr.mxu0 0.0
    %1769 = vmatpush1.msra.mxu0 0.0
    %1770 = vmatprep.subr.mxu0 0.0
    %1771 = vmatpush1.msra.mxu0 0.0
    %1772 = vmatprep.subr.mxu0 0.0
    %1773 = vmatpush1.msra.mxu0 0.0
    %1774 = vmatprep.subr.mxu0 0.0
    %1775 = vmatpush1.msra.mxu0 0.0
    %1776 = vmatprep.subr.mxu0 0.0
    %1777 = vmatpush1.msra.mxu0 0.0
    %1778 = vmatprep.subr.mxu0 0.0
    %1779 = vmatpush1.msra.mxu0 0.0
    %1780 = vmatprep.subr.mxu0 0.0
    %1781 = vmatpush1.msra.mxu0 0.0
    %1782 = vmatprep.mubr.f32.mxu0 0.0
    %1783 = vmatmul.mubr.f32.gmra.mrb[0].mxu0 %v1713
    %v1784 = vpop.f32.mrb[0].mxu0
    %v1785 = vadd.f32 0.0, %v1784
    %v1786 = vpop.f32.mrb[0].mxu0
    %1787 = vmatprep.mubr.f32.mxu0 0.0
    %1788 = vmatmul.mubr.f32.gmra.mrb[0].mxu0 %v1716
    %v1789 = vpop.f32.mrb[0].mxu0
    %v1790 = vadd.f32 0.0, %v1789
    %v1791 = vpop.f32.mrb[0].mxu0
    %1792 = vdwg.mxu0
    %1793 = vrot.lane.b32.xlu0 %v344, 104
    %v1794 = vpop.permute.xlu0 %1793
    %1795 = vrot.lane.b32.xlu0 %v347, 104
    %v1796 = vpop.permute.xlu0 %1795
    %1797 = vrot.lane.b32.xlu0 %v344, 72
    %v1798 = vpop.permute.xlu0 %1797
    %1799 = vrot.lane.b32.xlu0 %v347, 72
    %v1800 = vpop.permute.xlu0 %1799
    %v1801 = vsel %vm356, %v1794, 0
    %v1803 = vsel %vm356, %v1796, 0
    %v1805 = vsel %vm356, %v1798, 0
    %v1807 = vsel %vm356, %v1800, 0
    %1809 = vmatprep.subr.mxu0 0.0
    %1810 = vmatpush1.xpose.msra.mxu0 %v1805
    %1811 = vmatprep.subr.mxu0 0.0
    %1812 = vmatpush1.xpose.msra.mxu0 %v1807
    %1813 = vmatprep.subr.mxu0 0.0
    %1814 = vmatpush1.xpose.msra.mxu0 0.0
    %1815 = vmatprep.subr.mxu0 0.0
    %1816 = vmatpush1.xpose.msra.mxu0 0.0
    %1817 = vmatprep.subr.mxu0 0.0
    %1818 = vmatpush1.xpose.msra.mxu0 0.0
    %1819 = vmatprep.subr.mxu0 0.0
    %1820 = vmatpush1.xpose.msra.mxu0 0.0
    %1821 = vmatprep.subr.mxu0 0.0
    %1822 = vmatpush1.xpose.msra.mxu0 0.0
    %1823 = vmatprep.subr.mxu0 0.0
    %1824 = vmatpush1.xpose.msra.mxu0 0.0
    %1825 = vmatprep.subr.mxu0 0.0
    %1826 = vmatpush1.xpose.msra.mxu0 0.0
    %1827 = vmatprep.subr.mxu0 0.0
    %1828 = vmatpush1.xpose.msra.mxu0 0.0
    %1829 = vmatprep.subr.mxu0 0.0
    %1830 = vmatpush1.xpose.msra.mxu0 0.0
    %1831 = vmatprep.subr.mxu0 0.0
    %1832 = vmatpush1.xpose.msra.mxu0 0.0
    %1833 = vmatprep.subr.mxu0 0.0
    %1834 = vmatpush1.xpose.msra.mxu0 0.0
    %1835 = vmatprep.subr.mxu0 0.0
    %1836 = vmatpush1.xpose.msra.mxu0 0.0
    %1837 = vmatprep.subr.mxu0 0.0
    %1838 = vmatpush1.xpose.msra.mxu0 0.0
    %1839 = vmatprep.subr.mxu0 0.0
    %1840 = vmatpush1.xpose.msra.mxu0 0.0
    %1841 = vmatprep.subr.mxu0 0.0
    %1842 = vmatpush1.xpose.msra.mxu0 0.0
    %1843 = vmatprep.subr.mxu0 0.0
    %1844 = vmatpush1.xpose.msra.mxu0 0.0
    %1845 = vmatprep.subr.mxu0 0.0
    %1846 = vmatpush1.xpose.msra.mxu0 0.0
    %1847 = vmatprep.subr.mxu0 0.0
    %1848 = vmatpush1.xpose.msra.mxu0 0.0
    %1849 = vmatprep.subr.mxu0 0.0
    %1850 = vmatpush1.xpose.msra.mxu0 0.0
    %1851 = vmatprep.subr.mxu0 0.0
    %1852 = vmatpush1.xpose.msra.mxu0 0.0
    %1853 = vmatprep.subr.mxu0 0.0
    %1854 = vmatpush1.xpose.msra.mxu0 0.0
    %1855 = vmatprep.subr.mxu0 0.0
    %1856 = vmatpush1.xpose.msra.mxu0 0.0
    %1857 = vmatprep.subr.mxu0 0.0
    %1858 = vmatpush1.xpose.msra.mxu0 0.0
    %1859 = vmatprep.subr.mxu0 0.0
    %1860 = vmatpush1.xpose.msra.mxu0 0.0
    %1861 = vmatprep.subr.mxu0 0.0
    %1862 = vmatpush1.xpose.msra.mxu0 0.0
    %1863 = vmatprep.subr.mxu0 0.0
    %1864 = vmatpush1.xpose.msra.mxu0 0.0
    %1865 = vmatprep.subr.mxu0 0.0
    %1866 = vmatpush1.xpose.msra.mxu0 0.0
    %1867 = vmatprep.subr.mxu0 0.0
    %1868 = vmatpush1.xpose.msra.mxu0 0.0
    %1869 = vmatprep.subr.mxu0 0.0
    %1870 = vmatpush1.xpose.msra.mxu0 0.0
    %1871 = vmatprep.subr.mxu0 0.0
    %1872 = vmatpush1.xpose.msra.mxu0 0.0
    %1873 = vmatprep.mubr.f32.mxu0 0.0
    %1874 = vmatmul.mubr.f32.gmra.mrb[0].mxu0 %v1801
    %v1875 = vpop.f32.mrb[0].mxu0
    %v1876 = vadd.f32 0.0, %v1875
    %v1877 = vpop.f32.mrb[0].mxu0
    %1878 = vmatprep.mubr.f32.mxu0 0.0
    %1879 = vmatmul.mubr.f32.gmra.mrb[0].mxu0 %v1803
    %v1880 = vpop.f32.mrb[0].mxu0
    %v1881 = vadd.f32 0.0, %v1880
    %v1882 = vpop.f32.mrb[0].mxu0
    %1883 = vdwg.mxu0
    %v1884 = vmul.f32 %v1876, 0.35355338
    %v1885 = vmul.f32 %v1881, 0.35355338
    %v1886 = vsel %vm442, %v1884, -inf
    %1887 = vmax.xlane.f32.xlu0 %v1886
    %v1888 = vpop.xlane.xlu0 %1887
    %v1889 = vsel %vm442, %v1885, -inf
    %1890 = vmax.xlane.f32.xlu0 %v1889
    %v1891 = vpop.xlane.xlu0 %1890
    %v1892 = vsub.f32 %v1884, %v1888
    %v1893 = vsub.f32 %v1885, %v1891
    %v1894 = vmul.f32 %v1892, 1.442695
    %v1895 = vpow.pop %v1894
    %v1896 = vmul.f32 %v1893, 1.442695
    %v1897 = vpow.pop %v1896
    %v1898 = vsel %vm442, %v1895, 0.0
    %1899 = vadd.xlane.f32.xlu0 %v1898
    %v1900 = vpop.xlane.xlu0 %1899
    %v1901 = vsel %vm442, %v1897, 0.0
    %1902 = vadd.xlane.f32.xlu0 %v1901
    %v1903 = vpop.xlane.xlu0 %1902
    %v1904 = vrcp.pop %v1900
    %v1905 = vrcp.pop %v1903
    %v1906 = vmul.f32 %v1895, %v1904
    %v1907 = vmul.f32 %v1897, %v1905
    %1908 = vrot.lane.b32.xlu0 %v344, 40
    %v1909 = vpop.permute.xlu0 %1908
    %1910 = vrot.lane.b32.xlu0 %v347, 40
    %v1911 = vpop.permute.xlu0 %1910
    %v1915 = vsel %vm442, %v1906, 0
    %v1918 = vsel %vm442, %v1907, 0
    %1920 = vmatprep.subr.mxu0 0.0
    %1921 = vmatpush1.msra.mxu0 %v1909
    %1922 = vmatprep.subr.mxu0 0.0
    %1923 = vmatpush1.msra.mxu0 %v1911
    %1924 = vmatprep.subr.mxu0 0.0
    %1925 = vmatpush1.msra.mxu0 0.0
    %1926 = vmatprep.subr.mxu0 0.0
    %1927 = vmatpush1.msra.mxu0 0.0
    %1928 = vmatprep.subr.mxu0 0.0
    %1929 = vmatpush1.msra.mxu0 0.0
    %1930 = vmatprep.subr.mxu0 0.0
    %1931 = vmatpush1.msra.mxu0 0.0
    %1932 = vmatprep.subr.mxu0 0.0
    %1933 = vmatpush1.msra.mxu0 0.0
    %1934 = vmatprep.subr.mxu0 0.0
    %1935 = vmatpush1.msra.mxu0 0.0
    %1936 = vmatprep.subr.mxu0 0.0
    %1937 = vmatpush1.msra.mxu0 0.0
    %1938 = vmatprep.subr.mxu0 0.0
    %1939 = vmatpush1.msra.mxu0 0.0
    %1940 = vmatprep.subr.mxu0 0.0
    %1941 = vmatpush1.msra.mxu0 0.0
    %1942 = vmatprep.subr.mxu0 0.0
    %1943 = vmatpush1.msra.mxu0 0.0
    %1944 = vmatprep.subr.mxu0 0.0
    %1945 = vmatpush1.msra.mxu0 0.0
    %1946 = vmatprep.subr.mxu0 0.0
    %1947 = vmatpush1.msra.mxu0 0.0
    %1948 = vmatprep.subr.mxu0 0.0
    %1949 = vmatpush1.msra.mxu0 0.0
    %1950 = vmatprep.subr.mxu0 0.0
    %1951 = vmatpush1.msra.mxu0 0.0
    %1952 = vmatprep.subr.mxu0 0.0
    %1953 = vmatpush1.msra.mxu0 0.0
    %1954 = vmatprep.subr.mxu0 0.0
    %1955 = vmatpush1.msra.mxu0 0.0
    %1956 = vmatprep.subr.mxu0 0.0
    %1957 = vmatpush1.msra.mxu0 0.0
    %1958 = vmatprep.subr.mxu0 0.0
    %1959 = vmatpush1.msra.mxu0 0.0
    %1960 = vmatprep.subr.mxu0 0.0
    %1961 = vmatpush1.msra.mxu0 0.0
    %1962 = vmatprep.subr.mxu0 0.0
    %1963 = vmatpush1.msra.mxu0 0.0
    %1964 = vmatprep.subr.mxu0 0.0
    %1965 = vmatpush1.msra.mxu0 0.0
    %1966 = vmatprep.subr.mxu0 0.0
    %1967 = vmatpush1.msra.mxu0 0.0
    %1968 = vmatprep.subr.mxu0 0.0
    %1969 = vmatpush1.msra.mxu0 0.0
    %1970 = vmatprep.subr.mxu0 0.0
    %1971 = vmatpush1.msra.mxu0 0.0
    %1972 = vmatprep.subr.mxu0 0.0
    %1973 = vmatpush1.msra.mxu0 0.0
    %1974 = vmatprep.subr.mxu0 0.0
    %1975 = vmatpush1.msra.mxu0 0.0
    %1976 = vmatprep.subr.mxu0 0.0
    %1977 = vmatpush1.msra.mxu0 0.0
    %1978 = vmatprep.subr.mxu0 0.0
    %1979 = vmatpush1.msra.mxu0 0.0
    %1980 = vmatprep.subr.mxu0 0.0
    %1981 = vmatpush1.msra.mxu0 0.0
    %1982 = vmatprep.subr.mxu0 0.0
    %1983 = vmatpush1.msra.mxu0 0.0
    %1984 = vmatprep.mubr.f32.mxu0 0.0
    %1985 = vmatmul.mubr.f32.gmra.mrb[0].mxu0 %v1915
    %v1986 = vpop.f32.mrb[0].mxu0
    %v1987 = vadd.f32 0.0, %v1986
    %v1988 = vpop.f32.mrb[0].mxu0
    %1989 = vmatprep.mubr.f32.mxu0 0.0
    %1990 = vmatmul.mubr.f32.gmra.mrb[0].mxu0 %v1918
    %v1991 = vpop.f32.mrb[0].mxu0
    %v1992 = vadd.f32 0.0, %v1991
    %v1993 = vpop.f32.mrb[0].mxu0
    %1994 = vdwg.mxu0
    %1997 = vrot.lane.b32.xlu0 %v1583, 8
    %v1998 = vpop.permute.xlu0 %1997
    %1999 = vrot.lane.b32.xlu0 %v1588, 8
    %v2000 = vpop.permute.xlu0 %1999
    %2005 = vrot.lane.b32.xlu0 %v1785, 16
    %v2006 = vpop.permute.xlu0 %2005
    %2007 = vrot.lane.b32.xlu0 %v1790, 16
    %v2008 = vpop.permute.xlu0 %2007
    %2013 = vrot.lane.b32.xlu0 %v1987, 24
    %v2014 = vpop.permute.xlu0 %2013
    %2015 = vrot.lane.b32.xlu0 %v1992, 24
    %v2016 = vpop.permute.xlu0 %2015
    %v2019 = vsel %vm356, %v1381, %v1998
    %v2020 = vsel %vm356, %v1386, %v2000
    %v2021 = vsel %vm442, %v2019, %v2006
    %v2022 = vsel %vm442, %v2020, %v2008
    %v2023 = vsel %vm1186, %v2021, %v2014
    %v2024 = vsel %vm1186, %v2022, %v2016
    %v2025 = vpack.c.bf16 %v1188, %v1187
    %v2026 = vpack.c.bf16 %v2024, %v2023
    %v2027 = vld [vmem:[%s7] sm:$0xf]
    %v2028 = vld [vmem:[%s7 + $0x4] sm:$0xf]
    %v2029 = vld [vmem:[%s7 + $0x8] sm:$0xf]
    %v2030 = vld [vmem:[%s7 + $0xc] sm:$0xf]
    %v2031 = vld [vmem:[%s8] sm:$0x1]
    %v2033 = vlaneseq
    %v2034 = vshrl.u32 %v2033, 7
    %v2035 = vsub.s32 0, %v2034
    %v2036 = vrot.slane %v2031, %v2035
    %v2042 = vunpack.c.l.b16 %v2027
    %v2043 = vunpack.c.l.b16 %v2028
    %v2044 = vunpack.c.l.b16 %v2029
    %v2045 = vunpack.c.l.b16 %v2030
    %v2046 = vpack.c.b16 %v2043, %v2042
    %v2047 = vpack.c.b16 %v2045, %v2044
    %v2051 = vsel %vm97, %v2025, 0
    %v2054 = vsel %vm97, %v2026, 0
    %2056 = vmatprep.subr.bf16.mxu0 0
    %2057 = vmatpush1.bf16.msra.mxu0 %v2046
    %2058 = vmatprep.subr.bf16.mxu0 0
    %2059 = vmatpush1.bf16.msra.mxu0 %v2047
    %2060 = vmatprep.subr.bf16.mxu0 0
    %2061 = vmatpush1.bf16.msra.mxu0 0
    %2062 = vmatprep.subr.bf16.mxu0 0
    %2063 = vmatpush1.bf16.msra.mxu0 0
    %2064 = vmatprep.subr.bf16.mxu0 0
    %2065 = vmatpush1.bf16.msra.mxu0 0
    %2066 = vmatprep.subr.bf16.mxu0 0
    %2067 = vmatpush1.bf16.msra.mxu0 0
    %2068 = vmatprep.subr.bf16.mxu0 0
    %2069 = vmatpush1.bf16.msra.mxu0 0
    %2070 = vmatprep.subr.bf16.mxu0 0
    %2071 = vmatpush1.bf16.msra.mxu0 0
    %2072 = vmatprep.subr.bf16.mxu0 0
    %2073 = vmatpush1.bf16.msra.mxu0 0
    %2074 = vmatprep.subr.bf16.mxu0 0
    %2075 = vmatpush1.bf16.msra.mxu0 0
    %2076 = vmatprep.subr.bf16.mxu0 0
    %2077 = vmatpush1.bf16.msra.mxu0 0
    %2078 = vmatprep.subr.bf16.mxu0 0
    %2079 = vmatpush1.bf16.msra.mxu0 0
    %2080 = vmatprep.subr.bf16.mxu0 0
    %2081 = vmatpush1.bf16.msra.mxu0 0
    %2082 = vmatprep.subr.bf16.mxu0 0
    %2083 = vmatpush1.bf16.msra.mxu0 0
    %2084 = vmatprep.subr.bf16.mxu0 0
    %2085 = vmatpush1.bf16.msra.mxu0 0
    %2086 = vmatprep.subr.bf16.mxu0 0
    %2087 = vmatpush1.bf16.msra.mxu0 0
    %2088 = vmatprep.mubr.bf16.mxu0 0
    %2089 = vmatmul.mubr.bf16.gmra.mrb[0].mxu0 %v2051
    %v2090 = vpop.f32.mrb[0].mxu0
    %v2091 = vadd.f32 %v2036, %v2090
    %v2092 = vpop.f32.mrb[0].mxu0
    %v2093 = vpop.f32.mrb[0].mxu0
    %v2094 = vadd.f32 %v2036, %v2093
    %v2095 = vpop.f32.mrb[0].mxu0
    %2096 = vmatprep.mubr.bf16.mxu0 0
    %2097 = vmatmul.mubr.bf16.gmra.mrb[0].mxu0 %v2054
    %v2098 = vpop.f32.mrb[0].mxu0
    %v2099 = vadd.f32 %v2036, %v2098
    %v2100 = vpop.f32.mrb[0].mxu0
    %v2101 = vpop.f32.mrb[0].mxu0
    %v2102 = vadd.f32 %v2036, %v2101
    %v2103 = vpop.f32.mrb[0].mxu0
    %2104 = vdwg.mxu0
    %v2105 = vadd.f32 %v177, %v2091
    %v2106 = vadd.f32 %v182, %v2094
    %v2107 = vadd.f32 %v187, %v2099
    %v2108 = vadd.f32 %v192, %v2102
    %v2109 = vld [vmem:[%s9] sm:$0x1]
    %v2110 = vld [vmem:[%s10] sm:$0x1]
    %v2111 = vsel %vm97, %v2105, 0.0
    %2112 = vadd.xlane.f32.xlu0 %v2111
    %v2113 = vpop.xlane.xlu0 %2112
    %v2114 = vsel %vm97, %v2106, 0.0
    %2115 = vadd.xlane.f32.xlu0 %v2114
    %v2116 = vpop.xlane.xlu0 %2115
    %v2117 = vsel %vm97, %v2107, 0.0
    %2118 = vadd.xlane.f32.xlu0 %v2117
    %v2119 = vpop.xlane.xlu0 %2118
    %v2120 = vsel %vm97, %v2108, 0.0
    %2121 = vadd.xlane.f32.xlu0 %v2120
    %v2122 = vpop.xlane.xlu0 %2121
    %v2123 = vmul.f32 %v2113, %v209
    %v2124 = vmul.f32 %v2116, %v209
    %v2125 = vmul.f32 %v2119, %v209
    %v2126 = vmul.f32 %v2122, %v209
    %v2127 = vsub.f32 %v2105, %v2123
    %v2128 = vsub.f32 %v2106, %v2124
    %v2129 = vsub.f32 %v2107, %v2125
    %v2130 = vsub.f32 %v2108, %v2126
    %v2131 = vmul.f32 %v2127, %v2127
    %v2132 = vmul.f32 %v2128, %v2128
    %v2133 = vmul.f32 %v2129, %v2129
    %v2134 = vmul.f32 %v2130, %v2130
    %v2135 = vsel %vm97, %v2131, 0.0
    %2136 = vadd.xlane.f32.xlu0 %v2135
    %v2137 = vpop.xlane.xlu0 %2136
    %v2138 = vsel %vm97, %v2132, 0.0
    %2139 = vadd.xlane.f32.xlu0 %v2138
    %v2140 = vpop.xlane.xlu0 %2139
    %v2141 = vsel %vm97, %v2133, 0.0
    %2142 = vadd.xlane.f32.xlu0 %v2141
    %v2143 = vpop.xlane.xlu0 %2142
    %v2144 = vsel %vm97, %v2134, 0.0
    %2145 = vadd.xlane.f32.xlu0 %v2144
    %v2146 = vpop.xlane.xlu0 %2145
    %v2147 = vmul.f32 %v2137, %v209
    %v2148 = vmul.f32 %v2140, %v209
    %v2149 = vmul.f32 %v2143, %v209
    %v2150 = vmul.f32 %v2146, %v209
    %v2151 = vadd.f32 %v2147, 1e-05
    %v2152 = vadd.f32 %v2148, 1e-05
    %v2153 = vadd.f32 %v2149, 1e-05
    %v2154 = vadd.f32 %v2150, 1e-05
    %v2155 = vrsqrt.pop %v2151
    %v2156 = vrsqrt.pop %v2152
    %v2157 = vrsqrt.pop %v2153
    %v2158 = vrsqrt.pop %v2154
    %v2159 = vmul.f32 %v2127, %v2155
    %v2160 = vmul.f32 %v2128, %v2156
    %v2161 = vmul.f32 %v2129, %v2157
    %v2162 = vmul.f32 %v2130, %v2158
    %v2164 = vlaneseq
    %v2165 = vshrl.u32 %v2164, 7
    %v2166 = vsub.s32 0, %v2165
    %v2167 = vrot.slane %v2109, %v2166
    %v2169 = vmul.f32 %v2159, %v2167
    %v2170 = vmul.f32 %v2160, %v2167
    %v2171 = vmul.f32 %v2161, %v2167
    %v2172 = vmul.f32 %v2162, %v2167
    %v2174 = vlaneseq
    %v2175 = vshrl.u32 %v2174, 7
    %v2176 = vsub.s32 0, %v2175
    %v2177 = vrot.slane %v2110, %v2176
    %v2179 = vadd.f32 %v2169, %v2177
    %v2180 = vadd.f32 %v2170, %v2177
    %v2181 = vadd.f32 %v2171, %v2177
    %v2182 = vadd.f32 %v2172, %v2177
    %v2183 = vpack.c.bf16 %v2180, %v2179
    %v2184 = vpack.c.bf16 %v2182, %v2181
    %v2185 = vld [vmem:[%s11] sm:$0xf]
    %v2186 = vld [vmem:[%s11 + $0x4] sm:$0xf]
    %v2187 = vld [vmem:[%s11 + $0x8] sm:$0xf]
    %v2188 = vld [vmem:[%s11 + $0xc] sm:$0xf]
    %v2189 = vld [vmem:[%s12] sm:$0x1]
    %v2191 = vlaneseq
    %v2192 = vshrl.u32 %v2191, 7
    %v2193 = vsub.s32 0, %v2192
    %v2194 = vrot.slane %v2189, %v2193
    %v2200 = vunpack.c.l.b16 %v2185
    %v2201 = vunpack.c.l.b16 %v2186
    %v2202 = vunpack.c.l.b16 %v2187
    %v2203 = vunpack.c.l.b16 %v2188
    %v2204 = vpack.c.b16 %v2201, %v2200
    %v2205 = vpack.c.b16 %v2203, %v2202
    %v2209 = vsel %vm97, %v2183, 0
    %v2212 = vsel %vm97, %v2184, 0
    %2214 = vmatprep.subr.bf16.mxu0 0
    %2215 = vmatpush1.bf16.msra.mxu0 %v2204
    %2216 = vmatprep.subr.bf16.mxu0 0
    %2217 = vmatpush1.bf16.msra.mxu0 %v2205
    %2218 = vmatprep.subr.bf16.mxu0 0
    %2219 = vmatpush1.bf16.msra.mxu0 0
    %2220 = vmatprep.subr.bf16.mxu0 0
    %2221 = vmatpush1.bf16.msra.mxu0 0
    %2222 = vmatprep.subr.bf16.mxu0 0
    %2223 = vmatpush1.bf16.msra.mxu0 0
    %2224 = vmatprep.subr.bf16.mxu0 0
    %2225 = vmatpush1.bf16.msra.mxu0 0
    %2226 = vmatprep.subr.bf16.mxu0 0
    %2227 = vmatpush1.bf16.msra.mxu0 0
    %2228 = vmatprep.subr.bf16.mxu0 0
    %2229 = vmatpush1.bf16.msra.mxu0 0
    %2230 = vmatprep.subr.bf16.mxu0 0
    %2231 = vmatpush1.bf16.msra.mxu0 0
    %2232 = vmatprep.subr.bf16.mxu0 0
    %2233 = vmatpush1.bf16.msra.mxu0 0
    %2234 = vmatprep.subr.bf16.mxu0 0
    %2235 = vmatpush1.bf16.msra.mxu0 0
    %2236 = vmatprep.subr.bf16.mxu0 0
    %2237 = vmatpush1.bf16.msra.mxu0 0
    %2238 = vmatprep.subr.bf16.mxu0 0
    %2239 = vmatpush1.bf16.msra.mxu0 0
    %2240 = vmatprep.subr.bf16.mxu0 0
    %2241 = vmatpush1.bf16.msra.mxu0 0
    %2242 = vmatprep.subr.bf16.mxu0 0
    %2243 = vmatpush1.bf16.msra.mxu0 0
    %2244 = vmatprep.subr.bf16.mxu0 0
    %2245 = vmatpush1.bf16.msra.mxu0 0
    %2246 = vmatprep.mubr.bf16.mxu0 0
    %2247 = vmatmul.mubr.bf16.gmra.mrb[0].mxu0 %v2209
    %v2248 = vpop.f32.mrb[0].mxu0
    %v2249 = vadd.f32 %v2194, %v2248
    %v2250 = vpop.f32.mrb[0].mxu0
    %v2251 = vpop.f32.mrb[0].mxu0
    %v2252 = vadd.f32 %v2194, %v2251
    %v2253 = vpop.f32.mrb[0].mxu0
    %2254 = vmatprep.mubr.bf16.mxu0 0
    %2255 = vmatmul.mubr.bf16.gmra.mrb[0].mxu0 %v2212
    %v2256 = vpop.f32.mrb[0].mxu0
    %v2257 = vadd.f32 %v2194, %v2256
    %v2258 = vpop.f32.mrb[0].mxu0
    %v2259 = vpop.f32.mrb[0].mxu0
    %v2260 = vadd.f32 %v2194, %v2259
    %v2261 = vpop.f32.mrb[0].mxu0
    %2262 = vdwg.mxu0
    %v2263 = vmul.f32 %v2249, 0.5
    %v2264 = vmul.f32 %v2252, 0.5
    %v2265 = vmul.f32 %v2257, 0.5
    %v2266 = vmul.f32 %v2260, 0.5
    %v2267 = vmul.f32 %v2249, 0.70710677
    %v2268 = vmul.f32 %v2252, 0.70710677
    %v2269 = vmul.f32 %v2257, 0.70710677
    %v2270 = vmul.f32 %v2260, 0.70710677
    %v2271 = vand.u32 2147483647, %v2267
    %v2272 = vand.u32 2147483647, %v2268
    %v2273 = vand.u32 2147483647, %v2269
    %v2274 = vand.u32 2147483647, %v2270
    %v2275 = vmul.f32 %v2271, 0.3275911
    %v2276 = vmul.f32 %v2272, 0.3275911
    %v2277 = vmul.f32 %v2273, 0.3275911
    %v2278 = vmul.f32 %v2274, 0.3275911
    %v2279 = vadd.f32 %v2275, 1.0
    %v2280 = vadd.f32 %v2276, 1.0
    %v2281 = vadd.f32 %v2277, 1.0
    %v2282 = vadd.f32 %v2278, 1.0
    %v2283 = vrcp.pop %v2279
    %v2284 = vmul.f32 1.0, %v2283
    %v2285 = vrcp.pop %v2280
    %v2286 = vmul.f32 1.0, %v2285
    %v2287 = vrcp.pop %v2281
    %v2288 = vmul.f32 1.0, %v2287
    %v2289 = vrcp.pop %v2282
    %v2290 = vmul.f32 1.0, %v2289
    %v2291 = vmul.f32 %v2284, 1.0614054
    %v2292 = vmul.f32 %v2286, 1.0614054
    %v2293 = vmul.f32 %v2288, 1.0614054
    %v2294 = vmul.f32 %v2290, 1.0614054
    %v2295 = vadd.f32 %v2291, -1.4531521
    %v2296 = vadd.f32 %v2292, -1.4531521
    %v2297 = vadd.f32 %v2293, -1.4531521
    %v2298 = vadd.f32 %v2294, -1.4531521
    %v2299 = vmul.f32 %v2295, %v2284
    %v2300 = vmul.f32 %v2296, %v2286
    %v2301 = vmul.f32 %v2297, %v2288
    %v2302 = vmul.f32 %v2298, %v2290
    %v2303 = vadd.f32 %v2299, 1.4214138
    %v2304 = vadd.f32 %v2300, 1.4214138
    %v2305 = vadd.f32 %v2301, 1.4214138
    %v2306 = vadd.f32 %v2302, 1.4214138
    %v2307 = vmul.f32 %v2303, %v2284
    %v2308 = vmul.f32 %v2304, %v2286
    %v2309 = vmul.f32 %v2305, %v2288
    %v2310 = vmul.f32 %v2306, %v2290
    %v2311 = vadd.f32 %v2307, -0.28449672
    %v2312 = vadd.f32 %v2308, -0.28449672
    %v2313 = vadd.f32 %v2309, -0.28449672
    %v2314 = vadd.f32 %v2310, -0.28449672
    %v2315 = vmul.f32 %v2311, %v2284
    %v2316 = vmul.f32 %v2312, %v2286
    %v2317 = vmul.f32 %v2313, %v2288
    %v2318 = vmul.f32 %v2314, %v2290
    %v2319 = vadd.f32 %v2315, 0.2548296
    %v2320 = vadd.f32 %v2316, 0.2548296
    %v2321 = vadd.f32 %v2317, 0.2548296
    %v2322 = vadd.f32 %v2318, 0.2548296
    %v2323 = vmul.f32 %v2319, %v2284
    %v2324 = vmul.f32 %v2320, %v2286
    %v2325 = vmul.f32 %v2321, %v2288
    %v2326 = vmul.f32 %v2322, %v2290
    %v2327 = vsub.f32 0.0, %v2271
    %v2328 = vsub.f32 0.0, %v2272
    %v2329 = vsub.f32 0.0, %v2273
    %v2330 = vsub.f32 0.0, %v2274
    %v2331 = vmul.f32 %v2327, %v2271
    %v2332 = vmul.f32 %v2328, %v2272
    %v2333 = vmul.f32 %v2329, %v2273
    %v2334 = vmul.f32 %v2330, %v2274
    %v2335 = vmul.f32 %v2331, 1.442695
    %v2336 = vpow.pop %v2335
    %v2337 = vmul.f32 %v2332, 1.442695
    %v2338 = vpow.pop %v2337
    %v2339 = vmul.f32 %v2333, 1.442695
    %v2340 = vpow.pop %v2339
    %v2341 = vmul.f32 %v2334, 1.442695
    %v2342 = vpow.pop %v2341
    %v2343 = vmul.f32 %v2323, %v2336
    %v2344 = vmul.f32 %v2324, %v2338
    %v2345 = vmul.f32 %v2325, %v2340
    %v2346 = vmul.f32 %v2326, %v2342
    %v2347 = vsub.f32 1.0, %v2343
    %v2348 = vsub.f32 1.0, %v2344
    %v2349 = vsub.f32 1.0, %v2345
    %v2350 = vsub.f32 1.0, %v2346
    %vm2351 = vcmp.ge.f32.partialorder %v2267, 0.0
    %vm2352 = vcmp.ge.f32.partialorder %v2268, 0.0
    %vm2353 = vcmp.ge.f32.partialorder %v2269, 0.0
    %vm2354 = vcmp.ge.f32.partialorder %v2270, 0.0
    %v2355 = vsub.f32 0.0, %v2347
    %v2356 = vsub.f32 0.0, %v2348
    %v2357 = vsub.f32 0.0, %v2349
    %v2358 = vsub.f32 0.0, %v2350
    %v2359 = vsel %vm2351, %v2347, %v2355
    %v2360 = vsel %vm2352, %v2348, %v2356
    %v2361 = vsel %vm2353, %v2349, %v2357
    %v2362 = vsel %vm2354, %v2350, %v2358
    %v2363 = vadd.f32 %v2359, 1.0
    %v2364 = vadd.f32 %v2360, 1.0
    %v2365 = vadd.f32 %v2361, 1.0
    %v2366 = vadd.f32 %v2362, 1.0
    %v2367 = vmul.f32 %v2263, %v2363
    %v2368 = vmul.f32 %v2264, %v2364
    %v2369 = vmul.f32 %v2265, %v2365
    %v2370 = vmul.f32 %v2266, %v2366
    %v2371 = vpack.c.bf16 %v2368, %v2367
    %v2372 = vpack.c.bf16 %v2370, %v2369
    %v2373 = vld [vmem:[%s13] sm:$0xf]
    %v2374 = vld [vmem:[%s13 + $0x4] sm:$0xf]
    %v2375 = vld [vmem:[%s13 + $0x8] sm:$0xf]
    %v2376 = vld [vmem:[%s13 + $0xc] sm:$0xf]
    %v2377 = vld [vmem:[%s13 + $0x10] sm:$0xf]
    %v2378 = vld [vmem:[%s13 + $0x14] sm:$0xf]
    %v2379 = vld [vmem:[%s13 + $0x18] sm:$0xf]
    %v2380 = vld [vmem:[%s13 + $0x1c] sm:$0xf]
    %v2381 = vld [vmem:[%s13 + $0x20] sm:$0xf]
    %v2382 = vld [vmem:[%s13 + $0x24] sm:$0xf]
    %v2383 = vld [vmem:[%s13 + $0x28] sm:$0xf]
    %v2384 = vld [vmem:[%s13 + $0x2c] sm:$0xf]
    %v2385 = vld [vmem:[%s13 + $0x30] sm:$0xf]
    %v2386 = vld [vmem:[%s13 + $0x34] sm:$0xf]
    %v2387 = vld [vmem:[%s13 + $0x38] sm:$0xf]
    %v2388 = vld [vmem:[%s13 + $0x3c] sm:$0xf]
    %v2389 = vld [vmem:[%s14] sm:$0x1]
    %v2391 = vlaneseq
    %v2392 = vshrl.u32 %v2391, 7
    %v2393 = vsub.s32 0, %v2392
    %v2394 = vrot.slane %v2389, %v2393
    %v2412 = vunpack.c.l.b16 %v2373
    %v2413 = vunpack.c.l.b16 %v2374
    %v2414 = vunpack.c.l.b16 %v2375
    %v2415 = vunpack.c.l.b16 %v2376
    %v2416 = vunpack.c.l.b16 %v2377
    %v2417 = vunpack.c.l.b16 %v2378
    %v2418 = vunpack.c.l.b16 %v2379
    %v2419 = vunpack.c.l.b16 %v2380
    %v2420 = vunpack.c.l.b16 %v2381
    %v2421 = vunpack.c.l.b16 %v2382
    %v2422 = vunpack.c.l.b16 %v2383
    %v2423 = vunpack.c.l.b16 %v2384
    %v2424 = vunpack.c.l.b16 %v2385
    %v2425 = vunpack.c.l.b16 %v2386
    %v2426 = vunpack.c.l.b16 %v2387
    %v2427 = vunpack.c.l.b16 %v2388
    %v2428 = vpack.c.b16 %v2413, %v2412
    %v2429 = vpack.c.b16 %v2415, %v2414
    %v2430 = vpack.c.b16 %v2417, %v2416
    %v2431 = vpack.c.b16 %v2419, %v2418
    %v2432 = vpack.c.b16 %v2421, %v2420
    %v2433 = vpack.c.b16 %v2423, %v2422
    %v2434 = vpack.c.b16 %v2425, %v2424
    %v2435 = vpack.c.b16 %v2427, %v2426
    %2444 = vmatprep.subr.bf16.mxu0 0
    %2445 = vmatpush1.bf16.msra.mxu0 %v2428
    %2446 = vmatprep.subr.bf16.mxu0 0
    %2447 = vmatpush1.bf16.msra.mxu0 %v2429
    %2448 = vmatprep.subr.bf16.mxu0 0
    %2449 = vmatpush1.bf16.msra.mxu0 %v2430
    %2450 = vmatprep.subr.bf16.mxu0 0
    %2451 = vmatpush1.bf16.msra.mxu0 %v2431
    %2452 = vmatprep.subr.bf16.mxu0 0
    %2453 = vmatpush1.bf16.msra.mxu0 %v2432
    %2454 = vmatprep.subr.bf16.mxu0 0
    %2455 = vmatpush1.bf16.msra.mxu0 %v2433
    %2456 = vmatprep.subr.bf16.mxu0 0
    %2457 = vmatpush1.bf16.msra.mxu0 %v2434
    %2458 = vmatprep.subr.bf16.mxu0 0
    %2459 = vmatpush1.bf16.msra.mxu0 %v2435
    %2460 = vmatprep.subr.bf16.mxu0 0
    %2461 = vmatpush1.bf16.msra.mxu0 0
    %2462 = vmatprep.subr.bf16.mxu0 0
    %2463 = vmatpush1.bf16.msra.mxu0 0
    %2464 = vmatprep.subr.bf16.mxu0 0
    %2465 = vmatpush1.bf16.msra.mxu0 0
    %2466 = vmatprep.subr.bf16.mxu0 0
    %2467 = vmatpush1.bf16.msra.mxu0 0
    %2468 = vmatprep.subr.bf16.mxu0 0
    %2469 = vmatpush1.bf16.msra.mxu0 0
    %2470 = vmatprep.subr.bf16.mxu0 0
    %2471 = vmatpush1.bf16.msra.mxu0 0
    %2472 = vmatprep.subr.bf16.mxu0 0
    %2473 = vmatpush1.bf16.msra.mxu0 0
    %2474 = vmatprep.subr.bf16.mxu0 0
    %2475 = vmatpush1.bf16.msra.mxu0 0
    %2476 = vmatprep.mubr.bf16.mxu0 0
    %2477 = vmatmul.mubr.bf16.gmra.mrb[0].mxu0 %v2371
    %v2478 = vpop.f32.mrb[0].mxu0
    %v2479 = vadd.f32 %v2394, %v2478
    %v2480 = vpop.f32.mrb[0].mxu0
    %v2481 = vpop.f32.mrb[0].mxu0
    %v2482 = vadd.f32 %v2394, %v2481
    %v2483 = vpop.f32.mrb[0].mxu0
    %2484 = vmatprep.mubr.bf16.mxu0 0
    %2485 = vmatmul.mubr.bf16.gmra.mrb[0].mxu0 %v2372
    %v2486 = vpop.f32.mrb[0].mxu0
    %v2487 = vadd.f32 %v2394, %v2486
    %v2488 = vpop.f32.mrb[0].mxu0
    %v2489 = vpop.f32.mrb[0].mxu0
    %v2490 = vadd.f32 %v2394, %v2489
    %v2491 = vpop.f32.mrb[0].mxu0
    %2492 = vdwg.mxu0
    %v2493 = vadd.f32 %v2105, %v2479
    %v2494 = vadd.f32 %v2106, %v2482
    %v2495 = vadd.f32 %v2107, %v2487
    %v2496 = vadd.f32 %v2108, %v2490
    %s2497 = scalar_lea.vmem %s3, 1
    %v2498 = vld [vmem:[%s2497] sm:$0x1]
    %s2499 = scalar_lea.vmem %s4, 1
    %v2500 = vld [vmem:[%s2499] sm:$0x1]
    %v2501 = vsel %vm97, %v2493, 0.0
    %2502 = vadd.xlane.f32.xlu0 %v2501
    %v2503 = vpop.xlane.xlu0 %2502
    %v2504 = vsel %vm97, %v2494, 0.0
    %2505 = vadd.xlane.f32.xlu0 %v2504
    %v2506 = vpop.xlane.xlu0 %2505
    %v2507 = vsel %vm97, %v2495, 0.0
    %2508 = vadd.xlane.f32.xlu0 %v2507
    %v2509 = vpop.xlane.xlu0 %2508
    %v2510 = vsel %vm97, %v2496, 0.0
    %2511 = vadd.xlane.f32.xlu0 %v2510
    %v2512 = vpop.xlane.xlu0 %2511
    %v2513 = vmul.f32 %v2503, %v209
    %v2514 = vmul.f32 %v2506, %v209
    %v2515 = vmul.f32 %v2509, %v209
    %v2516 = vmul.f32 %v2512, %v209
    %v2517 = vsub.f32 %v2493, %v2513
    %v2518 = vsub.f32 %v2494, %v2514
    %v2519 = vsub.f32 %v2495, %v2515
    %v2520 = vsub.f32 %v2496, %v2516
    %v2521 = vmul.f32 %v2517, %v2517
    %v2522 = vmul.f32 %v2518, %v2518
    %v2523 = vmul.f32 %v2519, %v2519
    %v2524 = vmul.f32 %v2520, %v2520
    %v2525 = vsel %vm97, %v2521, 0.0
    %2526 = vadd.xlane.f32.xlu0 %v2525
    %v2527 = vpop.xlane.xlu0 %2526
    %v2528 = vsel %vm97, %v2522, 0.0
    %2529 = vadd.xlane.f32.xlu0 %v2528
    %v2530 = vpop.xlane.xlu0 %2529
    %v2531 = vsel %vm97, %v2523, 0.0
    %2532 = vadd.xlane.f32.xlu0 %v2531
    %v2533 = vpop.xlane.xlu0 %2532
    %v2534 = vsel %vm97, %v2524, 0.0
    %2535 = vadd.xlane.f32.xlu0 %v2534
    %v2536 = vpop.xlane.xlu0 %2535
    %v2537 = vmul.f32 %v2527, %v209
    %v2538 = vmul.f32 %v2530, %v209
    %v2539 = vmul.f32 %v2533, %v209
    %v2540 = vmul.f32 %v2536, %v209
    %v2541 = vadd.f32 %v2537, 1e-05
    %v2542 = vadd.f32 %v2538, 1e-05
    %v2543 = vadd.f32 %v2539, 1e-05
    %v2544 = vadd.f32 %v2540, 1e-05
    %v2545 = vrsqrt.pop %v2541
    %v2546 = vrsqrt.pop %v2542
    %v2547 = vrsqrt.pop %v2543
    %v2548 = vrsqrt.pop %v2544
    %v2549 = vmul.f32 %v2517, %v2545
    %v2550 = vmul.f32 %v2518, %v2546
    %v2551 = vmul.f32 %v2519, %v2547
    %v2552 = vmul.f32 %v2520, %v2548
    %v2554 = vlaneseq
    %v2555 = vshrl.u32 %v2554, 7
    %v2556 = vsub.s32 0, %v2555
    %v2557 = vrot.slane %v2498, %v2556
    %v2559 = vmul.f32 %v2549, %v2557
    %v2560 = vmul.f32 %v2550, %v2557
    %v2561 = vmul.f32 %v2551, %v2557
    %v2562 = vmul.f32 %v2552, %v2557
    %v2564 = vlaneseq
    %v2565 = vshrl.u32 %v2564, 7
    %v2566 = vsub.s32 0, %v2565
    %v2567 = vrot.slane %v2500, %v2566
    %v2569 = vadd.f32 %v2559, %v2567
    %v2570 = vadd.f32 %v2560, %v2567
    %v2571 = vadd.f32 %v2561, %v2567
    %v2572 = vadd.f32 %v2562, %v2567
    %v2573 = vpack.c.bf16 %v2570, %v2569
    %v2574 = vpack.c.bf16 %v2572, %v2571
    %s2575 = scalar_lea.vmem %s5, 16
    %v2576 = vld [vmem:[%s2575] sm:$0xf]
    %v2577 = vld [vmem:[%s2575 + $0x4] sm:$0xf]
    %v2578 = vld [vmem:[%s2575 + $0x8] sm:$0xf]
    %v2579 = vld [vmem:[%s2575 + $0xc] sm:$0xf]
    %s2580 = scalar_lea.vmem %s6, 1
    %v2581 = vld [vmem:[%s2580] sm:$0x1]
    %v2583 = vlaneseq
    %v2584 = vshrl.u32 %v2583, 7
    %v2585 = vsub.s32 0, %v2584
    %v2586 = vrot.slane %v2581, %v2585
    %v2592 = vunpack.c.l.b16 %v2576
    %v2593 = vunpack.c.l.b16 %v2577
    %v2594 = vunpack.c.l.b16 %v2578
    %v2595 = vunpack.c.l.b16 %v2579
    %v2596 = vpack.c.b16 %v2593, %v2592
    %v2597 = vpack.c.b16 %v2595, %v2594
    %v2601 = vsel %vm97, %v2573, 0
    %v2604 = vsel %vm97, %v2574, 0
    %2606 = vmatprep.subr.bf16.mxu0 0
    %2607 = vmatpush1.bf16.msra.mxu0 %v2596
    %2608 = vmatprep.subr.bf16.mxu0 0
    %2609 = vmatpush1.bf16.msra.mxu0 %v2597
    %2610 = vmatprep.subr.bf16.mxu0 0
    %2611 = vmatpush1.bf16.msra.mxu0 0
    %2612 = vmatprep.subr.bf16.mxu0 0
    %2613 = vmatpush1.bf16.msra.mxu0 0
    %2614 = vmatprep.subr.bf16.mxu0 0
    %2615 = vmatpush1.bf16.msra.mxu0 0
    %2616 = vmatprep.subr.bf16.mxu0 0
    %2617 = vmatpush1.bf16.msra.mxu0 0
    %2618 = vmatprep.subr.bf16.mxu0 0
    %2619 = vmatpush1.bf16.msra.mxu0 0
    %2620 = vmatprep.subr.bf16.mxu0 0
    %2621 = vmatpush1.bf16.msra.mxu0 0
    %2622 = vmatprep.subr.bf16.mxu0 0
    %2623 = vmatpush1.bf16.msra.mxu0 0
    %2624 = vmatprep.subr.bf16.mxu0 0
    %2625 = vmatpush1.bf16.msra.mxu0 0
    %2626 = vmatprep.subr.bf16.mxu0 0
    %2627 = vmatpush1.bf16.msra.mxu0 0
    %2628 = vmatprep.subr.bf16.mxu0 0
    %2629 = vmatpush1.bf16.msra.mxu0 0
    %2630 = vmatprep.subr.bf16.mxu0 0
    %2631 = vmatpush1.bf16.msra.mxu0 0
    %2632 = vmatprep.subr.bf16.mxu0 0
    %2633 = vmatpush1.bf16.msra.mxu0 0
    %2634 = vmatprep.subr.bf16.mxu0 0
    %2635 = vmatpush1.bf16.msra.mxu0 0
    %2636 = vmatprep.subr.bf16.mxu0 0
    %2637 = vmatpush1.bf16.msra.mxu0 0
    %2638 = vmatprep.mubr.bf16.mxu0 0
    %2639 = vmatmul.mubr.bf16.gmra.mrb[0].mxu0 %v2601
    %v2640 = vpop.f32.mrb[0].mxu0
    %v2641 = vadd.f32 %v2586, %v2640
    %v2642 = vpop.f32.mrb[0].mxu0
    %v2643 = vpop.f32.mrb[0].mxu0
    %v2644 = vadd.f32 %v2586, %v2643
    %v2645 = vpop.f32.mrb[0].mxu0
    %2646 = vmatprep.mubr.bf16.mxu0 0
    %2647 = vmatmul.mubr.bf16.gmra.mrb[0].mxu0 %v2604
    %v2648 = vpop.f32.mrb[0].mxu0
    %v2649 = vadd.f32 %v2586, %v2648
    %v2650 = vpop.f32.mrb[0].mxu0
    %v2651 = vpop.f32.mrb[0].mxu0
    %v2652 = vadd.f32 %v2586, %v2651
    %v2653 = vpop.f32.mrb[0].mxu0
    %2654 = vdwg.mxu0
    %2657 = vrot.lane.b32.xlu0 %v2641, 96
    %v2658 = vpop.permute.xlu0 %2657
    %2659 = vrot.lane.b32.xlu0 %v2644, 96
    %v2660 = vpop.permute.xlu0 %2659
    %v2661 = vsel %vm356, %v2641, 0
    %v2663 = vsel %vm356, %v2644, 0
    %v2665 = vsel %vm356, %v2658, 0
    %v2667 = vsel %vm356, %v2660, 0
    %2669 = vmatprep.subr.mxu0 0.0
    %2670 = vmatpush1.xpose.msra.mxu0 %v2665
    %2671 = vmatprep.subr.mxu0 0.0
    %2672 = vmatpush1.xpose.msra.mxu0 %v2667
    %2673 = vmatprep.subr.mxu0 0.0
    %2674 = vmatpush1.xpose.msra.mxu0 0.0
    %2675 = vmatprep.subr.mxu0 0.0
    %2676 = vmatpush1.xpose.msra.mxu0 0.0
    %2677 = vmatprep.subr.mxu0 0.0
    %2678 = vmatpush1.xpose.msra.mxu0 0.0
    %2679 = vmatprep.subr.mxu0 0.0
    %2680 = vmatpush1.xpose.msra.mxu0 0.0
    %2681 = vmatprep.subr.mxu0 0.0
    %2682 = vmatpush1.xpose.msra.mxu0 0.0
    %2683 = vmatprep.subr.mxu0 0.0
    %2684 = vmatpush1.xpose.msra.mxu0 0.0
    %2685 = vmatprep.subr.mxu0 0.0
    %2686 = vmatpush1.xpose.msra.mxu0 0.0
    %2687 = vmatprep.subr.mxu0 0.0
    %2688 = vmatpush1.xpose.msra.mxu0 0.0
    %2689 = vmatprep.subr.mxu0 0.0
    %2690 = vmatpush1.xpose.msra.mxu0 0.0
    %2691 = vmatprep.subr.mxu0 0.0
    %2692 = vmatpush1.xpose.msra.mxu0 0.0
    %2693 = vmatprep.subr.mxu0 0.0
    %2694 = vmatpush1.xpose.msra.mxu0 0.0
    %2695 = vmatprep.subr.mxu0 0.0
    %2696 = vmatpush1.xpose.msra.mxu0 0.0
    %2697 = vmatprep.subr.mxu0 0.0
    %2698 = vmatpush1.xpose.msra.mxu0 0.0
    %2699 = vmatprep.subr.mxu0 0.0
    %2700 = vmatpush1.xpose.msra.mxu0 0.0
    %2701 = vmatprep.subr.mxu0 0.0
    %2702 = vmatpush1.xpose.msra.mxu0 0.0
    %2703 = vmatprep.subr.mxu0 0.0
    %2704 = vmatpush1.xpose.msra.mxu0 0.0
    %2705 = vmatprep.subr.mxu0 0.0
    %2706 = vmatpush1.xpose.msra.mxu0 0.0
    %2707 = vmatprep.subr.mxu0 0.0
    %2708 = vmatpush1.xpose.msra.mxu0 0.0
    %2709 = vmatprep.subr.mxu0 0.0
    %2710 = vmatpush1.xpose.msra.mxu0 0.0
    %2711 = vmatprep.subr.mxu0 0.0
    %2712 = vmatpush1.xpose.msra.mxu0 0.0
    %2713 = vmatprep.subr.mxu0 0.0
    %2714 = vmatpush1.xpose.msra.mxu0 0.0
    %2715 = vmatprep.subr.mxu0 0.0
    %2716 = vmatpush1.xpose.msra.mxu0 0.0
    %2717 = vmatprep.subr.mxu0 0.0
    %2718 = vmatpush1.xpose.msra.mxu0 0.0
    %2719 = vmatprep.subr.mxu0 0.0
    %2720 = vmatpush1.xpose.msra.mxu0 0.0
    %2721 = vmatprep.subr.mxu0 0.0
    %2722 = vmatpush1.xpose.msra.mxu0 0.0
    %2723 = vmatprep.subr.mxu0 0.0
    %2724 = vmatpush1.xpose.msra.mxu0 0.0
    %2725 = vmatprep.subr.mxu0 0.0
    %2726 = vmatpush1.xpose.msra.mxu0 0.0
    %2727 = vmatprep.subr.mxu0 0.0
    %2728 = vmatpush1.xpose.msra.mxu0 0.0
    %2729 = vmatprep.subr.mxu0 0.0
    %2730 = vmatpush1.xpose.msra.mxu0 0.0
    %2731 = vmatprep.subr.mxu0 0.0
    %2732 = vmatpush1.xpose.msra.mxu0 0.0
    %2733 = vmatprep.mubr.f32.mxu0 0.0
    %2734 = vmatmul.mubr.f32.gmra.mrb[0].mxu0 %v2661
    %v2735 = vpop.f32.mrb[0].mxu0
    %v2736 = vadd.f32 0.0, %v2735
    %v2737 = vpop.f32.mrb[0].mxu0
    %2738 = vmatprep.mubr.f32.mxu0 0.0
    %2739 = vmatmul.mubr.f32.gmra.mrb[0].mxu0 %v2663
    %v2740 = vpop.f32.mrb[0].mxu0
    %v2741 = vadd.f32 0.0, %v2740
    %v2742 = vpop.f32.mrb[0].mxu0
    %2743 = vdwg.mxu0
    %v2744 = vmul.f32 %v2736, 0.35355338
    %v2745 = vmul.f32 %v2741, 0.35355338
    %v2746 = vsel %vm442, %v2744, -inf
    %2747 = vmax.xlane.f32.xlu0 %v2746
    %v2748 = vpop.xlane.xlu0 %2747
    %v2749 = vsel %vm442, %v2745, -inf
    %2750 = vmax.xlane.f32.xlu0 %v2749
    %v2751 = vpop.xlane.xlu0 %2750
    %v2752 = vsub.f32 %v2744, %v2748
    %v2753 = vsub.f32 %v2745, %v2751
    %v2754 = vmul.f32 %v2752, 1.442695
    %v2755 = vpow.pop %v2754
    %v2756 = vmul.f32 %v2753, 1.442695
    %v2757 = vpow.pop %v2756
    %v2758 = vsel %vm442, %v2755, 0.0
    %2759 = vadd.xlane.f32.xlu0 %v2758
    %v2760 = vpop.xlane.xlu0 %2759
    %v2761 = vsel %vm442, %v2757, 0.0
    %2762 = vadd.xlane.f32.xlu0 %v2761
    %v2763 = vpop.xlane.xlu0 %2762
    %v2764 = vrcp.pop %v2760
    %v2765 = vrcp.pop %v2763
    %v2766 = vmul.f32 %v2755, %v2764
    %v2767 = vmul.f32 %v2757, %v2765
    %2768 = vrot.lane.b32.xlu0 %v2641, 64
    %v2769 = vpop.permute.xlu0 %2768
    %2770 = vrot.lane.b32.xlu0 %v2644, 64
    %v2771 = vpop.permute.xlu0 %2770
    %v2775 = vsel %vm442, %v2766, 0
    %v2778 = vsel %vm442, %v2767, 0
    %2780 = vmatprep.subr.mxu0 0.0
    %2781 = vmatpush1.msra.mxu0 %v2769
    %2782 = vmatprep.subr.mxu0 0.0
    %2783 = vmatpush1.msra.mxu0 %v2771
    %2784 = vmatprep.subr.mxu0 0.0
    %2785 = vmatpush1.msra.mxu0 0.0
    %2786 = vmatprep.subr.mxu0 0.0
    %2787 = vmatpush1.msra.mxu0 0.0
    %2788 = vmatprep.subr.mxu0 0.0
    %2789 = vmatpush1.msra.mxu0 0.0
    %2790 = vmatprep.subr.mxu0 0.0
    %2791 = vmatpush1.msra.mxu0 0.0
    %2792 = vmatprep.subr.mxu0 0.0
    %2793 = vmatpush1.msra.mxu0 0.0
    %2794 = vmatprep.subr.mxu0 0.0
    %2795 = vmatpush1.msra.mxu0 0.0
    %2796 = vmatprep.subr.mxu0 0.0
    %2797 = vmatpush1.msra.mxu0 0.0
    %2798 = vmatprep.subr.mxu0 0.0
    %2799 = vmatpush1.msra.mxu0 0.0
    %2800 = vmatprep.subr.mxu0 0.0
    %2801 = vmatpush1.msra.mxu0 0.0
    %2802 = vmatprep.subr.mxu0 0.0
    %2803 = vmatpush1.msra.mxu0 0.0
    %2804 = vmatprep.subr.mxu0 0.0
    %2805 = vmatpush1.msra.mxu0 0.0
    %2806 = vmatprep.subr.mxu0 0.0
    %2807 = vmatpush1.msra.mxu0 0.0
    %2808 = vmatprep.subr.mxu0 0.0
    %2809 = vmatpush1.msra.mxu0 0.0
    %2810 = vmatprep.subr.mxu0 0.0
    %2811 = vmatpush1.msra.mxu0 0.0
    %2812 = vmatprep.subr.mxu0 0.0
    %2813 = vmatpush1.msra.mxu0 0.0
    %2814 = vmatprep.subr.mxu0 0.0
    %2815 = vmatpush1.msra.mxu0 0.0
    %2816 = vmatprep.subr.mxu0 0.0
    %2817 = vmatpush1.msra.mxu0 0.0
    %2818 = vmatprep.subr.mxu0 0.0
    %2819 = vmatpush1.msra.mxu0 0.0
    %2820 = vmatprep.subr.mxu0 0.0
    %2821 = vmatpush1.msra.mxu0 0.0
    %2822 = vmatprep.subr.mxu0 0.0
    %2823 = vmatpush1.msra.mxu0 0.0
    %2824 = vmatprep.subr.mxu0 0.0
    %2825 = vmatpush1.msra.mxu0 0.0
    %2826 = vmatprep.subr.mxu0 0.0
    %2827 = vmatpush1.msra.mxu0 0.0
    %2828 = vmatprep.subr.mxu0 0.0
    %2829 = vmatpush1.msra.mxu0 0.0
    %2830 = vmatprep.subr.mxu0 0.0
    %2831 = vmatpush1.msra.mxu0 0.0
    %2832 = vmatprep.subr.mxu0 0.0
    %2833 = vmatpush1.msra.mxu0 0.0
    %2834 = vmatprep.subr.mxu0 0.0
    %2835 = vmatpush1.msra.mxu0 0.0
    %2836 = vmatprep.subr.mxu0 0.0
    %2837 = vmatpush1.msra.mxu0 0.0
    %2838 = vmatprep.subr.mxu0 0.0
    %2839 = vmatpush1.msra.mxu0 0.0
    %2840 = vmatprep.subr.mxu0 0.0
    %2841 = vmatpush1.msra.mxu0 0.0
    %2842 = vmatprep.subr.mxu0 0.0
    %2843 = vmatpush1.msra.mxu0 0.0
    %2844 = vmatprep.mubr.f32.mxu0 0.0
    %2845 = vmatmul.mubr.f32.gmra.mrb[0].mxu0 %v2775
    %v2846 = vpop.f32.mrb[0].mxu0
    %v2847 = vadd.f32 0.0, %v2846
    %v2848 = vpop.f32.mrb[0].mxu0
    %2849 = vmatprep.mubr.f32.mxu0 0.0
    %2850 = vmatmul.mubr.f32.gmra.mrb[0].mxu0 %v2778
    %v2851 = vpop.f32.mrb[0].mxu0
    %v2852 = vadd.f32 0.0, %v2851
    %v2853 = vpop.f32.mrb[0].mxu0
    %2854 = vdwg.mxu0
    %2855 = vrot.lane.b32.xlu0 %v2641, 120
    %v2856 = vpop.permute.xlu0 %2855
    %2857 = vrot.lane.b32.xlu0 %v2644, 120
    %v2858 = vpop.permute.xlu0 %2857
    %2859 = vrot.lane.b32.xlu0 %v2641, 88
    %v2860 = vpop.permute.xlu0 %2859
    %2861 = vrot.lane.b32.xlu0 %v2644, 88
    %v2862 = vpop.permute.xlu0 %2861
    %v2863 = vsel %vm356, %v2856, 0
    %v2865 = vsel %vm356, %v2858, 0
    %v2867 = vsel %vm356, %v2860, 0
    %v2869 = vsel %vm356, %v2862, 0
    %2871 = vmatprep.subr.mxu0 0.0
    %2872 = vmatpush1.xpose.msra.mxu0 %v2867
    %2873 = vmatprep.subr.mxu0 0.0
    %2874 = vmatpush1.xpose.msra.mxu0 %v2869
    %2875 = vmatprep.subr.mxu0 0.0
    %2876 = vmatpush1.xpose.msra.mxu0 0.0
    %2877 = vmatprep.subr.mxu0 0.0
    %2878 = vmatpush1.xpose.msra.mxu0 0.0
    %2879 = vmatprep.subr.mxu0 0.0
    %2880 = vmatpush1.xpose.msra.mxu0 0.0
    %2881 = vmatprep.subr.mxu0 0.0
    %2882 = vmatpush1.xpose.msra.mxu0 0.0
    %2883 = vmatprep.subr.mxu0 0.0
    %2884 = vmatpush1.xpose.msra.mxu0 0.0
    %2885 = vmatprep.subr.mxu0 0.0
    %2886 = vmatpush1.xpose.msra.mxu0 0.0
    %2887 = vmatprep.subr.mxu0 0.0
    %2888 = vmatpush1.xpose.msra.mxu0 0.0
    %2889 = vmatprep.subr.mxu0 0.0
    %2890 = vmatpush1.xpose.msra.mxu0 0.0
    %2891 = vmatprep.subr.mxu0 0.0
    %2892 = vmatpush1.xpose.msra.mxu0 0.0
    %2893 = vmatprep.subr.mxu0 0.0
    %2894 = vmatpush1.xpose.msra.mxu0 0.0
    %2895 = vmatprep.subr.mxu0 0.0
    %2896 = vmatpush1.xpose.msra.mxu0 0.0
    %2897 = vmatprep.subr.mxu0 0.0
    %2898 = vmatpush1.xpose.msra.mxu0 0.0
    %2899 = vmatprep.subr.mxu0 0.0
    %2900 = vmatpush1.xpose.msra.mxu0 0.0
    %2901 = vmatprep.subr.mxu0 0.0
    %2902 = vmatpush1.xpose.msra.mxu0 0.0
    %2903 = vmatprep.subr.mxu0 0.0
    %2904 = vmatpush1.xpose.msra.mxu0 0.0
    %2905 = vmatprep.subr.mxu0 0.0
    %2906 = vmatpush1.xpose.msra.mxu0 0.0
    %2907 = vmatprep.subr.mxu0 0.0
    %2908 = vmatpush1.xpose.msra.mxu0 0.0
    %2909 = vmatprep.subr.mxu0 0.0
    %2910 = vmatpush1.xpose.msra.mxu0 0.0
    %2911 = vmatprep.subr.mxu0 0.0
    %2912 = vmatpush1.xpose.msra.mxu0 0.0
    %2913 = vmatprep.subr.mxu0 0.0
    %2914 = vmatpush1.xpose.msra.mxu0 0.0
    %2915 = vmatprep.subr.mxu0 0.0
    %2916 = vmatpush1.xpose.msra.mxu0 0.0
    %2917 = vmatprep.subr.mxu0 0.0
    %2918 = vmatpush1.xpose.msra.mxu0 0.0
    %2919 = vmatprep.subr.mxu0 0.0
    %2920 = vmatpush1.xpose.msra.mxu0 0.0
    %2921 = vmatprep.subr.mxu0 0.0
    %2922 = vmatpush1.xpose.msra.mxu0 0.0
    %2923 = vmatprep.subr.mxu0 0.0
    %2924 = vmatpush1.xpose.msra.mxu0 0.0
    %2925 = vmatprep.subr.mxu0 0.0
    %2926 = vmatpush1.xpose.msra.mxu0 0.0
    %2927 = vmatprep.subr.mxu0 0.0
    %2928 = vmatpush1.xpose.msra.mxu0 0.0
    %2929 = vmatprep.subr.mxu0 0.0
    %2930 = vmatpush1.xpose.msra.mxu0 0.0
    %2931 = vmatprep.subr.mxu0 0.0
    %2932 = vmatpush1.xpose.msra.mxu0 0.0
    %2933 = vmatprep.subr.mxu0 0.0
    %2934 = vmatpush1.xpose.msra.mxu0 0.0
    %2935 = vmatprep.mubr.f32.mxu0 0.0
    %2936 = vmatmul.mubr.f32.gmra.mrb[0].mxu0 %v2863
    %v2937 = vpop.f32.mrb[0].mxu0
    %v2938 = vadd.f32 0.0, %v2937
    %v2939 = vpop.f32.mrb[0].mxu0
    %2940 = vmatprep.mubr.f32.mxu0 0.0
    %2941 = vmatmul.mubr.f32.gmra.mrb[0].mxu0 %v2865
    %v2942 = vpop.f32.mrb[0].mxu0
    %v2943 = vadd.f32 0.0, %v2942
    %v2944 = vpop.f32.mrb[0].mxu0
    %2945 = vdwg.mxu0
    %v2946 = vmul.f32 %v2938, 0.35355338
    %v2947 = vmul.f32 %v2943, 0.35355338
    %v2948 = vsel %vm442, %v2946, -inf
    %2949 = vmax.xlane.f32.xlu0 %v2948
    %v2950 = vpop.xlane.xlu0 %2949
    %v2951 = vsel %vm442, %v2947, -inf
    %2952 = vmax.xlane.f32.xlu0 %v2951
    %v2953 = vpop.xlane.xlu0 %2952
    %v2954 = vsub.f32 %v2946, %v2950
    %v2955 = vsub.f32 %v2947, %v2953
    %v2956 = vmul.f32 %v2954, 1.442695
    %v2957 = vpow.pop %v2956
    %v2958 = vmul.f32 %v2955, 1.442695
    %v2959 = vpow.pop %v2958
    %v2960 = vsel %vm442, %v2957, 0.0
    %2961 = vadd.xlane.f32.xlu0 %v2960
    %v2962 = vpop.xlane.xlu0 %2961
    %v2963 = vsel %vm442, %v2959, 0.0
    %2964 = vadd.xlane.f32.xlu0 %v2963
    %v2965 = vpop.xlane.xlu0 %2964
    %v2966 = vrcp.pop %v2962
    %v2967 = vrcp.pop %v2965
    %v2968 = vmul.f32 %v2957, %v2966
    %v2969 = vmul.f32 %v2959, %v2967
    %2970 = vrot.lane.b32.xlu0 %v2641, 56
    %v2971 = vpop.permute.xlu0 %2970
    %2972 = vrot.lane.b32.xlu0 %v2644, 56
    %v2973 = vpop.permute.xlu0 %2972
    %v2977 = vsel %vm442, %v2968, 0
    %v2980 = vsel %vm442, %v2969, 0
    %2982 = vmatprep.subr.mxu0 0.0
    %2983 = vmatpush1.msra.mxu0 %v2971
    %2984 = vmatprep.subr.mxu0 0.0
    %2985 = vmatpush1.msra.mxu0 %v2973
    %2986 = vmatprep.subr.mxu0 0.0
    %2987 = vmatpush1.msra.mxu0 0.0
    %2988 = vmatprep.subr.mxu0 0.0
    %2989 = vmatpush1.msra.mxu0 0.0
    %2990 = vmatprep.subr.mxu0 0.0
    %2991 = vmatpush1.msra.mxu0 0.0
    %2992 = vmatprep.subr.mxu0 0.0
    %2993 = vmatpush1.msra.mxu0 0.0
    %2994 = vmatprep.subr.mxu0 0.0
    %2995 = vmatpush1.msra.mxu0 0.0
    %2996 = vmatprep.subr.mxu0 0.0
    %2997 = vmatpush1.msra.mxu0 0.0
    %2998 = vmatprep.subr.mxu0 0.0
    %2999 = vmatpush1.msra.mxu0 0.0
    %3000 = vmatprep.subr.mxu0 0.0
    %3001 = vmatpush1.msra.mxu0 0.0
    %3002 = vmatprep.subr.mxu0 0.0
    %3003 = vmatpush1.msra.mxu0 0.0
    %3004 = vmatprep.subr.mxu0 0.0
    %3005 = vmatpush1.msra.mxu0 0.0
    %3006 = vmatprep.subr.mxu0 0.0
    %3007 = vmatpush1.msra.mxu0 0.0
    %3008 = vmatprep.subr.mxu0 0.0
    %3009 = vmatpush1.msra.mxu0 0.0
    %3010 = vmatprep.subr.mxu0 0.0
    %3011 = vmatpush1.msra.mxu0 0.0
    %3012 = vmatprep.subr.mxu0 0.0
    %3013 = vmatpush1.msra.mxu0 0.0
    %3014 = vmatprep.subr.mxu0 0.0
    %3015 = vmatpush1.msra.mxu0 0.0
    %3016 = vmatprep.subr.mxu0 0.0
    %3017 = vmatpush1.msra.mxu0 0.0
    %3018 = vmatprep.subr.mxu0 0.0
    %3019 = vmatpush1.msra.mxu0 0.0
    %3020 = vmatprep.subr.mxu0 0.0
    %3021 = vmatpush1.msra.mxu0 0.0
    %3022 = vmatprep.subr.mxu0 0.0
    %3023 = vmatpush1.msra.mxu0 0.0
    %3024 = vmatprep.subr.mxu0 0.0
    %3025 = vmatpush1.msra.mxu0 0.0
    %3026 = vmatprep.subr.mxu0 0.0
    %3027 = vmatpush1.msra.mxu0 0.0
    %3028 = vmatprep.subr.mxu0 0.0
    %3029 = vmatpush1.msra.mxu0 0.0
    %3030 = vmatprep.subr.mxu0 0.0
    %3031 = vmatpush1.msra.mxu0 0.0
    %3032 = vmatprep.subr.mxu0 0.0
    %3033 = vmatpush1.msra.mxu0 0.0
    %3034 = vmatprep.subr.mxu0 0.0
    %3035 = vmatpush1.msra.mxu0 0.0
    %3036 = vmatprep.subr.mxu0 0.0
    %3037 = vmatpush1.msra.mxu0 0.0
    %3038 = vmatprep.subr.mxu0 0.0
    %3039 = vmatpush1.msra.mxu0 0.0
    %3040 = vmatprep.subr.mxu0 0.0
    %3041 = vmatpush1.msra.mxu0 0.0
    %3042 = vmatprep.subr.mxu0 0.0
    %3043 = vmatpush1.msra.mxu0 0.0
    %3044 = vmatprep.subr.mxu0 0.0
    %3045 = vmatpush1.msra.mxu0 0.0
    %3046 = vmatprep.mubr.f32.mxu0 0.0
    %3047 = vmatmul.mubr.f32.gmra.mrb[0].mxu0 %v2977
    %v3048 = vpop.f32.mrb[0].mxu0
    %v3049 = vadd.f32 0.0, %v3048
    %v3050 = vpop.f32.mrb[0].mxu0
    %3051 = vmatprep.mubr.f32.mxu0 0.0
    %3052 = vmatmul.mubr.f32.gmra.mrb[0].mxu0 %v2980
    %v3053 = vpop.f32.mrb[0].mxu0
    %v3054 = vadd.f32 0.0, %v3053
    %v3055 = vpop.f32.mrb[0].mxu0
    %3056 = vdwg.mxu0
    %3057 = vrot.lane.b32.xlu0 %v2641, 112
    %v3058 = vpop.permute.xlu0 %3057
    %3059 = vrot.lane.b32.xlu0 %v2644, 112
    %v3060 = vpop.permute.xlu0 %3059
    %3061 = vrot.lane.b32.xlu0 %v2641, 80
    %v3062 = vpop.permute.xlu0 %3061
    %3063 = vrot.lane.b32.xlu0 %v2644, 80
    %v3064 = vpop.permute.xlu0 %3063
    %v3065 = vsel %vm356, %v3058, 0
    %v3067 = vsel %vm356, %v3060, 0
    %v3069 = vsel %vm356, %v3062, 0
    %v3071 = vsel %vm356, %v3064, 0
    %3073 = vmatprep.subr.mxu0 0.0
    %3074 = vmatpush1.xpose.msra.mxu0 %v3069
    %3075 = vmatprep.subr.mxu0 0.0
    %3076 = vmatpush1.xpose.msra.mxu0 %v3071
    %3077 = vmatprep.subr.mxu0 0.0
    %3078 = vmatpush1.xpose.msra.mxu0 0.0
    %3079 = vmatprep.subr.mxu0 0.0
    %3080 = vmatpush1.xpose.msra.mxu0 0.0
    %3081 = vmatprep.subr.mxu0 0.0
    %3082 = vmatpush1.xpose.msra.mxu0 0.0
    %3083 = vmatprep.subr.mxu0 0.0
    %3084 = vmatpush1.xpose.msra.mxu0 0.0
    %3085 = vmatprep.subr.mxu0 0.0
    %3086 = vmatpush1.xpose.msra.mxu0 0.0
    %3087 = vmatprep.subr.mxu0 0.0
    %3088 = vmatpush1.xpose.msra.mxu0 0.0
    %3089 = vmatprep.subr.mxu0 0.0
    %3090 = vmatpush1.xpose.msra.mxu0 0.0
    %3091 = vmatprep.subr.mxu0 0.0
    %3092 = vmatpush1.xpose.msra.mxu0 0.0
    %3093 = vmatprep.subr.mxu0 0.0
    %3094 = vmatpush1.xpose.msra.mxu0 0.0
    %3095 = vmatprep.subr.mxu0 0.0
    %3096 = vmatpush1.xpose.msra.mxu0 0.0
    %3097 = vmatprep.subr.mxu0 0.0
    %3098 = vmatpush1.xpose.msra.mxu0 0.0
    %3099 = vmatprep.subr.mxu0 0.0
    %3100 = vmatpush1.xpose.msra.mxu0 0.0
    %3101 = vmatprep.subr.mxu0 0.0
    %3102 = vmatpush1.xpose.msra.mxu0 0.0
    %3103 = vmatprep.subr.mxu0 0.0
    %3104 = vmatpush1.xpose.msra.mxu0 0.0
    %3105 = vmatprep.subr.mxu0 0.0
    %3106 = vmatpush1.xpose.msra.mxu0 0.0
    %3107 = vmatprep.subr.mxu0 0.0
    %3108 = vmatpush1.xpose.msra.mxu0 0.0
    %3109 = vmatprep.subr.mxu0 0.0
    %3110 = vmatpush1.xpose.msra.mxu0 0.0
    %3111 = vmatprep.subr.mxu0 0.0
    %3112 = vmatpush1.xpose.msra.mxu0 0.0
    %3113 = vmatprep.subr.mxu0 0.0
    %3114 = vmatpush1.xpose.msra.mxu0 0.0
    %3115 = vmatprep.subr.mxu0 0.0
    %3116 = vmatpush1.xpose.msra.mxu0 0.0
    %3117 = vmatprep.subr.mxu0 0.0
    %3118 = vmatpush1.xpose.msra.mxu0 0.0
    %3119 = vmatprep.subr.mxu0 0.0
    %3120 = vmatpush1.xpose.msra.mxu0 0.0
    %3121 = vmatprep.subr.mxu0 0.0
    %3122 = vmatpush1.xpose.msra.mxu0 0.0
    %3123 = vmatprep.subr.mxu0 0.0
    %3124 = vmatpush1.xpose.msra.mxu0 0.0
    %3125 = vmatprep.subr.mxu0 0.0
    %3126 = vmatpush1.xpose.msra.mxu0 0.0
    %3127 = vmatprep.subr.mxu0 0.0
    %3128 = vmatpush1.xpose.msra.mxu0 0.0
    %3129 = vmatprep.subr.mxu0 0.0
    %3130 = vmatpush1.xpose.msra.mxu0 0.0
    %3131 = vmatprep.subr.mxu0 0.0
    %3132 = vmatpush1.xpose.msra.mxu0 0.0
    %3133 = vmatprep.subr.mxu0 0.0
    %3134 = vmatpush1.xpose.msra.mxu0 0.0
    %3135 = vmatprep.subr.mxu0 0.0
    %3136 = vmatpush1.xpose.msra.mxu0 0.0
    %3137 = vmatprep.mubr.f32.mxu0 0.0
    %3138 = vmatmul.mubr.f32.gmra.mrb[0].mxu0 %v3065
    %v3139 = vpop.f32.mrb[0].mxu0
    %v3140 = vadd.f32 0.0, %v3139
    %v3141 = vpop.f32.mrb[0].mxu0
    %3142 = vmatprep.mubr.f32.mxu0 0.0
    %3143 = vmatmul.mubr.f32.gmra.mrb[0].mxu0 %v3067
    %v3144 = vpop.f32.mrb[0].mxu0
    %v3145 = vadd.f32 0.0, %v3144
    %v3146 = vpop.f32.mrb[0].mxu0
    %3147 = vdwg.mxu0
    %v3148 = vmul.f32 %v3140, 0.35355338
    %v3149 = vmul.f32 %v3145, 0.35355338
    %v3150 = vsel %vm442, %v3148, -inf
    %3151 = vmax.xlane.f32.xlu0 %v3150
    %v3152 = vpop.xlane.xlu0 %3151
    %v3153 = vsel %vm442, %v3149, -inf
    %3154 = vmax.xlane.f32.xlu0 %v3153
    %v3155 = vpop.xlane.xlu0 %3154
    %v3156 = vsub.f32 %v3148, %v3152
    %v3157 = vsub.f32 %v3149, %v3155
    %v3158 = vmul.f32 %v3156, 1.442695
    %v3159 = vpow.pop %v3158
    %v3160 = vmul.f32 %v3157, 1.442695
    %v3161 = vpow.pop %v3160
    %v3162 = vsel %vm442, %v3159, 0.0
    %3163 = vadd.xlane.f32.xlu0 %v3162
    %v3164 = vpop.xlane.xlu0 %3163
    %v3165 = vsel %vm442, %v3161, 0.0
    %3166 = vadd.xlane.f32.xlu0 %v3165
    %v3167 = vpop.xlane.xlu0 %3166
    %v3168 = vrcp.pop %v3164
    %v3169 = vrcp.pop %v3167
    %v3170 = vmul.f32 %v3159, %v3168
    %v3171 = vmul.f32 %v3161, %v3169
    %3172 = vrot.lane.b32.xlu0 %v2641, 48
    %v3173 = vpop.permute.xlu0 %3172
    %3174 = vrot.lane.b32.xlu0 %v2644, 48
    %v3175 = vpop.permute.xlu0 %3174
    %v3179 = vsel %vm442, %v3170, 0
    %v3182 = vsel %vm442, %v3171, 0
    %3184 = vmatprep.subr.mxu0 0.0
    %3185 = vmatpush1.msra.mxu0 %v3173
    %3186 = vmatprep.subr.mxu0 0.0
    %3187 = vmatpush1.msra.mxu0 %v3175
    %3188 = vmatprep.subr.mxu0 0.0
    %3189 = vmatpush1.msra.mxu0 0.0
    %3190 = vmatprep.subr.mxu0 0.0
    %3191 = vmatpush1.msra.mxu0 0.0
    %3192 = vmatprep.subr.mxu0 0.0
    %3193 = vmatpush1.msra.mxu0 0.0
    %3194 = vmatprep.subr.mxu0 0.0
    %3195 = vmatpush1.msra.mxu0 0.0
    %3196 = vmatprep.subr.mxu0 0.0
    %3197 = vmatpush1.msra.mxu0 0.0
    %3198 = vmatprep.subr.mxu0 0.0
    %3199 = vmatpush1.msra.mxu0 0.0
    %3200 = vmatprep.subr.mxu0 0.0
    %3201 = vmatpush1.msra.mxu0 0.0
    %3202 = vmatprep.subr.mxu0 0.0
    %3203 = vmatpush1.msra.mxu0 0.0
    %3204 = vmatprep.subr.mxu0 0.0
    %3205 = vmatpush1.msra.mxu0 0.0
    %3206 = vmatprep.subr.mxu0 0.0
    %3207 = vmatpush1.msra.mxu0 0.0
    %3208 = vmatprep.subr.mxu0 0.0
    %3209 = vmatpush1.msra.mxu0 0.0
    %3210 = vmatprep.subr.mxu0 0.0
    %3211 = vmatpush1.msra.mxu0 0.0
    %3212 = vmatprep.subr.mxu0 0.0
    %3213 = vmatpush1.msra.mxu0 0.0
    %3214 = vmatprep.subr.mxu0 0.0
    %3215 = vmatpush1.msra.mxu0 0.0
    %3216 = vmatprep.subr.mxu0 0.0
    %3217 = vmatpush1.msra.mxu0 0.0
    %3218 = vmatprep.subr.mxu0 0.0
    %3219 = vmatpush1.msra.mxu0 0.0
    %3220 = vmatprep.subr.mxu0 0.0
    %3221 = vmatpush1.msra.mxu0 0.0
    %3222 = vmatprep.subr.mxu0 0.0
    %3223 = vmatpush1.msra.mxu0 0.0
    %3224 = vmatprep.subr.mxu0 0.0
    %3225 = vmatpush1.msra.mxu0 0.0
    %3226 = vmatprep.subr.mxu0 0.0
    %3227 = vmatpush1.msra.mxu0 0.0
    %3228 = vmatprep.subr.mxu0 0.0
    %3229 = vmatpush1.msra.mxu0 0.0
    %3230 = vmatprep.subr.mxu0 0.0
    %3231 = vmatpush1.msra.mxu0 0.0
    %3232 = vmatprep.subr.mxu0 0.0
    %3233 = vmatpush1.msra.mxu0 0.0
    %3234 = vmatprep.subr.mxu0 0.0
    %3235 = vmatpush1.msra.mxu0 0.0
    %3236 = vmatprep.subr.mxu0 0.0
    %3237 = vmatpush1.msra.mxu0 0.0
    %3238 = vmatprep.subr.mxu0 0.0
    %3239 = vmatpush1.msra.mxu0 0.0
    %3240 = vmatprep.subr.mxu0 0.0
    %3241 = vmatpush1.msra.mxu0 0.0
    %3242 = vmatprep.subr.mxu0 0.0
    %3243 = vmatpush1.msra.mxu0 0.0
    %3244 = vmatprep.subr.mxu0 0.0
    %3245 = vmatpush1.msra.mxu0 0.0
    %3246 = vmatprep.subr.mxu0 0.0
    %3247 = vmatpush1.msra.mxu0 0.0
    %3248 = vmatprep.mubr.f32.mxu0 0.0
    %3249 = vmatmul.mubr.f32.gmra.mrb[0].mxu0 %v3179
    %v3250 = vpop.f32.mrb[0].mxu0
    %v3251 = vadd.f32 0.0, %v3250
    %v3252 = vpop.f32.mrb[0].mxu0
    %3253 = vmatprep.mubr.f32.mxu0 0.0
    %3254 = vmatmul.mubr.f32.gmra.mrb[0].mxu0 %v3182
    %v3255 = vpop.f32.mrb[0].mxu0
    %v3256 = vadd.f32 0.0, %v3255
    %v3257 = vpop.f32.mrb[0].mxu0
    %3258 = vdwg.mxu0
    %3259 = vrot.lane.b32.xlu0 %v2641, 104
    %v3260 = vpop.permute.xlu0 %3259
    %3261 = vrot.lane.b32.xlu0 %v2644, 104
    %v3262 = vpop.permute.xlu0 %3261
    %3263 = vrot.lane.b32.xlu0 %v2641, 72
    %v3264 = vpop.permute.xlu0 %3263
    %3265 = vrot.lane.b32.xlu0 %v2644, 72
    %v3266 = vpop.permute.xlu0 %3265
    %v3267 = vsel %vm356, %v3260, 0
    %v3269 = vsel %vm356, %v3262, 0
    %v3271 = vsel %vm356, %v3264, 0
    %v3273 = vsel %vm356, %v3266, 0
    %3275 = vmatprep.subr.mxu0 0.0
    %3276 = vmatpush1.xpose.msra.mxu0 %v3271
    %3277 = vmatprep.subr.mxu0 0.0
    %3278 = vmatpush1.xpose.msra.mxu0 %v3273
    %3279 = vmatprep.subr.mxu0 0.0
    %3280 = vmatpush1.xpose.msra.mxu0 0.0
    %3281 = vmatprep.subr.mxu0 0.0
    %3282 = vmatpush1.xpose.msra.mxu0 0.0
    %3283 = vmatprep.subr.mxu0 0.0
    %3284 = vmatpush1.xpose.msra.mxu0 0.0
    %3285 = vmatprep.subr.mxu0 0.0
    %3286 = vmatpush1.xpose.msra.mxu0 0.0
    %3287 = vmatprep.subr.mxu0 0.0
    %3288 = vmatpush1.xpose.msra.mxu0 0.0
    %3289 = vmatprep.subr.mxu0 0.0
    %3290 = vmatpush1.xpose.msra.mxu0 0.0
    %3291 = vmatprep.subr.mxu0 0.0
    %3292 = vmatpush1.xpose.msra.mxu0 0.0
    %3293 = vmatprep.subr.mxu0 0.0
    %3294 = vmatpush1.xpose.msra.mxu0 0.0
    %3295 = vmatprep.subr.mxu0 0.0
    %3296 = vmatpush1.xpose.msra.mxu0 0.0
    %3297 = vmatprep.subr.mxu0 0.0
    %3298 = vmatpush1.xpose.msra.mxu0 0.0
    %3299 = vmatprep.subr.mxu0 0.0
    %3300 = vmatpush1.xpose.msra.mxu0 0.0
    %3301 = vmatprep.subr.mxu0 0.0
    %3302 = vmatpush1.xpose.msra.mxu0 0.0
    %3303 = vmatprep.subr.mxu0 0.0
    %3304 = vmatpush1.xpose.msra.mxu0 0.0
    %3305 = vmatprep.subr.mxu0 0.0
    %3306 = vmatpush1.xpose.msra.mxu0 0.0
    %3307 = vmatprep.subr.mxu0 0.0
    %3308 = vmatpush1.xpose.msra.mxu0 0.0
    %3309 = vmatprep.subr.mxu0 0.0
    %3310 = vmatpush1.xpose.msra.mxu0 0.0
    %3311 = vmatprep.subr.mxu0 0.0
    %3312 = vmatpush1.xpose.msra.mxu0 0.0
    %3313 = vmatprep.subr.mxu0 0.0
    %3314 = vmatpush1.xpose.msra.mxu0 0.0
    %3315 = vmatprep.subr.mxu0 0.0
    %3316 = vmatpush1.xpose.msra.mxu0 0.0
    %3317 = vmatprep.subr.mxu0 0.0
    %3318 = vmatpush1.xpose.msra.mxu0 0.0
    %3319 = vmatprep.subr.mxu0 0.0
    %3320 = vmatpush1.xpose.msra.mxu0 0.0
    %3321 = vmatprep.subr.mxu0 0.0
    %3322 = vmatpush1.xpose.msra.mxu0 0.0
    %3323 = vmatprep.subr.mxu0 0.0
    %3324 = vmatpush1.xpose.msra.mxu0 0.0
    %3325 = vmatprep.subr.mxu0 0.0
    %3326 = vmatpush1.xpose.msra.mxu0 0.0
    %3327 = vmatprep.subr.mxu0 0.0
    %3328 = vmatpush1.xpose.msra.mxu0 0.0
    %3329 = vmatprep.subr.mxu0 0.0
    %3330 = vmatpush1.xpose.msra.mxu0 0.0
    %3331 = vmatprep.subr.mxu0 0.0
    %3332 = vmatpush1.xpose.msra.mxu0 0.0
    %3333 = vmatprep.subr.mxu0 0.0
    %3334 = vmatpush1.xpose.msra.mxu0 0.0
    %3335 = vmatprep.subr.mxu0 0.0
    %3336 = vmatpush1.xpose.msra.mxu0 0.0
    %3337 = vmatprep.subr.mxu0 0.0
    %3338 = vmatpush1.xpose.msra.mxu0 0.0
    %3339 = vmatprep.mubr.f32.mxu0 0.0
    %3340 = vmatmul.mubr.f32.gmra.mrb[0].mxu0 %v3267
    %v3341 = vpop.f32.mrb[0].mxu0
    %v3342 = vadd.f32 0.0, %v3341
    %v3343 = vpop.f32.mrb[0].mxu0
    %3344 = vmatprep.mubr.f32.mxu0 0.0
    %3345 = vmatmul.mubr.f32.gmra.mrb[0].mxu0 %v3269
    %v3346 = vpop.f32.mrb[0].mxu0
    %v3347 = vadd.f32 0.0, %v3346
    %v3348 = vpop.f32.mrb[0].mxu0
    %3349 = vdwg.mxu0
    %v3350 = vmul.f32 %v3342, 0.35355338
    %v3351 = vmul.f32 %v3347, 0.35355338
    %v3352 = vsel %vm442, %v3350, -inf
    %3353 = vmax.xlane.f32.xlu0 %v3352
    %v3354 = vpop.xlane.xlu0 %3353
    %v3355 = vsel %vm442, %v3351, -inf
    %3356 = vmax.xlane.f32.xlu0 %v3355
    %v3357 = vpop.xlane.xlu0 %3356
    %v3358 = vsub.f32 %v3350, %v3354
    %v3359 = vsub.f32 %v3351, %v3357
    %v3360 = vmul.f32 %v3358, 1.442695
    %v3361 = vpow.pop %v3360
    %v3362 = vmul.f32 %v3359, 1.442695
    %v3363 = vpow.pop %v3362
    %v3364 = vsel %vm442, %v3361, 0.0
    %3365 = vadd.xlane.f32.xlu0 %v3364
    %v3366 = vpop.xlane.xlu0 %3365
    %v3367 = vsel %vm442, %v3363, 0.0
    %3368 = vadd.xlane.f32.xlu0 %v3367
    %v3369 = vpop.xlane.xlu0 %3368
    %v3370 = vrcp.pop %v3366
    %v3371 = vrcp.pop %v3369
    %v3372 = vmul.f32 %v3361, %v3370
    %v3373 = vmul.f32 %v3363, %v3371
    %3374 = vrot.lane.b32.xlu0 %v2641, 40
    %v3375 = vpop.permute.xlu0 %3374
    %3376 = vrot.lane.b32.xlu0 %v2644, 40
    %v3377 = vpop.permute.xlu0 %3376
    %v3381 = vsel %vm442, %v3372, 0
    %v3384 = vsel %vm442, %v3373, 0
    %3386 = vmatprep.subr.mxu0 0.0
    %3387 = vmatpush1.msra.mxu0 %v3375
    %3388 = vmatprep.subr.mxu0 0.0
    %3389 = vmatpush1.msra.mxu0 %v3377
    %3390 = vmatprep.subr.mxu0 0.0
    %3391 = vmatpush1.msra.mxu0 0.0
    %3392 = vmatprep.subr.mxu0 0.0
    %3393 = vmatpush1.msra.mxu0 0.0
    %3394 = vmatprep.subr.mxu0 0.0
    %3395 = vmatpush1.msra.mxu0 0.0
    %3396 = vmatprep.subr.mxu0 0.0
    %3397 = vmatpush1.msra.mxu0 0.0
    %3398 = vmatprep.subr.mxu0 0.0
    %3399 = vmatpush1.msra.mxu0 0.0
    %3400 = vmatprep.subr.mxu0 0.0
    %3401 = vmatpush1.msra.mxu0 0.0
    %3402 = vmatprep.subr.mxu0 0.0
    %3403 = vmatpush1.msra.mxu0 0.0
    %3404 = vmatprep.subr.mxu0 0.0
    %3405 = vmatpush1.msra.mxu0 0.0
    %3406 = vmatprep.subr.mxu0 0.0
    %3407 = vmatpush1.msra.mxu0 0.0
    %3408 = vmatprep.subr.mxu0 0.0
    %3409 = vmatpush1.msra.mxu0 0.0
    %3410 = vmatprep.subr.mxu0 0.0
    %3411 = vmatpush1.msra.mxu0 0.0
    %3412 = vmatprep.subr.mxu0 0.0
    %3413 = vmatpush1.msra.mxu0 0.0
    %3414 = vmatprep.subr.mxu0 0.0
    %3415 = vmatpush1.msra.mxu0 0.0
    %3416 = vmatprep.subr.mxu0 0.0
    %3417 = vmatpush1.msra.mxu0 0.0
    %3418 = vmatprep.subr.mxu0 0.0
    %3419 = vmatpush1.msra.mxu0 0.0
    %3420 = vmatprep.subr.mxu0 0.0
    %3421 = vmatpush1.msra.mxu0 0.0
    %3422 = vmatprep.subr.mxu0 0.0
    %3423 = vmatpush1.msra.mxu0 0.0
    %3424 = vmatprep.subr.mxu0 0.0
    %3425 = vmatpush1.msra.mxu0 0.0
    %3426 = vmatprep.subr.mxu0 0.0
    %3427 = vmatpush1.msra.mxu0 0.0
    %3428 = vmatprep.subr.mxu0 0.0
    %3429 = vmatpush1.msra.mxu0 0.0
    %3430 = vmatprep.subr.mxu0 0.0
    %3431 = vmatpush1.msra.mxu0 0.0
    %3432 = vmatprep.subr.mxu0 0.0
    %3433 = vmatpush1.msra.mxu0 0.0
    %3434 = vmatprep.subr.mxu0 0.0
    %3435 = vmatpush1.msra.mxu0 0.0
    %3436 = vmatprep.subr.mxu0 0.0
    %3437 = vmatpush1.msra.mxu0 0.0
    %3438 = vmatprep.subr.mxu0 0.0
    %3439 = vmatpush1.msra.mxu0 0.0
    %3440 = vmatprep.subr.mxu0 0.0
    %3441 = vmatpush1.msra.mxu0 0.0
    %3442 = vmatprep.subr.mxu0 0.0
    %3443 = vmatpush1.msra.mxu0 0.0
    %3444 = vmatprep.subr.mxu0 0.0
    %3445 = vmatpush1.msra.mxu0 0.0
    %3446 = vmatprep.subr.mxu0 0.0
    %3447 = vmatpush1.msra.mxu0 0.0
    %3448 = vmatprep.subr.mxu0 0.0
    %3449 = vmatpush1.msra.mxu0 0.0
    %3450 = vmatprep.mubr.f32.mxu0 0.0
    %3451 = vmatmul.mubr.f32.gmra.mrb[0].mxu0 %v3381
    %v3452 = vpop.f32.mrb[0].mxu0
    %v3453 = vadd.f32 0.0, %v3452
    %v3454 = vpop.f32.mrb[0].mxu0
    %3455 = vmatprep.mubr.f32.mxu0 0.0
    %3456 = vmatmul.mubr.f32.gmra.mrb[0].mxu0 %v3384
    %v3457 = vpop.f32.mrb[0].mxu0
    %v3458 = vadd.f32 0.0, %v3457
    %v3459 = vpop.f32.mrb[0].mxu0
    %3460 = vdwg.mxu0
    %3463 = vrot.lane.b32.xlu0 %v3049, 8
    %v3464 = vpop.permute.xlu0 %3463
    %3465 = vrot.lane.b32.xlu0 %v3054, 8
    %v3466 = vpop.permute.xlu0 %3465
    %3471 = vrot.lane.b32.xlu0 %v3251, 16
    %v3472 = vpop.permute.xlu0 %3471
    %3473 = vrot.lane.b32.xlu0 %v3256, 16
    %v3474 = vpop.permute.xlu0 %3473
    %3479 = vrot.lane.b32.xlu0 %v3453, 24
    %v3480 = vpop.permute.xlu0 %3479
    %3481 = vrot.lane.b32.xlu0 %v3458, 24
    %v3482 = vpop.permute.xlu0 %3481
    %v3485 = vsel %vm356, %v2847, %v3464
    %v3486 = vsel %vm356, %v2852, %v3466
    %v3487 = vsel %vm442, %v3485, %v3472
    %v3488 = vsel %vm442, %v3486, %v3474
    %v3489 = vsel %vm1186, %v3487, %v3480
    %v3490 = vsel %vm1186, %v3488, %v3482
    %3493 = vrot.lane.b32.xlu0 %v2649, 96
    %v3494 = vpop.permute.xlu0 %3493
    %3495 = vrot.lane.b32.xlu0 %v2652, 96
    %v3496 = vpop.permute.xlu0 %3495
    %v3497 = vsel %vm356, %v2649, 0
    %v3499 = vsel %vm356, %v2652, 0
    %v3501 = vsel %vm356, %v3494, 0
    %v3503 = vsel %vm356, %v3496, 0
    %3505 = vmatprep.subr.mxu0 0.0
    %3506 = vmatpush1.xpose.msra.mxu0 %v3501
    %3507 = vmatprep.subr.mxu0 0.0
    %3508 = vmatpush1.xpose.msra.mxu0 %v3503
    %3509 = vmatprep.subr.mxu0 0.0
    %3510 = vmatpush1.xpose.msra.mxu0 0.0
    %3511 = vmatprep.subr.mxu0 0.0
    %3512 = vmatpush1.xpose.msra.mxu0 0.0
    %3513 = vmatprep.subr.mxu0 0.0
    %3514 = vmatpush1.xpose.msra.mxu0 0.0
    %3515 = vmatprep.subr.mxu0 0.0
    %3516 = vmatpush1.xpose.msra.mxu0 0.0
    %3517 = vmatprep.subr.mxu0 0.0
    %3518 = vmatpush1.xpose.msra.mxu0 0.0
    %3519 = vmatprep.subr.mxu0 0.0
    %3520 = vmatpush1.xpose.msra.mxu0 0.0
    %3521 = vmatprep.subr.mxu0 0.0
    %3522 = vmatpush1.xpose.msra.mxu0 0.0
    %3523 = vmatprep.subr.mxu0 0.0
    %3524 = vmatpush1.xpose.msra.mxu0 0.0
    %3525 = vmatprep.subr.mxu0 0.0
    %3526 = vmatpush1.xpose.msra.mxu0 0.0
    %3527 = vmatprep.subr.mxu0 0.0
    %3528 = vmatpush1.xpose.msra.mxu0 0.0
    %3529 = vmatprep.subr.mxu0 0.0
    %3530 = vmatpush1.xpose.msra.mxu0 0.0
    %3531 = vmatprep.subr.mxu0 0.0
    %3532 = vmatpush1.xpose.msra.mxu0 0.0
    %3533 = vmatprep.subr.mxu0 0.0
    %3534 = vmatpush1.xpose.msra.mxu0 0.0
    %3535 = vmatprep.subr.mxu0 0.0
    %3536 = vmatpush1.xpose.msra.mxu0 0.0
    %3537 = vmatprep.subr.mxu0 0.0
    %3538 = vmatpush1.xpose.msra.mxu0 0.0
    %3539 = vmatprep.subr.mxu0 0.0
    %3540 = vmatpush1.xpose.msra.mxu0 0.0
    %3541 = vmatprep.subr.mxu0 0.0
    %3542 = vmatpush1.xpose.msra.mxu0 0.0
    %3543 = vmatprep.subr.mxu0 0.0
    %3544 = vmatpush1.xpose.msra.mxu0 0.0
    %3545 = vmatprep.subr.mxu0 0.0
    %3546 = vmatpush1.xpose.msra.mxu0 0.0
    %3547 = vmatprep.subr.mxu0 0.0
    %3548 = vmatpush1.xpose.msra.mxu0 0.0
    %3549 = vmatprep.subr.mxu0 0.0
    %3550 = vmatpush1.xpose.msra.mxu0 0.0
    %3551 = vmatprep.subr.mxu0 0.0
    %3552 = vmatpush1.xpose.msra.mxu0 0.0
    %3553 = vmatprep.subr.mxu0 0.0
    %3554 = vmatpush1.xpose.msra.mxu0 0.0
    %3555 = vmatprep.subr.mxu0 0.0
    %3556 = vmatpush1.xpose.msra.mxu0 0.0
    %3557 = vmatprep.subr.mxu0 0.0
    %3558 = vmatpush1.xpose.msra.mxu0 0.0
    %3559 = vmatprep.subr.mxu0 0.0
    %3560 = vmatpush1.xpose.msra.mxu0 0.0
    %3561 = vmatprep.subr.mxu0 0.0
    %3562 = vmatpush1.xpose.msra.mxu0 0.0
    %3563 = vmatprep.subr.mxu0 0.0
    %3564 = vmatpush1.xpose.msra.mxu0 0.0
    %3565 = vmatprep.subr.mxu0 0.0
    %3566 = vmatpush1.xpose.msra.mxu0 0.0
    %3567 = vmatprep.subr.mxu0 0.0
    %3568 = vmatpush1.xpose.msra.mxu0 0.0
    %3569 = vmatprep.mubr.f32.mxu0 0.0
    %3570 = vmatmul.mubr.f32.gmra.mrb[0].mxu0 %v3497
    %v3571 = vpop.f32.mrb[0].mxu0
    %v3572 = vadd.f32 0.0, %v3571
    %v3573 = vpop.f32.mrb[0].mxu0
    %3574 = vmatprep.mubr.f32.mxu0 0.0
    %3575 = vmatmul.mubr.f32.gmra.mrb[0].mxu0 %v3499
    %v3576 = vpop.f32.mrb[0].mxu0
    %v3577 = vadd.f32 0.0, %v3576
    %v3578 = vpop.f32.mrb[0].mxu0
    %3579 = vdwg.mxu0
    %v3580 = vmul.f32 %v3572, 0.35355338
    %v3581 = vmul.f32 %v3577, 0.35355338
    %v3582 = vsel %vm442, %v3580, -inf
    %3583 = vmax.xlane.f32.xlu0 %v3582
    %v3584 = vpop.xlane.xlu0 %3583
    %v3585 = vsel %vm442, %v3581, -inf
    %3586 = vmax.xlane.f32.xlu0 %v3585
    %v3587 = vpop.xlane.xlu0 %3586
    %v3588 = vsub.f32 %v3580, %v3584
    %v3589 = vsub.f32 %v3581, %v3587
    %v3590 = vmul.f32 %v3588, 1.442695
    %v3591 = vpow.pop %v3590
    %v3592 = vmul.f32 %v3589, 1.442695
    %v3593 = vpow.pop %v3592
    %v3594 = vsel %vm442, %v3591, 0.0
    %3595 = vadd.xlane.f32.xlu0 %v3594
    %v3596 = vpop.xlane.xlu0 %3595
    %v3597 = vsel %vm442, %v3593, 0.0
    %3598 = vadd.xlane.f32.xlu0 %v3597
    %v3599 = vpop.xlane.xlu0 %3598
    %v3600 = vrcp.pop %v3596
    %v3601 = vrcp.pop %v3599
    %v3602 = vmul.f32 %v3591, %v3600
    %v3603 = vmul.f32 %v3593, %v3601
    %3604 = vrot.lane.b32.xlu0 %v2649, 64
    %v3605 = vpop.permute.xlu0 %3604
    %3606 = vrot.lane.b32.xlu0 %v2652, 64
    %v3607 = vpop.permute.xlu0 %3606
    %v3611 = vsel %vm442, %v3602, 0
    %v3614 = vsel %vm442, %v3603, 0
    %3616 = vmatprep.subr.mxu0 0.0
    %3617 = vmatpush1.msra.mxu0 %v3605
    %3618 = vmatprep.subr.mxu0 0.0
    %3619 = vmatpush1.msra.mxu0 %v3607
    %3620 = vmatprep.subr.mxu0 0.0
    %3621 = vmatpush1.msra.mxu0 0.0
    %3622 = vmatprep.subr.mxu0 0.0
    %3623 = vmatpush1.msra.mxu0 0.0
    %3624 = vmatprep.subr.mxu0 0.0
    %3625 = vmatpush1.msra.mxu0 0.0
    %3626 = vmatprep.subr.mxu0 0.0
    %3627 = vmatpush1.msra.mxu0 0.0
    %3628 = vmatprep.subr.mxu0 0.0
    %3629 = vmatpush1.msra.mxu0 0.0
    %3630 = vmatprep.subr.mxu0 0.0
    %3631 = vmatpush1.msra.mxu0 0.0
    %3632 = vmatprep.subr.mxu0 0.0
    %3633 = vmatpush1.msra.mxu0 0.0
    %3634 = vmatprep.subr.mxu0 0.0
    %3635 = vmatpush1.msra.mxu0 0.0
    %3636 = vmatprep.subr.mxu0 0.0
    %3637 = vmatpush1.msra.mxu0 0.0
    %3638 = vmatprep.subr.mxu0 0.0
    %3639 = vmatpush1.msra.mxu0 0.0
    %3640 = vmatprep.subr.mxu0 0.0
    %3641 = vmatpush1.msra.mxu0 0.0
    %3642 = vmatprep.subr.mxu0 0.0
    %3643 = vmatpush1.msra.mxu0 0.0
    %3644 = vmatprep.subr.mxu0 0.0
    %3645 = vmatpush1.msra.mxu0 0.0
    %3646 = vmatprep.subr.mxu0 0.0
    %3647 = vmatpush1.msra.mxu0 0.0
    %3648 = vmatprep.subr.mxu0 0.0
    %3649 = vmatpush1.msra.mxu0 0.0
    %3650 = vmatprep.subr.mxu0 0.0
    %3651 = vmatpush1.msra.mxu0 0.0
    %3652 = vmatprep.subr.mxu0 0.0
    %3653 = vmatpush1.msra.mxu0 0.0
    %3654 = vmatprep.subr.mxu0 0.0
    %3655 = vmatpush1.msra.mxu0 0.0
    %3656 = vmatprep.subr.mxu0 0.0
    %3657 = vmatpush1.msra.mxu0 0.0
    %3658 = vmatprep.subr.mxu0 0.0
    %3659 = vmatpush1.msra.mxu0 0.0
    %3660 = vmatprep.subr.mxu0 0.0
    %3661 = vmatpush1.msra.mxu0 0.0
    %3662 = vmatprep.subr.mxu0 0.0
    %3663 = vmatpush1.msra.mxu0 0.0
    %3664 = vmatprep.subr.mxu0 0.0
    %3665 = vmatpush1.msra.mxu0 0.0
    %3666 = vmatprep.subr.mxu0 0.0
    %3667 = vmatpush1.msra.mxu0 0.0
    %3668 = vmatprep.subr.mxu0 0.0
    %3669 = vmatpush1.msra.mxu0 0.0
    %3670 = vmatprep.subr.mxu0 0.0
    %3671 = vmatpush1.msra.mxu0 0.0
    %3672 = vmatprep.subr.mxu0 0.0
    %3673 = vmatpush1.msra.mxu0 0.0
    %3674 = vmatprep.subr.mxu0 0.0
    %3675 = vmatpush1.msra.mxu0 0.0
    %3676 = vmatprep.subr.mxu0 0.0
    %3677 = vmatpush1.msra.mxu0 0.0
    %3678 = vmatprep.subr.mxu0 0.0
    %3679 = vmatpush1.msra.mxu0 0.0
    %3680 = vmatprep.mubr.f32.mxu0 0.0
    %3681 = vmatmul.mubr.f32.gmra.mrb[0].mxu0 %v3611
    %v3682 = vpop.f32.mrb[0].mxu0
    %v3683 = vadd.f32 0.0, %v3682
    %v3684 = vpop.f32.mrb[0].mxu0
    %3685 = vmatprep.mubr.f32.mxu0 0.0
    %3686 = vmatmul.mubr.f32.gmra.mrb[0].mxu0 %v3614
    %v3687 = vpop.f32.mrb[0].mxu0
    %v3688 = vadd.f32 0.0, %v3687
    %v3689 = vpop.f32.mrb[0].mxu0
    %3690 = vdwg.mxu0
    %3691 = vrot.lane.b32.xlu0 %v2649, 120
    %v3692 = vpop.permute.xlu0 %3691
    %3693 = vrot.lane.b32.xlu0 %v2652, 120
    %v3694 = vpop.permute.xlu0 %3693
    %3695 = vrot.lane.b32.xlu0 %v2649, 88
    %v3696 = vpop.permute.xlu0 %3695
    %3697 = vrot.lane.b32.xlu0 %v2652, 88
    %v3698 = vpop.permute.xlu0 %3697
    %v3699 = vsel %vm356, %v3692, 0
    %v3701 = vsel %vm356, %v3694, 0
    %v3703 = vsel %vm356, %v3696, 0
    %v3705 = vsel %vm356, %v3698, 0
    %3707 = vmatprep.subr.mxu0 0.0
    %3708 = vmatpush1.xpose.msra.mxu0 %v3703
    %3709 = vmatprep.subr.mxu0 0.0
    %3710 = vmatpush1.xpose.msra.mxu0 %v3705
    %3711 = vmatprep.subr.mxu0 0.0
    %3712 = vmatpush1.xpose.msra.mxu0 0.0
    %3713 = vmatprep.subr.mxu0 0.0
    %3714 = vmatpush1.xpose.msra.mxu0 0.0
    %3715 = vmatprep.subr.mxu0 0.0
    %3716 = vmatpush1.xpose.msra.mxu0 0.0
    %3717 = vmatprep.subr.mxu0 0.0
    %3718 = vmatpush1.xpose.msra.mxu0 0.0
    %3719 = vmatprep.subr.mxu0 0.0
    %3720 = vmatpush1.xpose.msra.mxu0 0.0
    %3721 = vmatprep.subr.mxu0 0.0
    %3722 = vmatpush1.xpose.msra.mxu0 0.0
    %3723 = vmatprep.subr.mxu0 0.0
    %3724 = vmatpush1.xpose.msra.mxu0 0.0
    %3725 = vmatprep.subr.mxu0 0.0
    %3726 = vmatpush1.xpose.msra.mxu0 0.0
    %3727 = vmatprep.subr.mxu0 0.0
    %3728 = vmatpush1.xpose.msra.mxu0 0.0
    %3729 = vmatprep.subr.mxu0 0.0
    %3730 = vmatpush1.xpose.msra.mxu0 0.0
    %3731 = vmatprep.subr.mxu0 0.0
    %3732 = vmatpush1.xpose.msra.mxu0 0.0
    %3733 = vmatprep.subr.mxu0 0.0
    %3734 = vmatpush1.xpose.msra.mxu0 0.0
    %3735 = vmatprep.subr.mxu0 0.0
    %3736 = vmatpush1.xpose.msra.mxu0 0.0
    %3737 = vmatprep.subr.mxu0 0.0
    %3738 = vmatpush1.xpose.msra.mxu0 0.0
    %3739 = vmatprep.subr.mxu0 0.0
    %3740 = vmatpush1.xpose.msra.mxu0 0.0
    %3741 = vmatprep.subr.mxu0 0.0
    %3742 = vmatpush1.xpose.msra.mxu0 0.0
    %3743 = vmatprep.subr.mxu0 0.0
    %3744 = vmatpush1.xpose.msra.mxu0 0.0
    %3745 = vmatprep.subr.mxu0 0.0
    %3746 = vmatpush1.xpose.msra.mxu0 0.0
    %3747 = vmatprep.subr.mxu0 0.0
    %3748 = vmatpush1.xpose.msra.mxu0 0.0
    %3749 = vmatprep.subr.mxu0 0.0
    %3750 = vmatpush1.xpose.msra.mxu0 0.0
    %3751 = vmatprep.subr.mxu0 0.0
    %3752 = vmatpush1.xpose.msra.mxu0 0.0
    %3753 = vmatprep.subr.mxu0 0.0
    %3754 = vmatpush1.xpose.msra.mxu0 0.0
    %3755 = vmatprep.subr.mxu0 0.0
    %3756 = vmatpush1.xpose.msra.mxu0 0.0
    %3757 = vmatprep.subr.mxu0 0.0
    %3758 = vmatpush1.xpose.msra.mxu0 0.0
    %3759 = vmatprep.subr.mxu0 0.0
    %3760 = vmatpush1.xpose.msra.mxu0 0.0
    %3761 = vmatprep.subr.mxu0 0.0
    %3762 = vmatpush1.xpose.msra.mxu0 0.0
    %3763 = vmatprep.subr.mxu0 0.0
    %3764 = vmatpush1.xpose.msra.mxu0 0.0
    %3765 = vmatprep.subr.mxu0 0.0
    %3766 = vmatpush1.xpose.msra.mxu0 0.0
    %3767 = vmatprep.subr.mxu0 0.0
    %3768 = vmatpush1.xpose.msra.mxu0 0.0
    %3769 = vmatprep.subr.mxu0 0.0
    %3770 = vmatpush1.xpose.msra.mxu0 0.0
    %3771 = vmatprep.mubr.f32.mxu0 0.0
    %3772 = vmatmul.mubr.f32.gmra.mrb[0].mxu0 %v3699
    %v3773 = vpop.f32.mrb[0].mxu0
    %v3774 = vadd.f32 0.0, %v3773
    %v3775 = vpop.f32.mrb[0].mxu0
    %3776 = vmatprep.mubr.f32.mxu0 0.0
    %3777 = vmatmul.mubr.f32.gmra.mrb[0].mxu0 %v3701
    %v3778 = vpop.f32.mrb[0].mxu0
    %v3779 = vadd.f32 0.0, %v3778
    %v3780 = vpop.f32.mrb[0].mxu0
    %3781 = vdwg.mxu0
    %v3782 = vmul.f32 %v3774, 0.35355338
    %v3783 = vmul.f32 %v3779, 0.35355338
    %v3784 = vsel %vm442, %v3782, -inf
    %3785 = vmax.xlane.f32.xlu0 %v3784
    %v3786 = vpop.xlane.xlu0 %3785
    %v3787 = vsel %vm442, %v3783, -inf
    %3788 = vmax.xlane.f32.xlu0 %v3787
    %v3789 = vpop.xlane.xlu0 %3788
    %v3790 = vsub.f32 %v3782, %v3786
    %v3791 = vsub.f32 %v3783, %v3789
    %v3792 = vmul.f32 %v3790, 1.442695
    %v3793 = vpow.pop %v3792
    %v3794 = vmul.f32 %v3791, 1.442695
    %v3795 = vpow.pop %v3794
    %v3796 = vsel %vm442, %v3793, 0.0
    %3797 = vadd.xlane.f32.xlu0 %v3796
    %v3798 = vpop.xlane.xlu0 %3797
    %v3799 = vsel %vm442, %v3795, 0.0
    %3800 = vadd.xlane.f32.xlu0 %v3799
    %v3801 = vpop.xlane.xlu0 %3800
    %v3802 = vrcp.pop %v3798
    %v3803 = vrcp.pop %v3801
    %v3804 = vmul.f32 %v3793, %v3802
    %v3805 = vmul.f32 %v3795, %v3803
    %3806 = vrot.lane.b32.xlu0 %v2649, 56
    %v3807 = vpop.permute.xlu0 %3806
    %3808 = vrot.lane.b32.xlu0 %v2652, 56
    %v3809 = vpop.permute.xlu0 %3808
    %v3813 = vsel %vm442, %v3804, 0
    %v3816 = vsel %vm442, %v3805, 0
    %3818 = vmatprep.subr.mxu0 0.0
    %3819 = vmatpush1.msra.mxu0 %v3807
    %3820 = vmatprep.subr.mxu0 0.0
    %3821 = vmatpush1.msra.mxu0 %v3809
    %3822 = vmatprep.subr.mxu0 0.0
    %3823 = vmatpush1.msra.mxu0 0.0
    %3824 = vmatprep.subr.mxu0 0.0
    %3825 = vmatpush1.msra.mxu0 0.0
    %3826 = vmatprep.subr.mxu0 0.0
    %3827 = vmatpush1.msra.mxu0 0.0
    %3828 = vmatprep.subr.mxu0 0.0
    %3829 = vmatpush1.msra.mxu0 0.0
    %3830 = vmatprep.subr.mxu0 0.0
    %3831 = vmatpush1.msra.mxu0 0.0
    %3832 = vmatprep.subr.mxu0 0.0
    %3833 = vmatpush1.msra.mxu0 0.0
    %3834 = vmatprep.subr.mxu0 0.0
    %3835 = vmatpush1.msra.mxu0 0.0
    %3836 = vmatprep.subr.mxu0 0.0
    %3837 = vmatpush1.msra.mxu0 0.0
    %3838 = vmatprep.subr.mxu0 0.0
    %3839 = vmatpush1.msra.mxu0 0.0
    %3840 = vmatprep.subr.mxu0 0.0
    %3841 = vmatpush1.msra.mxu0 0.0
    %3842 = vmatprep.subr.mxu0 0.0
    %3843 = vmatpush1.msra.mxu0 0.0
    %3844 = vmatprep.subr.mxu0 0.0
    %3845 = vmatpush1.msra.mxu0 0.0
    %3846 = vmatprep.subr.mxu0 0.0
    %3847 = vmatpush1.msra.mxu0 0.0
    %3848 = vmatprep.subr.mxu0 0.0
    %3849 = vmatpush1.msra.mxu0 0.0
    %3850 = vmatprep.subr.mxu0 0.0
    %3851 = vmatpush1.msra.mxu0 0.0
    %3852 = vmatprep.subr.mxu0 0.0
    %3853 = vmatpush1.msra.mxu0 0.0
    %3854 = vmatprep.subr.mxu0 0.0
    %3855 = vmatpush1.msra.mxu0 0.0
    %3856 = vmatprep.subr.mxu0 0.0
    %3857 = vmatpush1.msra.mxu0 0.0
    %3858 = vmatprep.subr.mxu0 0.0
    %3859 = vmatpush1.msra.mxu0 0.0
    %3860 = vmatprep.subr.mxu0 0.0
    %3861 = vmatpush1.msra.mxu0 0.0
    %3862 = vmatprep.subr.mxu0 0.0
    %3863 = vmatpush1.msra.mxu0 0.0
    %3864 = vmatprep.subr.mxu0 0.0
    %3865 = vmatpush1.msra.mxu0 0.0
    %3866 = vmatprep.subr.mxu0 0.0
    %3867 = vmatpush1.msra.mxu0 0.0
    %3868 = vmatprep.subr.mxu0 0.0
    %3869 = vmatpush1.msra.mxu0 0.0
    %3870 = vmatprep.subr.mxu0 0.0
    %3871 = vmatpush1.msra.mxu0 0.0
    %3872 = vmatprep.subr.mxu0 0.0
    %3873 = vmatpush1.msra.mxu0 0.0
    %3874 = vmatprep.subr.mxu0 0.0
    %3875 = vmatpush1.msra.mxu0 0.0
    %3876 = vmatprep.subr.mxu0 0.0
    %3877 = vmatpush1.msra.mxu0 0.0
    %3878 = vmatprep.subr.mxu0 0.0
    %3879 = vmatpush1.msra.mxu0 0.0
    %3880 = vmatprep.subr.mxu0 0.0
    %3881 = vmatpush1.msra.mxu0 0.0
    %3882 = vmatprep.mubr.f32.mxu0 0.0
    %3883 = vmatmul.mubr.f32.gmra.mrb[0].mxu0 %v3813
    %v3884 = vpop.f32.mrb[0].mxu0
    %v3885 = vadd.f32 0.0, %v3884
    %v3886 = vpop.f32.mrb[0].mxu0
    %3887 = vmatprep.mubr.f32.mxu0 0.0
    %3888 = vmatmul.mubr.f32.gmra.mrb[0].mxu0 %v3816
    %v3889 = vpop.f32.mrb[0].mxu0
    %v3890 = vadd.f32 0.0, %v3889
    %v3891 = vpop.f32.mrb[0].mxu0
    %3892 = vdwg.mxu0
    %3893 = vrot.lane.b32.xlu0 %v2649, 112
    %v3894 = vpop.permute.xlu0 %3893
    %3895 = vrot.lane.b32.xlu0 %v2652, 112
    %v3896 = vpop.permute.xlu0 %3895
    %3897 = vrot.lane.b32.xlu0 %v2649, 80
    %v3898 = vpop.permute.xlu0 %3897
    %3899 = vrot.lane.b32.xlu0 %v2652, 80
    %v3900 = vpop.permute.xlu0 %3899
    %v3901 = vsel %vm356, %v3894, 0
    %v3903 = vsel %vm356, %v3896, 0
    %v3905 = vsel %vm356, %v3898, 0
    %v3907 = vsel %vm356, %v3900, 0
    %3909 = vmatprep.subr.mxu0 0.0
    %3910 = vmatpush1.xpose.msra.mxu0 %v3905
    %3911 = vmatprep.subr.mxu0 0.0
    %3912 = vmatpush1.xpose.msra.mxu0 %v3907
    %3913 = vmatprep.subr.mxu0 0.0
    %3914 = vmatpush1.xpose.msra.mxu0 0.0
    %3915 = vmatprep.subr.mxu0 0.0
    %3916 = vmatpush1.xpose.msra.mxu0 0.0
    %3917 = vmatprep.subr.mxu0 0.0
    %3918 = vmatpush1.xpose.msra.mxu0 0.0
    %3919 = vmatprep.subr.mxu0 0.0
    %3920 = vmatpush1.xpose.msra.mxu0 0.0
    %3921 = vmatprep.subr.mxu0 0.0
    %3922 = vmatpush1.xpose.msra.mxu0 0.0
    %3923 = vmatprep.subr.mxu0 0.0
    %3924 = vmatpush1.xpose.msra.mxu0 0.0
    %3925 = vmatprep.subr.mxu0 0.0
    %3926 = vmatpush1.xpose.msra.mxu0 0.0
    %3927 = vmatprep.subr.mxu0 0.0
    %3928 = vmatpush1.xpose.msra.mxu0 0.0
    %3929 = vmatprep.subr.mxu0 0.0
    %3930 = vmatpush1.xpose.msra.mxu0 0.0
    %3931 = vmatprep.subr.mxu0 0.0
    %3932 = vmatpush1.xpose.msra.mxu0 0.0
    %3933 = vmatprep.subr.mxu0 0.0
    %3934 = vmatpush1.xpose.msra.mxu0 0.0
    %3935 = vmatprep.subr.mxu0 0.0
    %3936 = vmatpush1.xpose.msra.mxu0 0.0
    %3937 = vmatprep.subr.mxu0 0.0
    %3938 = vmatpush1.xpose.msra.mxu0 0.0
    %3939 = vmatprep.subr.mxu0 0.0
    %3940 = vmatpush1.xpose.msra.mxu0 0.0
    %3941 = vmatprep.subr.mxu0 0.0
    %3942 = vmatpush1.xpose.msra.mxu0 0.0
    %3943 = vmatprep.subr.mxu0 0.0
    %3944 = vmatpush1.xpose.msra.mxu0 0.0
    %3945 = vmatprep.subr.mxu0 0.0
    %3946 = vmatpush1.xpose.msra.mxu0 0.0
    %3947 = vmatprep.subr.mxu0 0.0
    %3948 = vmatpush1.xpose.msra.mxu0 0.0
    %3949 = vmatprep.subr.mxu0 0.0
    %3950 = vmatpush1.xpose.msra.mxu0 0.0
    %3951 = vmatprep.subr.mxu0 0.0
    %3952 = vmatpush1.xpose.msra.mxu0 0.0
    %3953 = vmatprep.subr.mxu0 0.0
    %3954 = vmatpush1.xpose.msra.mxu0 0.0
    %3955 = vmatprep.subr.mxu0 0.0
    %3956 = vmatpush1.xpose.msra.mxu0 0.0
    %3957 = vmatprep.subr.mxu0 0.0
    %3958 = vmatpush1.xpose.msra.mxu0 0.0
    %3959 = vmatprep.subr.mxu0 0.0
    %3960 = vmatpush1.xpose.msra.mxu0 0.0
    %3961 = vmatprep.subr.mxu0 0.0
    %3962 = vmatpush1.xpose.msra.mxu0 0.0
    %3963 = vmatprep.subr.mxu0 0.0
    %3964 = vmatpush1.xpose.msra.mxu0 0.0
    %3965 = vmatprep.subr.mxu0 0.0
    %3966 = vmatpush1.xpose.msra.mxu0 0.0
    %3967 = vmatprep.subr.mxu0 0.0
    %3968 = vmatpush1.xpose.msra.mxu0 0.0
    %3969 = vmatprep.subr.mxu0 0.0
    %3970 = vmatpush1.xpose.msra.mxu0 0.0
    %3971 = vmatprep.subr.mxu0 0.0
    %3972 = vmatpush1.xpose.msra.mxu0 0.0
    %3973 = vmatprep.mubr.f32.mxu0 0.0
    %3974 = vmatmul.mubr.f32.gmra.mrb[0].mxu0 %v3901
    %v3975 = vpop.f32.mrb[0].mxu0
    %v3976 = vadd.f32 0.0, %v3975
    %v3977 = vpop.f32.mrb[0].mxu0
    %3978 = vmatprep.mubr.f32.mxu0 0.0
    %3979 = vmatmul.mubr.f32.gmra.mrb[0].mxu0 %v3903
    %v3980 = vpop.f32.mrb[0].mxu0
    %v3981 = vadd.f32 0.0, %v3980
    %v3982 = vpop.f32.mrb[0].mxu0
    %3983 = vdwg.mxu0
    %v3984 = vmul.f32 %v3976, 0.35355338
    %v3985 = vmul.f32 %v3981, 0.35355338
    %v3986 = vsel %vm442, %v3984, -inf
    %3987 = vmax.xlane.f32.xlu0 %v3986
    %v3988 = vpop.xlane.xlu0 %3987
    %v3989 = vsel %vm442, %v3985, -inf
    %3990 = vmax.xlane.f32.xlu0 %v3989
    %v3991 = vpop.xlane.xlu0 %3990
    %v3992 = vsub.f32 %v3984, %v3988
    %v3993 = vsub.f32 %v3985, %v3991
    %v3994 = vmul.f32 %v3992, 1.442695
    %v3995 = vpow.pop %v3994
    %v3996 = vmul.f32 %v3993, 1.442695
    %v3997 = vpow.pop %v3996
    %v3998 = vsel %vm442, %v3995, 0.0
    %3999 = vadd.xlane.f32.xlu0 %v3998
    %v4000 = vpop.xlane.xlu0 %3999
    %v4001 = vsel %vm442, %v3997, 0.0
    %4002 = vadd.xlane.f32.xlu0 %v4001
    %v4003 = vpop.xlane.xlu0 %4002
    %v4004 = vrcp.pop %v4000
    %v4005 = vrcp.pop %v4003
    %v4006 = vmul.f32 %v3995, %v4004
    %v4007 = vmul.f32 %v3997, %v4005
    %4008 = vrot.lane.b32.xlu0 %v2649, 48
    %v4009 = vpop.permute.xlu0 %4008
    %4010 = vrot.lane.b32.xlu0 %v2652, 48
    %v4011 = vpop.permute.xlu0 %4010
    %v4015 = vsel %vm442, %v4006, 0
    %v4018 = vsel %vm442, %v4007, 0
    %4020 = vmatprep.subr.mxu0 0.0
    %4021 = vmatpush1.msra.mxu0 %v4009
    %4022 = vmatprep.subr.mxu0 0.0
    %4023 = vmatpush1.msra.mxu0 %v4011
    %4024 = vmatprep.subr.mxu0 0.0
    %4025 = vmatpush1.msra.mxu0 0.0
    %4026 = vmatprep.subr.mxu0 0.0
    %4027 = vmatpush1.msra.mxu0 0.0
    %4028 = vmatprep.subr.mxu0 0.0
    %4029 = vmatpush1.msra.mxu0 0.0
    %4030 = vmatprep.subr.mxu0 0.0
    %4031 = vmatpush1.msra.mxu0 0.0
    %4032 = vmatprep.subr.mxu0 0.0
    %4033 = vmatpush1.msra.mxu0 0.0
    %4034 = vmatprep.subr.mxu0 0.0
    %4035 = vmatpush1.msra.mxu0 0.0
    %4036 = vmatprep.subr.mxu0 0.0
    %4037 = vmatpush1.msra.mxu0 0.0
    %4038 = vmatprep.subr.mxu0 0.0
    %4039 = vmatpush1.msra.mxu0 0.0
    %4040 = vmatprep.subr.mxu0 0.0
    %4041 = vmatpush1.msra.mxu0 0.0
    %4042 = vmatprep.subr.mxu0 0.0
    %4043 = vmatpush1.msra.mxu0 0.0
    %4044 = vmatprep.subr.mxu0 0.0
    %4045 = vmatpush1.msra.mxu0 0.0
    %4046 = vmatprep.subr.mxu0 0.0
    %4047 = vmatpush1.msra.mxu0 0.0
    %4048 = vmatprep.subr.mxu0 0.0
    %4049 = vmatpush1.msra.mxu0 0.0
    %4050 = vmatprep.subr.mxu0 0.0
    %4051 = vmatpush1.msra.mxu0 0.0
    %4052 = vmatprep.subr.mxu0 0.0
    %4053 = vmatpush1.msra.mxu0 0.0
    %4054 = vmatprep.subr.mxu0 0.0
    %4055 = vmatpush1.msra.mxu0 0.0
    %4056 = vmatprep.subr.mxu0 0.0
    %4057 = vmatpush1.msra.mxu0 0.0
    %4058 = vmatprep.subr.mxu0 0.0
    %4059 = vmatpush1.msra.mxu0 0.0
    %4060 = vmatprep.subr.mxu0 0.0
    %4061 = vmatpush1.msra.mxu0 0.0
    %4062 = vmatprep.subr.mxu0 0.0
    %4063 = vmatpush1.msra.mxu0 0.0
    %4064 = vmatprep.subr.mxu0 0.0
    %4065 = vmatpush1.msra.mxu0 0.0
    %4066 = vmatprep.subr.mxu0 0.0
    %4067 = vmatpush1.msra.mxu0 0.0
    %4068 = vmatprep.subr.mxu0 0.0
    %4069 = vmatpush1.msra.mxu0 0.0
    %4070 = vmatprep.subr.mxu0 0.0
    %4071 = vmatpush1.msra.mxu0 0.0
    %4072 = vmatprep.subr.mxu0 0.0
    %4073 = vmatpush1.msra.mxu0 0.0
    %4074 = vmatprep.subr.mxu0 0.0
    %4075 = vmatpush1.msra.mxu0 0.0
    %4076 = vmatprep.subr.mxu0 0.0
    %4077 = vmatpush1.msra.mxu0 0.0
    %4078 = vmatprep.subr.mxu0 0.0
    %4079 = vmatpush1.msra.mxu0 0.0
    %4080 = vmatprep.subr.mxu0 0.0
    %4081 = vmatpush1.msra.mxu0 0.0
    %4082 = vmatprep.subr.mxu0 0.0
    %4083 = vmatpush1.msra.mxu0 0.0
    %4084 = vmatprep.mubr.f32.mxu0 0.0
    %4085 = vmatmul.mubr.f32.gmra.mrb[0].mxu0 %v4015
    %v4086 = vpop.f32.mrb[0].mxu0
    %v4087 = vadd.f32 0.0, %v4086
    %v4088 = vpop.f32.mrb[0].mxu0
    %4089 = vmatprep.mubr.f32.mxu0 0.0
    %4090 = vmatmul.mubr.f32.gmra.mrb[0].mxu0 %v4018
    %v4091 = vpop.f32.mrb[0].mxu0
    %v4092 = vadd.f32 0.0, %v4091
    %v4093 = vpop.f32.mrb[0].mxu0
    %4094 = vdwg.mxu0
    %4095 = vrot.lane.b32.xlu0 %v2649, 104
    %v4096 = vpop.permute.xlu0 %4095
    %4097 = vrot.lane.b32.xlu0 %v2652, 104
    %v4098 = vpop.permute.xlu0 %4097
    %4099 = vrot.lane.b32.xlu0 %v2649, 72
    %v4100 = vpop.permute.xlu0 %4099
    %4101 = vrot.lane.b32.xlu0 %v2652, 72
    %v4102 = vpop.permute.xlu0 %4101
    %v4103 = vsel %vm356, %v4096, 0
    %v4105 = vsel %vm356, %v4098, 0
    %v4107 = vsel %vm356, %v4100, 0
    %v4109 = vsel %vm356, %v4102, 0
    %4111 = vmatprep.subr.mxu0 0.0
    %4112 = vmatpush1.xpose.msra.mxu0 %v4107
    %4113 = vmatprep.subr.mxu0 0.0
    %4114 = vmatpush1.xpose.msra.mxu0 %v4109
    %4115 = vmatprep.subr.mxu0 0.0
    %4116 = vmatpush1.xpose.msra.mxu0 0.0
    %4117 = vmatprep.subr.mxu0 0.0
    %4118 = vmatpush1.xpose.msra.mxu0 0.0
    %4119 = vmatprep.subr.mxu0 0.0
    %4120 = vmatpush1.xpose.msra.mxu0 0.0
    %4121 = vmatprep.subr.mxu0 0.0
    %4122 = vmatpush1.xpose.msra.mxu0 0.0
    %4123 = vmatprep.subr.mxu0 0.0
    %4124 = vmatpush1.xpose.msra.mxu0 0.0
    %4125 = vmatprep.subr.mxu0 0.0
    %4126 = vmatpush1.xpose.msra.mxu0 0.0
    %4127 = vmatprep.subr.mxu0 0.0
    %4128 = vmatpush1.xpose.msra.mxu0 0.0
    %4129 = vmatprep.subr.mxu0 0.0
    %4130 = vmatpush1.xpose.msra.mxu0 0.0
    %4131 = vmatprep.subr.mxu0 0.0
    %4132 = vmatpush1.xpose.msra.mxu0 0.0
    %4133 = vmatprep.subr.mxu0 0.0
    %4134 = vmatpush1.xpose.msra.mxu0 0.0
    %4135 = vmatprep.subr.mxu0 0.0
    %4136 = vmatpush1.xpose.msra.mxu0 0.0
    %4137 = vmatprep.subr.mxu0 0.0
    %4138 = vmatpush1.xpose.msra.mxu0 0.0
    %4139 = vmatprep.subr.mxu0 0.0
    %4140 = vmatpush1.xpose.msra.mxu0 0.0
    %4141 = vmatprep.subr.mxu0 0.0
    %4142 = vmatpush1.xpose.msra.mxu0 0.0
    %4143 = vmatprep.subr.mxu0 0.0
    %4144 = vmatpush1.xpose.msra.mxu0 0.0
    %4145 = vmatprep.subr.mxu0 0.0
    %4146 = vmatpush1.xpose.msra.mxu0 0.0
    %4147 = vmatprep.subr.mxu0 0.0
    %4148 = vmatpush1.xpose.msra.mxu0 0.0
    %4149 = vmatprep.subr.mxu0 0.0
    %4150 = vmatpush1.xpose.msra.mxu0 0.0
    %4151 = vmatprep.subr.mxu0 0.0
    %4152 = vmatpush1.xpose.msra.mxu0 0.0
    %4153 = vmatprep.subr.mxu0 0.0
    %4154 = vmatpush1.xpose.msra.mxu0 0.0
    %4155 = vmatprep.subr.mxu0 0.0
    %4156 = vmatpush1.xpose.msra.mxu0 0.0
    %4157 = vmatprep.subr.mxu0 0.0
    %4158 = vmatpush1.xpose.msra.mxu0 0.0
    %4159 = vmatprep.subr.mxu0 0.0
    %4160 = vmatpush1.xpose.msra.mxu0 0.0
    %4161 = vmatprep.subr.mxu0 0.0
    %4162 = vmatpush1.xpose.msra.mxu0 0.0
    %4163 = vmatprep.subr.mxu0 0.0
    %4164 = vmatpush1.xpose.msra.mxu0 0.0
    %4165 = vmatprep.subr.mxu0 0.0
    %4166 = vmatpush1.xpose.msra.mxu0 0.0
    %4167 = vmatprep.subr.mxu0 0.0
    %4168 = vmatpush1.xpose.msra.mxu0 0.0
    %4169 = vmatprep.subr.mxu0 0.0
    %4170 = vmatpush1.xpose.msra.mxu0 0.0
    %4171 = vmatprep.subr.mxu0 0.0
    %4172 = vmatpush1.xpose.msra.mxu0 0.0
    %4173 = vmatprep.subr.mxu0 0.0
    %4174 = vmatpush1.xpose.msra.mxu0 0.0
    %4175 = vmatprep.mubr.f32.mxu0 0.0
    %4176 = vmatmul.mubr.f32.gmra.mrb[0].mxu0 %v4103
    %v4177 = vpop.f32.mrb[0].mxu0
    %v4178 = vadd.f32 0.0, %v4177
    %v4179 = vpop.f32.mrb[0].mxu0
    %4180 = vmatprep.mubr.f32.mxu0 0.0
    %4181 = vmatmul.mubr.f32.gmra.mrb[0].mxu0 %v4105
    %v4182 = vpop.f32.mrb[0].mxu0
    %v4183 = vadd.f32 0.0, %v4182
    %v4184 = vpop.f32.mrb[0].mxu0
    %4185 = vdwg.mxu0
    %v4186 = vmul.f32 %v4178, 0.35355338
    %v4187 = vmul.f32 %v4183, 0.35355338
    %v4188 = vsel %vm442, %v4186, -inf
    %4189 = vmax.xlane.f32.xlu0 %v4188
    %v4190 = vpop.xlane.xlu0 %4189
    %v4191 = vsel %vm442, %v4187, -inf
    %4192 = vmax.xlane.f32.xlu0 %v4191
    %v4193 = vpop.xlane.xlu0 %4192
    %v4194 = vsub.f32 %v4186, %v4190
    %v4195 = vsub.f32 %v4187, %v4193
    %v4196 = vmul.f32 %v4194, 1.442695
    %v4197 = vpow.pop %v4196
    %v4198 = vmul.f32 %v4195, 1.442695
    %v4199 = vpow.pop %v4198
    %v4200 = vsel %vm442, %v4197, 0.0
    %4201 = vadd.xlane.f32.xlu0 %v4200
    %v4202 = vpop.xlane.xlu0 %4201
    %v4203 = vsel %vm442, %v4199, 0.0
    %4204 = vadd.xlane.f32.xlu0 %v4203
    %v4205 = vpop.xlane.xlu0 %4204
    %v4206 = vrcp.pop %v4202
    %v4207 = vrcp.pop %v4205
    %v4208 = vmul.f32 %v4197, %v4206
    %v4209 = vmul.f32 %v4199, %v4207
    %4210 = vrot.lane.b32.xlu0 %v2649, 40
    %v4211 = vpop.permute.xlu0 %4210
    %4212 = vrot.lane.b32.xlu0 %v2652, 40
    %v4213 = vpop.permute.xlu0 %4212
    %v4217 = vsel %vm442, %v4208, 0
    %v4220 = vsel %vm442, %v4209, 0
    %4222 = vmatprep.subr.mxu0 0.0
    %4223 = vmatpush1.msra.mxu0 %v4211
    %4224 = vmatprep.subr.mxu0 0.0
    %4225 = vmatpush1.msra.mxu0 %v4213
    %4226 = vmatprep.subr.mxu0 0.0
    %4227 = vmatpush1.msra.mxu0 0.0
    %4228 = vmatprep.subr.mxu0 0.0
    %4229 = vmatpush1.msra.mxu0 0.0
    %4230 = vmatprep.subr.mxu0 0.0
    %4231 = vmatpush1.msra.mxu0 0.0
    %4232 = vmatprep.subr.mxu0 0.0
    %4233 = vmatpush1.msra.mxu0 0.0
    %4234 = vmatprep.subr.mxu0 0.0
    %4235 = vmatpush1.msra.mxu0 0.0
    %4236 = vmatprep.subr.mxu0 0.0
    %4237 = vmatpush1.msra.mxu0 0.0
    %4238 = vmatprep.subr.mxu0 0.0
    %4239 = vmatpush1.msra.mxu0 0.0
    %4240 = vmatprep.subr.mxu0 0.0
    %4241 = vmatpush1.msra.mxu0 0.0
    %4242 = vmatprep.subr.mxu0 0.0
    %4243 = vmatpush1.msra.mxu0 0.0
    %4244 = vmatprep.subr.mxu0 0.0
    %4245 = vmatpush1.msra.mxu0 0.0
    %4246 = vmatprep.subr.mxu0 0.0
    %4247 = vmatpush1.msra.mxu0 0.0
    %4248 = vmatprep.subr.mxu0 0.0
    %4249 = vmatpush1.msra.mxu0 0.0
    %4250 = vmatprep.subr.mxu0 0.0
    %4251 = vmatpush1.msra.mxu0 0.0
    %4252 = vmatprep.subr.mxu0 0.0
    %4253 = vmatpush1.msra.mxu0 0.0
    %4254 = vmatprep.subr.mxu0 0.0
    %4255 = vmatpush1.msra.mxu0 0.0
    %4256 = vmatprep.subr.mxu0 0.0
    %4257 = vmatpush1.msra.mxu0 0.0
    %4258 = vmatprep.subr.mxu0 0.0
    %4259 = vmatpush1.msra.mxu0 0.0
    %4260 = vmatprep.subr.mxu0 0.0
    %4261 = vmatpush1.msra.mxu0 0.0
    %4262 = vmatprep.subr.mxu0 0.0
    %4263 = vmatpush1.msra.mxu0 0.0
    %4264 = vmatprep.subr.mxu0 0.0
    %4265 = vmatpush1.msra.mxu0 0.0
    %4266 = vmatprep.subr.mxu0 0.0
    %4267 = vmatpush1.msra.mxu0 0.0
    %4268 = vmatprep.subr.mxu0 0.0
    %4269 = vmatpush1.msra.mxu0 0.0
    %4270 = vmatprep.subr.mxu0 0.0
    %4271 = vmatpush1.msra.mxu0 0.0
    %4272 = vmatprep.subr.mxu0 0.0
    %4273 = vmatpush1.msra.mxu0 0.0
    %4274 = vmatprep.subr.mxu0 0.0
    %4275 = vmatpush1.msra.mxu0 0.0
    %4276 = vmatprep.subr.mxu0 0.0
    %4277 = vmatpush1.msra.mxu0 0.0
    %4278 = vmatprep.subr.mxu0 0.0
    %4279 = vmatpush1.msra.mxu0 0.0
    %4280 = vmatprep.subr.mxu0 0.0
    %4281 = vmatpush1.msra.mxu0 0.0
    %4282 = vmatprep.subr.mxu0 0.0
    %4283 = vmatpush1.msra.mxu0 0.0
    %4284 = vmatprep.subr.mxu0 0.0
    %4285 = vmatpush1.msra.mxu0 0.0
    %4286 = vmatprep.mubr.f32.mxu0 0.0
    %4287 = vmatmul.mubr.f32.gmra.mrb[0].mxu0 %v4217
    %v4288 = vpop.f32.mrb[0].mxu0
    %v4289 = vadd.f32 0.0, %v4288
    %v4290 = vpop.f32.mrb[0].mxu0
    %4291 = vmatprep.mubr.f32.mxu0 0.0
    %4292 = vmatmul.mubr.f32.gmra.mrb[0].mxu0 %v4220
    %v4293 = vpop.f32.mrb[0].mxu0
    %v4294 = vadd.f32 0.0, %v4293
    %v4295 = vpop.f32.mrb[0].mxu0
    %4296 = vdwg.mxu0
    %4299 = vrot.lane.b32.xlu0 %v3885, 8
    %v4300 = vpop.permute.xlu0 %4299
    %4301 = vrot.lane.b32.xlu0 %v3890, 8
    %v4302 = vpop.permute.xlu0 %4301
    %4307 = vrot.lane.b32.xlu0 %v4087, 16
    %v4308 = vpop.permute.xlu0 %4307
    %4309 = vrot.lane.b32.xlu0 %v4092, 16
    %v4310 = vpop.permute.xlu0 %4309
    %4315 = vrot.lane.b32.xlu0 %v4289, 24
    %v4316 = vpop.permute.xlu0 %4315
    %4317 = vrot.lane.b32.xlu0 %v4294, 24
    %v4318 = vpop.permute.xlu0 %4317
    %v4321 = vsel %vm356, %v3683, %v4300
    %v4322 = vsel %vm356, %v3688, %v4302
    %v4323 = vsel %vm442, %v4321, %v4308
    %v4324 = vsel %vm442, %v4322, %v4310
    %v4325 = vsel %vm1186, %v4323, %v4316
    %v4326 = vsel %vm1186, %v4324, %v4318
    %v4327 = vpack.c.bf16 %v3490, %v3489
    %v4328 = vpack.c.bf16 %v4326, %v4325
    %s4329 = scalar_lea.vmem %s7, 16
    %v4330 = vld [vmem:[%s4329] sm:$0xf]
    %v4331 = vld [vmem:[%s4329 + $0x4] sm:$0xf]
    %v4332 = vld [vmem:[%s4329 + $0x8] sm:$0xf]
    %v4333 = vld [vmem:[%s4329 + $0xc] sm:$0xf]
    %s4334 = scalar_lea.vmem %s8, 1
    %v4335 = vld [vmem:[%s4334] sm:$0x1]
    %v4337 = vlaneseq
    %v4338 = vshrl.u32 %v4337, 7
    %v4339 = vsub.s32 0, %v4338
    %v4340 = vrot.slane %v4335, %v4339
    %v4346 = vunpack.c.l.b16 %v4330
    %v4347 = vunpack.c.l.b16 %v4331
    %v4348 = vunpack.c.l.b16 %v4332
    %v4349 = vunpack.c.l.b16 %v4333
    %v4350 = vpack.c.b16 %v4347, %v4346
    %v4351 = vpack.c.b16 %v4349, %v4348
    %v4355 = vsel %vm97, %v4327, 0
    %v4358 = vsel %vm97, %v4328, 0
    %4360 = vmatprep.subr.bf16.mxu0 0
    %4361 = vmatpush1.bf16.msra.mxu0 %v4350
    %4362 = vmatprep.subr.bf16.mxu0 0
    %4363 = vmatpush1.bf16.msra.mxu0 %v4351
    %4364 = vmatprep.subr.bf16.mxu0 0
    %4365 = vmatpush1.bf16.msra.mxu0 0
    %4366 = vmatprep.subr.bf16.mxu0 0
    %4367 = vmatpush1.bf16.msra.mxu0 0
    %4368 = vmatprep.subr.bf16.mxu0 0
    %4369 = vmatpush1.bf16.msra.mxu0 0
    %4370 = vmatprep.subr.bf16.mxu0 0
    %4371 = vmatpush1.bf16.msra.mxu0 0
    %4372 = vmatprep.subr.bf16.mxu0 0
    %4373 = vmatpush1.bf16.msra.mxu0 0
    %4374 = vmatprep.subr.bf16.mxu0 0
    %4375 = vmatpush1.bf16.msra.mxu0 0
    %4376 = vmatprep.subr.bf16.mxu0 0
    %4377 = vmatpush1.bf16.msra.mxu0 0
    %4378 = vmatprep.subr.bf16.mxu0 0
    %4379 = vmatpush1.bf16.msra.mxu0 0
    %4380 = vmatprep.subr.bf16.mxu0 0
    %4381 = vmatpush1.bf16.msra.mxu0 0
    %4382 = vmatprep.subr.bf16.mxu0 0
    %4383 = vmatpush1.bf16.msra.mxu0 0
    %4384 = vmatprep.subr.bf16.mxu0 0
    %4385 = vmatpush1.bf16.msra.mxu0 0
    %4386 = vmatprep.subr.bf16.mxu0 0
    %4387 = vmatpush1.bf16.msra.mxu0 0
    %4388 = vmatprep.subr.bf16.mxu0 0
    %4389 = vmatpush1.bf16.msra.mxu0 0
    %4390 = vmatprep.subr.bf16.mxu0 0
    %4391 = vmatpush1.bf16.msra.mxu0 0
    %4392 = vmatprep.mubr.bf16.mxu0 0
    %4393 = vmatmul.mubr.bf16.gmra.mrb[0].mxu0 %v4355
    %v4394 = vpop.f32.mrb[0].mxu0
    %v4395 = vadd.f32 %v4340, %v4394
    %v4396 = vpop.f32.mrb[0].mxu0
    %v4397 = vpop.f32.mrb[0].mxu0
    %v4398 = vadd.f32 %v4340, %v4397
    %v4399 = vpop.f32.mrb[0].mxu0
    %4400 = vmatprep.mubr.bf16.mxu0 0
    %4401 = vmatmul.mubr.bf16.gmra.mrb[0].mxu0 %v4358
    %v4402 = vpop.f32.mrb[0].mxu0
    %v4403 = vadd.f32 %v4340, %v4402
    %v4404 = vpop.f32.mrb[0].mxu0
    %v4405 = vpop.f32.mrb[0].mxu0
    %v4406 = vadd.f32 %v4340, %v4405
    %v4407 = vpop.f32.mrb[0].mxu0
    %4408 = vdwg.mxu0
    %v4409 = vadd.f32 %v2493, %v4395
    %v4410 = vadd.f32 %v2494, %v4398
    %v4411 = vadd.f32 %v2495, %v4403
    %v4412 = vadd.f32 %v2496, %v4406
    %s4413 = scalar_lea.vmem %s9, 1
    %v4414 = vld [vmem:[%s4413] sm:$0x1]
    %s4415 = scalar_lea.vmem %s10, 1
    %v4416 = vld [vmem:[%s4415] sm:$0x1]
    %v4417 = vsel %vm97, %v4409, 0.0
    %4418 = vadd.xlane.f32.xlu0 %v4417
    %v4419 = vpop.xlane.xlu0 %4418
    %v4420 = vsel %vm97, %v4410, 0.0
    %4421 = vadd.xlane.f32.xlu0 %v4420
    %v4422 = vpop.xlane.xlu0 %4421
    %v4423 = vsel %vm97, %v4411, 0.0
    %4424 = vadd.xlane.f32.xlu0 %v4423
    %v4425 = vpop.xlane.xlu0 %4424
    %v4426 = vsel %vm97, %v4412, 0.0
    %4427 = vadd.xlane.f32.xlu0 %v4426
    %v4428 = vpop.xlane.xlu0 %4427
    %v4429 = vmul.f32 %v4419, %v209
    %v4430 = vmul.f32 %v4422, %v209
    %v4431 = vmul.f32 %v4425, %v209
    %v4432 = vmul.f32 %v4428, %v209
    %v4433 = vsub.f32 %v4409, %v4429
    %v4434 = vsub.f32 %v4410, %v4430
    %v4435 = vsub.f32 %v4411, %v4431
    %v4436 = vsub.f32 %v4412, %v4432
    %v4437 = vmul.f32 %v4433, %v4433
    %v4438 = vmul.f32 %v4434, %v4434
    %v4439 = vmul.f32 %v4435, %v4435
    %v4440 = vmul.f32 %v4436, %v4436
    %v4441 = vsel %vm97, %v4437, 0.0
    %4442 = vadd.xlane.f32.xlu0 %v4441
    %v4443 = vpop.xlane.xlu0 %4442
    %v4444 = vsel %vm97, %v4438, 0.0
    %4445 = vadd.xlane.f32.xlu0 %v4444
    %v4446 = vpop.xlane.xlu0 %4445
    %v4447 = vsel %vm97, %v4439, 0.0
    %4448 = vadd.xlane.f32.xlu0 %v4447
    %v4449 = vpop.xlane.xlu0 %4448
    %v4450 = vsel %vm97, %v4440, 0.0
    %4451 = vadd.xlane.f32.xlu0 %v4450
    %v4452 = vpop.xlane.xlu0 %4451
    %v4453 = vmul.f32 %v4443, %v209
    %v4454 = vmul.f32 %v4446, %v209
    %v4455 = vmul.f32 %v4449, %v209
    %v4456 = vmul.f32 %v4452, %v209
    %v4457 = vadd.f32 %v4453, 1e-05
    %v4458 = vadd.f32 %v4454, 1e-05
    %v4459 = vadd.f32 %v4455, 1e-05
    %v4460 = vadd.f32 %v4456, 1e-05
    %v4461 = vrsqrt.pop %v4457
    %v4462 = vrsqrt.pop %v4458
    %v4463 = vrsqrt.pop %v4459
    %v4464 = vrsqrt.pop %v4460
    %v4465 = vmul.f32 %v4433, %v4461
    %v4466 = vmul.f32 %v4434, %v4462
    %v4467 = vmul.f32 %v4435, %v4463
    %v4468 = vmul.f32 %v4436, %v4464
    %v4470 = vlaneseq
    %v4471 = vshrl.u32 %v4470, 7
    %v4472 = vsub.s32 0, %v4471
    %v4473 = vrot.slane %v4414, %v4472
    %v4475 = vmul.f32 %v4465, %v4473
    %v4476 = vmul.f32 %v4466, %v4473
    %v4477 = vmul.f32 %v4467, %v4473
    %v4478 = vmul.f32 %v4468, %v4473
    %v4480 = vlaneseq
    %v4481 = vshrl.u32 %v4480, 7
    %v4482 = vsub.s32 0, %v4481
    %v4483 = vrot.slane %v4416, %v4482
    %v4485 = vadd.f32 %v4475, %v4483
    %v4486 = vadd.f32 %v4476, %v4483
    %v4487 = vadd.f32 %v4477, %v4483
    %v4488 = vadd.f32 %v4478, %v4483
    %v4489 = vpack.c.bf16 %v4486, %v4485
    %v4490 = vpack.c.bf16 %v4488, %v4487
    %s4491 = scalar_lea.vmem %s11, 16
    %v4492 = vld [vmem:[%s4491] sm:$0xf]
    %v4493 = vld [vmem:[%s4491 + $0x4] sm:$0xf]
    %v4494 = vld [vmem:[%s4491 + $0x8] sm:$0xf]
    %v4495 = vld [vmem:[%s4491 + $0xc] sm:$0xf]
    %s4496 = scalar_lea.vmem %s12, 1
    %v4497 = vld [vmem:[%s4496] sm:$0x1]
    %v4499 = vlaneseq
    %v4500 = vshrl.u32 %v4499, 7
    %v4501 = vsub.s32 0, %v4500
    %v4502 = vrot.slane %v4497, %v4501
    %v4508 = vunpack.c.l.b16 %v4492
    %v4509 = vunpack.c.l.b16 %v4493
    %v4510 = vunpack.c.l.b16 %v4494
    %v4511 = vunpack.c.l.b16 %v4495
    %v4512 = vpack.c.b16 %v4509, %v4508
    %v4513 = vpack.c.b16 %v4511, %v4510
    %v4517 = vsel %vm97, %v4489, 0
    %v4520 = vsel %vm97, %v4490, 0
    %4522 = vmatprep.subr.bf16.mxu0 0
    %4523 = vmatpush1.bf16.msra.mxu0 %v4512
    %4524 = vmatprep.subr.bf16.mxu0 0
    %4525 = vmatpush1.bf16.msra.mxu0 %v4513
    %4526 = vmatprep.subr.bf16.mxu0 0
    %4527 = vmatpush1.bf16.msra.mxu0 0
    %4528 = vmatprep.subr.bf16.mxu0 0
    %4529 = vmatpush1.bf16.msra.mxu0 0
    %4530 = vmatprep.subr.bf16.mxu0 0
    %4531 = vmatpush1.bf16.msra.mxu0 0
    %4532 = vmatprep.subr.bf16.mxu0 0
    %4533 = vmatpush1.bf16.msra.mxu0 0
    %4534 = vmatprep.subr.bf16.mxu0 0
    %4535 = vmatpush1.bf16.msra.mxu0 0
    %4536 = vmatprep.subr.bf16.mxu0 0
    %4537 = vmatpush1.bf16.msra.mxu0 0
    %4538 = vmatprep.subr.bf16.mxu0 0
    %4539 = vmatpush1.bf16.msra.mxu0 0
    %4540 = vmatprep.subr.bf16.mxu0 0
    %4541 = vmatpush1.bf16.msra.mxu0 0
    %4542 = vmatprep.subr.bf16.mxu0 0
    %4543 = vmatpush1.bf16.msra.mxu0 0
    %4544 = vmatprep.subr.bf16.mxu0 0
    %4545 = vmatpush1.bf16.msra.mxu0 0
    %4546 = vmatprep.subr.bf16.mxu0 0
    %4547 = vmatpush1.bf16.msra.mxu0 0
    %4548 = vmatprep.subr.bf16.mxu0 0
    %4549 = vmatpush1.bf16.msra.mxu0 0
    %4550 = vmatprep.subr.bf16.mxu0 0
    %4551 = vmatpush1.bf16.msra.mxu0 0
    %4552 = vmatprep.subr.bf16.mxu0 0
    %4553 = vmatpush1.bf16.msra.mxu0 0
    %4554 = vmatprep.mubr.bf16.mxu0 0
    %4555 = vmatmul.mubr.bf16.gmra.mrb[0].mxu0 %v4517
    %v4556 = vpop.f32.mrb[0].mxu0
    %v4557 = vadd.f32 %v4502, %v4556
    %v4558 = vpop.f32.mrb[0].mxu0
    %v4559 = vpop.f32.mrb[0].mxu0
    %v4560 = vadd.f32 %v4502, %v4559
    %v4561 = vpop.f32.mrb[0].mxu0
    %4562 = vmatprep.mubr.bf16.mxu0 0
    %4563 = vmatmul.mubr.bf16.gmra.mrb[0].mxu0 %v4520
    %v4564 = vpop.f32.mrb[0].mxu0
    %v4565 = vadd.f32 %v4502, %v4564
    %v4566 = vpop.f32.mrb[0].mxu0
    %v4567 = vpop.f32.mrb[0].mxu0
    %v4568 = vadd.f32 %v4502, %v4567
    %v4569 = vpop.f32.mrb[0].mxu0
    %4570 = vdwg.mxu0
    %v4571 = vmul.f32 %v4557, 0.5
    %v4572 = vmul.f32 %v4560, 0.5
    %v4573 = vmul.f32 %v4565, 0.5
    %v4574 = vmul.f32 %v4568, 0.5
    %v4575 = vmul.f32 %v4557, 0.70710677
    %v4576 = vmul.f32 %v4560, 0.70710677
    %v4577 = vmul.f32 %v4565, 0.70710677
    %v4578 = vmul.f32 %v4568, 0.70710677
    %v4579 = vand.u32 2147483647, %v4575
    %v4580 = vand.u32 2147483647, %v4576
    %v4581 = vand.u32 2147483647, %v4577
    %v4582 = vand.u32 2147483647, %v4578
    %v4583 = vmul.f32 %v4579, 0.3275911
    %v4584 = vmul.f32 %v4580, 0.3275911
    %v4585 = vmul.f32 %v4581, 0.3275911
    %v4586 = vmul.f32 %v4582, 0.3275911
    %v4587 = vadd.f32 %v4583, 1.0
    %v4588 = vadd.f32 %v4584, 1.0
    %v4589 = vadd.f32 %v4585, 1.0
    %v4590 = vadd.f32 %v4586, 1.0
    %v4591 = vrcp.pop %v4587
    %v4592 = vmul.f32 1.0, %v4591
    %v4593 = vrcp.pop %v4588
    %v4594 = vmul.f32 1.0, %v4593
    %v4595 = vrcp.pop %v4589
    %v4596 = vmul.f32 1.0, %v4595
    %v4597 = vrcp.pop %v4590
    %v4598 = vmul.f32 1.0, %v4597
    %v4599 = vmul.f32 %v4592, 1.0614054
    %v4600 = vmul.f32 %v4594, 1.0614054
    %v4601 = vmul.f32 %v4596, 1.0614054
    %v4602 = vmul.f32 %v4598, 1.0614054
    %v4603 = vadd.f32 %v4599, -1.4531521
    %v4604 = vadd.f32 %v4600, -1.4531521
    %v4605 = vadd.f32 %v4601, -1.4531521
    %v4606 = vadd.f32 %v4602, -1.4531521
    %v4607 = vmul.f32 %v4603, %v4592
    %v4608 = vmul.f32 %v4604, %v4594
    %v4609 = vmul.f32 %v4605, %v4596
    %v4610 = vmul.f32 %v4606, %v4598
    %v4611 = vadd.f32 %v4607, 1.4214138
    %v4612 = vadd.f32 %v4608, 1.4214138
    %v4613 = vadd.f32 %v4609, 1.4214138
    %v4614 = vadd.f32 %v4610, 1.4214138
    %v4615 = vmul.f32 %v4611, %v4592
    %v4616 = vmul.f32 %v4612, %v4594
    %v4617 = vmul.f32 %v4613, %v4596
    %v4618 = vmul.f32 %v4614, %v4598
    %v4619 = vadd.f32 %v4615, -0.28449672
    %v4620 = vadd.f32 %v4616, -0.28449672
    %v4621 = vadd.f32 %v4617, -0.28449672
    %v4622 = vadd.f32 %v4618, -0.28449672
    %v4623 = vmul.f32 %v4619, %v4592
    %v4624 = vmul.f32 %v4620, %v4594
    %v4625 = vmul.f32 %v4621, %v4596
    %v4626 = vmul.f32 %v4622, %v4598
    %v4627 = vadd.f32 %v4623, 0.2548296
    %v4628 = vadd.f32 %v4624, 0.2548296
    %v4629 = vadd.f32 %v4625, 0.2548296
    %v4630 = vadd.f32 %v4626, 0.2548296
    %v4631 = vmul.f32 %v4627, %v4592
    %v4632 = vmul.f32 %v4628, %v4594
    %v4633 = vmul.f32 %v4629, %v4596
    %v4634 = vmul.f32 %v4630, %v4598
    %v4635 = vsub.f32 0.0, %v4579
    %v4636 = vsub.f32 0.0, %v4580
    %v4637 = vsub.f32 0.0, %v4581
    %v4638 = vsub.f32 0.0, %v4582
    %v4639 = vmul.f32 %v4635, %v4579
    %v4640 = vmul.f32 %v4636, %v4580
    %v4641 = vmul.f32 %v4637, %v4581
    %v4642 = vmul.f32 %v4638, %v4582
    %v4643 = vmul.f32 %v4639, 1.442695
    %v4644 = vpow.pop %v4643
    %v4645 = vmul.f32 %v4640, 1.442695
    %v4646 = vpow.pop %v4645
    %v4647 = vmul.f32 %v4641, 1.442695
    %v4648 = vpow.pop %v4647
    %v4649 = vmul.f32 %v4642, 1.442695
    %v4650 = vpow.pop %v4649
    %v4651 = vmul.f32 %v4631, %v4644
    %v4652 = vmul.f32 %v4632, %v4646
    %v4653 = vmul.f32 %v4633, %v4648
    %v4654 = vmul.f32 %v4634, %v4650
    %v4655 = vsub.f32 1.0, %v4651
    %v4656 = vsub.f32 1.0, %v4652
    %v4657 = vsub.f32 1.0, %v4653
    %v4658 = vsub.f32 1.0, %v4654
    %vm4659 = vcmp.ge.f32.partialorder %v4575, 0.0
    %vm4660 = vcmp.ge.f32.partialorder %v4576, 0.0
    %vm4661 = vcmp.ge.f32.partialorder %v4577, 0.0
    %vm4662 = vcmp.ge.f32.partialorder %v4578, 0.0
    %v4663 = vsub.f32 0.0, %v4655
    %v4664 = vsub.f32 0.0, %v4656
    %v4665 = vsub.f32 0.0, %v4657
    %v4666 = vsub.f32 0.0, %v4658
    %v4667 = vsel %vm4659, %v4655, %v4663
    %v4668 = vsel %vm4660, %v4656, %v4664
    %v4669 = vsel %vm4661, %v4657, %v4665
    %v4670 = vsel %vm4662, %v4658, %v4666
    %v4671 = vadd.f32 %v4667, 1.0
    %v4672 = vadd.f32 %v4668, 1.0
    %v4673 = vadd.f32 %v4669, 1.0
    %v4674 = vadd.f32 %v4670, 1.0
    %v4675 = vmul.f32 %v4571, %v4671
    %v4676 = vmul.f32 %v4572, %v4672
    %v4677 = vmul.f32 %v4573, %v4673
    %v4678 = vmul.f32 %v4574, %v4674
    %v4679 = vpack.c.bf16 %v4676, %v4675
    %v4680 = vpack.c.bf16 %v4678, %v4677
    %s4681 = scalar_lea.vmem %s13, 64
    %v4682 = vld [vmem:[%s4681] sm:$0xf]
    %v4683 = vld [vmem:[%s4681 + $0x4] sm:$0xf]
    %v4684 = vld [vmem:[%s4681 + $0x8] sm:$0xf]
    %v4685 = vld [vmem:[%s4681 + $0xc] sm:$0xf]
    %v4686 = vld [vmem:[%s4681 + $0x10] sm:$0xf]
    %v4687 = vld [vmem:[%s4681 + $0x14] sm:$0xf]
    %v4688 = vld [vmem:[%s4681 + $0x18] sm:$0xf]
    %v4689 = vld [vmem:[%s4681 + $0x1c] sm:$0xf]
    %v4690 = vld [vmem:[%s4681 + $0x20] sm:$0xf]
    %v4691 = vld [vmem:[%s4681 + $0x24] sm:$0xf]
    %v4692 = vld [vmem:[%s4681 + $0x28] sm:$0xf]
    %v4693 = vld [vmem:[%s4681 + $0x2c] sm:$0xf]
    %v4694 = vld [vmem:[%s4681 + $0x30] sm:$0xf]
    %v4695 = vld [vmem:[%s4681 + $0x34] sm:$0xf]
    %v4696 = vld [vmem:[%s4681 + $0x38] sm:$0xf]
    %v4697 = vld [vmem:[%s4681 + $0x3c] sm:$0xf]
    %s4698 = scalar_lea.vmem %s14, 1
    %v4699 = vld [vmem:[%s4698] sm:$0x1]
    %v4701 = vlaneseq
    %v4702 = vshrl.u32 %v4701, 7
    %v4703 = vsub.s32 0, %v4702
    %v4704 = vrot.slane %v4699, %v4703
    %v4722 = vunpack.c.l.b16 %v4682
    %v4723 = vunpack.c.l.b16 %v4683
    %v4724 = vunpack.c.l.b16 %v4684
    %v4725 = vunpack.c.l.b16 %v4685
    %v4726 = vunpack.c.l.b16 %v4686
    %v4727 = vunpack.c.l.b16 %v4687
    %v4728 = vunpack.c.l.b16 %v4688
    %v4729 = vunpack.c.l.b16 %v4689
    %v4730 = vunpack.c.l.b16 %v4690
    %v4731 = vunpack.c.l.b16 %v4691
    %v4732 = vunpack.c.l.b16 %v4692
    %v4733 = vunpack.c.l.b16 %v4693
    %v4734 = vunpack.c.l.b16 %v4694
    %v4735 = vunpack.c.l.b16 %v4695
    %v4736 = vunpack.c.l.b16 %v4696
    %v4737 = vunpack.c.l.b16 %v4697
    %v4738 = vpack.c.b16 %v4723, %v4722
    %v4739 = vpack.c.b16 %v4725, %v4724
    %v4740 = vpack.c.b16 %v4727, %v4726
    %v4741 = vpack.c.b16 %v4729, %v4728
    %v4742 = vpack.c.b16 %v4731, %v4730
    %v4743 = vpack.c.b16 %v4733, %v4732
    %v4744 = vpack.c.b16 %v4735, %v4734
    %v4745 = vpack.c.b16 %v4737, %v4736
    %4754 = vmatprep.subr.bf16.mxu0 0
    %4755 = vmatpush1.bf16.msra.mxu0 %v4738
    %4756 = vmatprep.subr.bf16.mxu0 0
    %4757 = vmatpush1.bf16.msra.mxu0 %v4739
    %4758 = vmatprep.subr.bf16.mxu0 0
    %4759 = vmatpush1.bf16.msra.mxu0 %v4740
    %4760 = vmatprep.subr.bf16.mxu0 0
    %4761 = vmatpush1.bf16.msra.mxu0 %v4741
    %4762 = vmatprep.subr.bf16.mxu0 0
    %4763 = vmatpush1.bf16.msra.mxu0 %v4742
    %4764 = vmatprep.subr.bf16.mxu0 0
    %4765 = vmatpush1.bf16.msra.mxu0 %v4743
    %4766 = vmatprep.subr.bf16.mxu0 0
    %4767 = vmatpush1.bf16.msra.mxu0 %v4744
    %4768 = vmatprep.subr.bf16.mxu0 0
    %4769 = vmatpush1.bf16.msra.mxu0 %v4745
    %4770 = vmatprep.subr.bf16.mxu0 0
    %4771 = vmatpush1.bf16.msra.mxu0 0
    %4772 = vmatprep.subr.bf16.mxu0 0
    %4773 = vmatpush1.bf16.msra.mxu0 0
    %4774 = vmatprep.subr.bf16.mxu0 0
    %4775 = vmatpush1.bf16.msra.mxu0 0
    %4776 = vmatprep.subr.bf16.mxu0 0
    %4777 = vmatpush1.bf16.msra.mxu0 0
    %4778 = vmatprep.subr.bf16.mxu0 0
    %4779 = vmatpush1.bf16.msra.mxu0 0
    %4780 = vmatprep.subr.bf16.mxu0 0
    %4781 = vmatpush1.bf16.msra.mxu0 0
    %4782 = vmatprep.subr.bf16.mxu0 0
    %4783 = vmatpush1.bf16.msra.mxu0 0
    %4784 = vmatprep.subr.bf16.mxu0 0
    %4785 = vmatpush1.bf16.msra.mxu0 0
    %4786 = vmatprep.mubr.bf16.mxu0 0
    %4787 = vmatmul.mubr.bf16.gmra.mrb[0].mxu0 %v4679
    %v4788 = vpop.f32.mrb[0].mxu0
    %v4789 = vadd.f32 %v4704, %v4788
    %v4790 = vpop.f32.mrb[0].mxu0
    %v4791 = vpop.f32.mrb[0].mxu0
    %v4792 = vadd.f32 %v4704, %v4791
    %v4793 = vpop.f32.mrb[0].mxu0
    %4794 = vmatprep.mubr.bf16.mxu0 0
    %4795 = vmatmul.mubr.bf16.gmra.mrb[0].mxu0 %v4680
    %v4796 = vpop.f32.mrb[0].mxu0
    %v4797 = vadd.f32 %v4704, %v4796
    %v4798 = vpop.f32.mrb[0].mxu0
    %v4799 = vpop.f32.mrb[0].mxu0
    %v4800 = vadd.f32 %v4704, %v4799
    %v4801 = vpop.f32.mrb[0].mxu0
    %4802 = vdwg.mxu0
    %v4803 = vadd.f32 %v4409, %v4789
    %v4804 = vadd.f32 %v4410, %v4792
    %v4805 = vadd.f32 %v4411, %v4797
    %v4806 = vadd.f32 %v4412, %v4800
    %v4807 = vld [vmem:[%s15] sm:$0x1]
    %v4808 = vld [vmem:[%s16] sm:$0x1]
    %v4809 = vsel %vm97, %v4803, 0.0
    %4810 = vadd.xlane.f32.xlu0 %v4809
    %v4811 = vpop.xlane.xlu0 %4810
    %v4812 = vsel %vm97, %v4804, 0.0
    %4813 = vadd.xlane.f32.xlu0 %v4812
    %v4814 = vpop.xlane.xlu0 %4813
    %v4815 = vsel %vm97, %v4805, 0.0
    %4816 = vadd.xlane.f32.xlu0 %v4815
    %v4817 = vpop.xlane.xlu0 %4816
    %v4818 = vsel %vm97, %v4806, 0.0
    %4819 = vadd.xlane.f32.xlu0 %v4818
    %v4820 = vpop.xlane.xlu0 %4819
    %v4821 = vmul.f32 %v4811, %v209
    %v4822 = vmul.f32 %v4814, %v209
    %v4823 = vmul.f32 %v4817, %v209
    %v4824 = vmul.f32 %v4820, %v209
    %v4825 = vsub.f32 %v4803, %v4821
    %v4826 = vsub.f32 %v4804, %v4822
    %v4827 = vsub.f32 %v4805, %v4823
    %v4828 = vsub.f32 %v4806, %v4824
    %v4829 = vmul.f32 %v4825, %v4825
    %v4830 = vmul.f32 %v4826, %v4826
    %v4831 = vmul.f32 %v4827, %v4827
    %v4832 = vmul.f32 %v4828, %v4828
    %v4833 = vsel %vm97, %v4829, 0.0
    %4834 = vadd.xlane.f32.xlu0 %v4833
    %v4835 = vpop.xlane.xlu0 %4834
    %v4836 = vsel %vm97, %v4830, 0.0
    %4837 = vadd.xlane.f32.xlu0 %v4836
    %v4838 = vpop.xlane.xlu0 %4837
    %v4839 = vsel %vm97, %v4831, 0.0
    %4840 = vadd.xlane.f32.xlu0 %v4839
    %v4841 = vpop.xlane.xlu0 %4840
    %v4842 = vsel %vm97, %v4832, 0.0
    %4843 = vadd.xlane.f32.xlu0 %v4842
    %v4844 = vpop.xlane.xlu0 %4843
    %v4845 = vmul.f32 %v4835, %v209
    %v4846 = vmul.f32 %v4838, %v209
    %v4847 = vmul.f32 %v4841, %v209
    %v4848 = vmul.f32 %v4844, %v209
    %v4849 = vadd.f32 %v4845, 1e-05
    %v4850 = vadd.f32 %v4846, 1e-05
    %v4851 = vadd.f32 %v4847, 1e-05
    %v4852 = vadd.f32 %v4848, 1e-05
    %v4853 = vrsqrt.pop %v4849
    %v4854 = vrsqrt.pop %v4850
    %v4855 = vrsqrt.pop %v4851
    %v4856 = vrsqrt.pop %v4852
    %v4857 = vmul.f32 %v4825, %v4853
    %v4858 = vmul.f32 %v4826, %v4854
    %v4859 = vmul.f32 %v4827, %v4855
    %v4860 = vmul.f32 %v4828, %v4856
    %v4862 = vlaneseq
    %v4863 = vshrl.u32 %v4862, 7
    %v4864 = vsub.s32 0, %v4863
    %v4865 = vrot.slane %v4807, %v4864
    %v4867 = vmul.f32 %v4857, %v4865
    %v4868 = vmul.f32 %v4858, %v4865
    %v4869 = vmul.f32 %v4859, %v4865
    %v4870 = vmul.f32 %v4860, %v4865
    %v4872 = vlaneseq
    %v4873 = vshrl.u32 %v4872, 7
    %v4874 = vsub.s32 0, %v4873
    %v4875 = vrot.slane %v4808, %v4874
    %v4877 = vadd.f32 %v4867, %v4875
    %v4878 = vadd.f32 %v4868, %v4875
    %v4879 = vadd.f32 %v4869, %v4875
    %v4880 = vadd.f32 %v4870, %v4875
    %v4881 = vpack.c.bf16 %v4878, %v4877
    %v4882 = vld [vmem:[%s17] sm:$0xf]
    %v4883 = vld [vmem:[%s17 + $0x4] sm:$0xf]
    %v4886 = vunpack.c.l.b16 %v4882
    %v4887 = vunpack.c.l.b16 %v4883
    %v4888 = vpack.c.b16 %v4887, %v4886
    %v4890 = vsel %vm97, %v4888, 0
    %v4893 = vsel %vm97, %v4881, 0
    %4895 = vmatprep.subr.bf16.mxu0 0
    %4896 = vmatpush1.bf16.xpose.msra.mxu0 %v4893
    %4897 = vmatprep.subr.bf16.mxu0 0
    %4898 = vmatpush1.bf16.xpose.msra.mxu0 0
    %4899 = vmatprep.subr.bf16.mxu0 0
    %4900 = vmatpush1.bf16.xpose.msra.mxu0 0
    %4901 = vmatprep.subr.bf16.mxu0 0
    %4902 = vmatpush1.bf16.xpose.msra.mxu0 0
    %4903 = vmatprep.subr.bf16.mxu0 0
    %4904 = vmatpush1.bf16.xpose.msra.mxu0 0
    %4905 = vmatprep.subr.bf16.mxu0 0
    %4906 = vmatpush1.bf16.xpose.msra.mxu0 0
    %4907 = vmatprep.subr.bf16.mxu0 0
    %4908 = vmatpush1.bf16.xpose.msra.mxu0 0
    %4909 = vmatprep.subr.bf16.mxu0 0
    %4910 = vmatpush1.bf16.xpose.msra.mxu0 0
    %4911 = vmatprep.subr.bf16.mxu0 0
    %4912 = vmatpush1.bf16.xpose.msra.mxu0 0
    %4913 = vmatprep.subr.bf16.mxu0 0
    %4914 = vmatpush1.bf16.xpose.msra.mxu0 0
    %4915 = vmatprep.subr.bf16.mxu0 0
    %4916 = vmatpush1.bf16.xpose.msra.mxu0 0
    %4917 = vmatprep.subr.bf16.mxu0 0
    %4918 = vmatpush1.bf16.xpose.msra.mxu0 0
    %4919 = vmatprep.subr.bf16.mxu0 0
    %4920 = vmatpush1.bf16.xpose.msra.mxu0 0
    %4921 = vmatprep.subr.bf16.mxu0 0
    %4922 = vmatpush1.bf16.xpose.msra.mxu0 0
    %4923 = vmatprep.subr.bf16.mxu0 0
    %4924 = vmatpush1.bf16.xpose.msra.mxu0 0
    %4925 = vmatprep.subr.bf16.mxu0 0
    %4926 = vmatpush1.bf16.xpose.msra.mxu0 0
    %4927 = vmatprep.mubr.bf16.mxu0 0
    %4928 = vmatmul.mubr.bf16.gmra.mrb[0].mxu0 %v4890
    %v4929 = vpop.f32.mrb[0].mxu0
    %v4930 = vadd.f32 0.0, %v4929
    %v4931 = vpop.f32.mrb[0].mxu0
    %v4932 = vpop.f32.mrb[0].mxu0
    %v4933 = vadd.f32 0.0, %v4932
    %v4934 = vpop.f32.mrb[0].mxu0
    %4935 = vdwg.mxu0
    %4936 = vst.msk [vmem:[#allocation2] sm:$0xff] %vm442, %v4930
    %4937 = vst.msk [vmem:[#allocation2 + $0x8] sm:$0xff] %vm442, %v4933
    %v4938 = vpack.c.bf16 %v4880, %v4879
    %v4939 = vld [vmem:[%s17] sm:$0xf]
    %v4940 = vld [vmem:[%s17 + $0x4] sm:$0xf]
    %v4943 = vunpack.c.l.b16 %v4939
    %v4944 = vunpack.c.l.b16 %v4940
    %v4945 = vpack.c.b16 %v4944, %v4943
    %v4947 = vsel %vm97, %v4945, 0
    %v4950 = vsel %vm97, %v4938, 0
    %4952 = vmatprep.subr.bf16.mxu0 0
    %4953 = vmatpush1.bf16.xpose.msra.mxu0 %v4950
    %4954 = vmatprep.subr.bf16.mxu0 0
    %4955 = vmatpush1.bf16.xpose.msra.mxu0 0
    %4956 = vmatprep.subr.bf16.mxu0 0
    %4957 = vmatpush1.bf16.xpose.msra.mxu0 0
    %4958 = vmatprep.subr.bf16.mxu0 0
    %4959 = vmatpush1.bf16.xpose.msra.mxu0 0
    %4960 = vmatprep.subr.bf16.mxu0 0
    %4961 = vmatpush1.bf16.xpose.msra.mxu0 0
    %4962 = vmatprep.subr.bf16.mxu0 0
    %4963 = vmatpush1.bf16.xpose.msra.mxu0 0
    %4964 = vmatprep.subr.bf16.mxu0 0
    %4965 = vmatpush1.bf16.xpose.msra.mxu0 0
    %4966 = vmatprep.subr.bf16.mxu0 0
    %4967 = vmatpush1.bf16.xpose.msra.mxu0 0
    %4968 = vmatprep.subr.bf16.mxu0 0
    %4969 = vmatpush1.bf16.xpose.msra.mxu0 0
    %4970 = vmatprep.subr.bf16.mxu0 0
    %4971 = vmatpush1.bf16.xpose.msra.mxu0 0
    %4972 = vmatprep.subr.bf16.mxu0 0
    %4973 = vmatpush1.bf16.xpose.msra.mxu0 0
    %4974 = vmatprep.subr.bf16.mxu0 0
    %4975 = vmatpush1.bf16.xpose.msra.mxu0 0
    %4976 = vmatprep.subr.bf16.mxu0 0
    %4977 = vmatpush1.bf16.xpose.msra.mxu0 0
    %4978 = vmatprep.subr.bf16.mxu0 0
    %4979 = vmatpush1.bf16.xpose.msra.mxu0 0
    %4980 = vmatprep.subr.bf16.mxu0 0
    %4981 = vmatpush1.bf16.xpose.msra.mxu0 0
    %4982 = vmatprep.subr.bf16.mxu0 0
    %4983 = vmatpush1.bf16.xpose.msra.mxu0 0
    %4984 = vmatprep.mubr.bf16.mxu0 0
    %4985 = vmatmul.mubr.bf16.gmra.mrb[0].mxu0 %v4947
    %v4986 = vpop.f32.mrb[0].mxu0
    %v4987 = vadd.f32 0.0, %v4986
    %v4988 = vpop.f32.mrb[0].mxu0
    %v4989 = vpop.f32.mrb[0].mxu0
    %v4990 = vadd.f32 0.0, %v4989
    %v4991 = vpop.f32.mrb[0].mxu0
    %4992 = vdwg.mxu0
    %s4993 = scalar_lea.vmem [#allocation2], 16
    %4994 = vst.msk [vmem:[%s4993] sm:$0xff] %vm442, %v4987
    %4995 = vst.msk [vmem:[%s4993 + $0x8] sm:$0xff] %vm442, %v4990
    // Predicated region
    $region74: #{absorbing_diffusion_forward.1} parent=1 // pred_check
      _
    $region75: #{absorbing_diffusion_forward.1} parent=1 // pred_check_branch
      %4997 = sbr.rel (0) target = $region77
    $region76: #{absorbing_diffusion_forward.1} parent=1 // pred_region
      %s4999 = ssub.s32 512, 512
      %5000 = vsyncadd [#allocation3], %s4999
      %s5001 = sshll.u32 [#allocation2], 4
      %s5002 = int_to_ptr.vmem [resolvable:$true] %s5001
      %5007 = dma.vmem_to_hbm [thread:$0]  %s5002, 512, %s18, [#allocation3], 128, 128, 8
    $region77: #{absorbing_diffusion_forward.1} parent=1 // pred_fallthru
      _
    // Predicated region
    $region78: #{absorbing_diffusion_forward.1} parent=1 // pred_check
      _
    $region79: #{absorbing_diffusion_forward.1} parent=1 // pred_check_branch
      %5009 = sbr.rel (0) target = $region81
    $region80: #{absorbing_diffusion_forward.1} parent=1 // pred_region
      %5010 = dma.done [#allocation3], 512
    $region81: #{absorbing_diffusion_forward.1} parent=1 // pred_fallthru
      _
    %5011 = vsyncpa [#allocation3], 1

</llo_original>
